<compile_context>
chip_gen: v6e
topology: v6e:2x2x1
jax: 0.10.0
libtpu: 0.0.40
codegen_flags: <defaults>
</compile_context>

<pallas_src>
import functools

import numpy as np
import jax
import jax.numpy as jnp
from jax.experimental import pallas as pl
from jax.experimental.pallas import tpu as pltpu

EPS = 1e-5
_SQRT2 = 1.4142135623730951


# --------------------------------------------------------------------------- in-kernel helpers

def _gelu(x):
    # exact (erf-based) GELU, matching torch.nn.GELU() default
    return 0.5 * x * (1.0 + jax.lax.erf(x / _SQRT2))


def _groupnorm(x, gamma, beta):
    # GroupNorm(1, C) on a per-sample (C, HW) slab: stats over all elements,
    # per-channel affine.  Stats / accumulation in f32.
    mean = jnp.mean(x)
    var = jnp.mean(jnp.square(x - mean))
    return (x - mean) * jax.lax.rsqrt(var + EPS) * gamma + beta


def _conv3x3(x, w9, b, masks, W):
    """3x3 conv, zero padding 1, on a (Cin, H*W) slab -> (Cout, H*W) f32.

    The 9 taps are lane shifts of the flattened spatial axis, multiplied by a
    precomputed (9, HW) 0/1 boundary mask, stacked along the contraction axis
    and contracted with the (Cout, 9*Cin) bf16 weight in a single MXU matmul
    (f32 accumulation).
    """
    taps = []
    k = 0
    for dy in (-1, 0, 1):
        for dx in (-1, 0, 1):
            if dy == 0 and dx == 0:
                taps.append(x)                                     # center: no mask
            else:
                shift = dy * W + dx
                taps.append(jnp.roll(x, -shift, axis=1) * masks[k])
            k += 1
    x9 = jnp.concatenate(taps, axis=0).astype(jnp.bfloat16)        # (9*Cin, HW)
    return jnp.dot(w9, x9, preferred_element_type=jnp.float32) + b


def _basic_block(x, refs, W, upsample):
    (gain_ref, bias_ref, nw, nb,
     c1w, c1b, n1w, n1b, c2w, c2b, n2w, n2b, mask_ref, *up_refs) = refs
    masks = mask_ref[...]                                          # (9, HW) f32

    # style modulation: (1 + gain) * GroupNorm(x) + bias
    xm = (1.0 + gain_ref[0]) * _groupnorm(x, nw[...], nb[...]) + bias_ref[0]

    # conv1 -> GN1 -> GELU
    h = _conv3x3(xm, c1w[...], c1b[...], masks, W)
    h = _gelu(_groupnorm(h, n1w[...], n1b[...]))

    # conv2 -> GN2
    h = _conv3x3(h, c2w[...], c2b[...], masks, W)
    h = _groupnorm(h, n2w[...], n2b[...])

    # residual (xm never left VMEM)
    y = h + xm

    if upsample:
        upw, upb, upm = up_refs
        # 1x1 conv p -> p//2 (bf16 MXU, f32 acc)
        y = jnp.dot(upw[...], y.astype(jnp.bfloat16),
                    preferred_element_type=jnp.float32) + upb[...]
        # separable bilinear 2x upsample as ONE matmul: (p/2, HW) @ (HW, 4HW)
        y = jnp.dot(y, upm[...], preferred_element_type=jnp.float32)
    return _gelu(y)


def _decoder_kernel(*refs, block_meta):
    # Whole decoder for one sample; everything VMEM/vreg resident.
    o_ref = refs[-1]
    x = refs[0][0]                                                 # (hid, H0*W0) f32
    pos = 1
    for meta in block_meta:
        n = meta["n"]
        x = _basic_block(x, refs[pos:pos + n], meta["W"], meta["up"])
        pos += n

    # end_cnn: 1x1 conv -> GroupNorm(1) -> GELU -> 1x1 conv
    w1, b1, gnw, gnb, w2, b2 = refs[pos:pos + 6]
    y = jnp.dot(w1[...], x.astype(jnp.bfloat16),
                preferred_element_type=jnp.float32) + b1[...]
    y = _gelu(_groupnorm(y, gnw[...], gnb[...]))
    y = jnp.dot(w2[...], y.astype(jnp.bfloat16),
                preferred_element_type=jnp.float32) + b2[...]
    o_ref[...] = y[None]


# --------------------------------------------------------------------------- host-side constants

def build_grid_np(h, w):
    ranges = [np.linspace(0.0, 1.0, num=r) for r in (h, w)]
    g = np.meshgrid(*ranges, sparse=False, indexing="ij")
    g = np.stack(g, axis=-1).reshape(h, w, 2)
    g = np.concatenate([g, 1.0 - g], axis=-1)                      # (h, w, 4)
    return np.transpose(g, (2, 0, 1)).astype(np.float32)           # (4, h, w)  CHW


def bilinear_matrix(n_in):
    """2x bilinear upsample matrix (align_corners=False), shape (2n, n)."""
    n_out = 2 * n_in
    U = np.zeros((n_out, n_in), np.float32)
    for o in range(n_out):
        src = max((o + 0.5) / 2.0 - 0.5, 0.0)
        i0 = min(int(np.floor(src)), n_in - 1)
        i1 = min(i0 + 1, n_in - 1)
        frac = src - i0
        U[o, i0] += 1.0 - frac
        U[o, i1] += frac
    return U


def tap_masks_np(H, W):
    """(9, H*W) 0/1 validity mask for the 9 shifted 3x3-conv taps."""
    hh, ww = np.meshgrid(np.arange(H), np.arange(W), indexing="ij")
    hh = hh.reshape(-1)
    ww = ww.reshape(-1)
    rows = []
    for dy in (-1, 0, 1):
        for dx in (-1, 0, 1):
            valid = ((hh + dy >= 0) & (hh + dy < H) &
                     (ww + dx >= 0) & (ww + dx < W))
            rows.append(valid.astype(np.float32))
    return np.stack(rows, axis=0)


# --------------------------------------------------------------------------- params

def init_decoder_params(key, slot_dim, hid_dim, out_dim, resolution, block_num,
                        target_resolution):
    assert 2 ** block_num * resolution >= target_resolution
    keys = iter(jax.random.split(key, 64))

    def w(shape, scale=0.1, dtype=jnp.float32):
        return (jax.random.normal(next(keys), shape, jnp.float32) * scale).astype(dtype)

    params = {
        "grid": jnp.asarray(build_grid_np(resolution, resolution)),   # (4, H0, W0)
        "emb_w": w((hid_dim, 4)),
        "emb_b": jnp.zeros((hid_dim, 1), jnp.float32),
        "blocks": [],
    }
    res, hd = resolution, hid_dim
    for _ in range(block_num):
        upsample = res < target_resolution
        p = hd
        blk = dict(
            style_w1=w((slot_dim, 2 * p)), style_b1=jnp.zeros((2 * p,), jnp.float32),
            style_w2=w((2 * p, 2 * p)),    style_b2=jnp.zeros((2 * p,), jnp.float32),
            norm_w=jnp.ones((p, 1), jnp.float32),  norm_b=jnp.zeros((p, 1), jnp.float32),
            norm1_w=jnp.ones((p, 1), jnp.float32), norm1_b=jnp.zeros((p, 1), jnp.float32),
            norm2_w=jnp.ones((p, 1), jnp.float32), norm2_b=jnp.zeros((p, 1), jnp.float32),
            # conv weights stored pre-flattened as (Cout, 9*Cin), tap-major, bf16
            conv1_w=w((p, 9 * p), dtype=jnp.bfloat16), conv1_b=jnp.zeros((p, 1), jnp.float32),
            conv2_w=w((p, 9 * p), dtype=jnp.bfloat16), conv2_b=jnp.zeros((p, 1), jnp.float32),
            # precomputed 3x3-tap boundary masks at this block's input resolution
            tapmask=jnp.asarray(tap_masks_np(res, res)),
        )
        if upsample:
            blk["up_w"] = w((p // 2, p), dtype=jnp.bfloat16)
            blk["up_b"] = jnp.zeros((p // 2, 1), jnp.float32)
            U = bilinear_matrix(res)                                 # (2r, r)
            blk["upmat"] = jnp.asarray(np.kron(U, U).T)              # (HW, 4HW) f32
            hd //= 2
            res *= 2
        params["blocks"].append(blk)

    mid = max(hd, out_dim + 1)
    assert max(hd, out_dim) == mid, "end_cnn GroupNorm channel mismatch (same as PyTorch)"
    params["end_w1"] = w((mid, hd), dtype=jnp.bfloat16)
    params["end_b1"] = jnp.zeros((mid, 1), jnp.float32)
    params["end_gnw"] = jnp.ones((mid, 1), jnp.float32)
    params["end_gnb"] = jnp.zeros((mid, 1), jnp.float32)
    params["end_w2"] = w((out_dim + 1, mid), dtype=jnp.bfloat16)
    params["end_b2"] = jnp.zeros((out_dim + 1, 1), jnp.float32)
    return params


# --------------------------------------------------------------------------- forward

def _const_spec(a):
    nd = a.ndim
    return pl.BlockSpec(a.shape, lambda b, _n=nd: (0,) * _n)


def decoder_forward(params, slots):
    B = slots.shape[0]
    grid = params["grid"]                                            # (4, H0, W0)
    _, H, W = grid.shape

    # grid embedding (1x1 conv) in plain XLA; broadcast across batch via index_map.
    x0 = (jnp.dot(params["emb_w"], grid.reshape(4, H * W)) + params["emb_b"])[None]

    args = [x0]
    in_specs = [pl.BlockSpec(x0.shape, lambda b: (0, 0, 0))]
    block_meta = []
    Hc, Wc = H, W
    for blk in params["blocks"]:
        p = blk["conv1_b"].shape[0]
        # tiny style MLP in plain XLA
        s = jax.nn.gelu(slots @ blk["style_w1"] + blk["style_b1"], approximate=False)
        s = s @ blk["style_w2"] + blk["style_b2"]                    # (B, 2p)
        gain = s[:, :p, None]                                        # (B, p, 1)
        bias = s[:, p:, None]
        upsample = "up_w" in blk

        blk_args = [gain, bias,
                    blk["norm_w"], blk["norm_b"],
                    blk["conv1_w"], blk["conv1_b"], blk["norm1_w"], blk["norm1_b"],
                    blk["conv2_w"], blk["conv2_b"], blk["norm2_w"], blk["norm2_b"],
                    blk["tapmask"]]
        blk_specs = [pl.BlockSpec((1, p, 1), lambda b: (b, 0, 0)),
                     pl.BlockSpec((1, p, 1), lambda b: (b, 0, 0))] + \
                    [_const_spec(a) for a in blk_args[2:]]
        if upsample:
            extra = [blk["up_w"], blk["up_b"], blk["upmat"]]
            blk_args += extra
            blk_specs += [_const_spec(a) for a in extra]

        block_meta.append(dict(W=Wc, up=upsample, n=len(blk_args)))
        args += blk_args
        in_specs += blk_specs
        if upsample:
            Hc, Wc = 2 * Hc, 2 * Wc

    end_keys = ("end_w1", "end_b1", "end_gnw", "end_gnb", "end_w2", "end_b2")
    args += [params[k] for k in end_keys]
    in_specs += [_const_spec(params[k]) for k in end_keys]

    cout = params["end_b2"].shape[0]
    out = pl.pallas_call(
        functools.partial(_decoder_kernel, block_meta=tuple(block_meta)),
        grid=(B,),
        in_specs=in_specs,
        out_specs=pl.BlockSpec((1, cout, Hc * Wc), lambda b: (b, 0, 0)),
        out_shape=jax.ShapeDtypeStruct((B, cout, Hc * Wc), jnp.float32),
        compiler_params=pltpu.CompilerParams(dimension_semantics=("parallel",)),
    )(*args)
    return out.reshape(B, cout, Hc, Wc)                              # NCHW


# --------------------------------------------------------------------------- main

if __name__ == "__main__":
    SLOT_DIM, HID_DIM, OUT_DIM = 32, 16, 3
    RESOLUTION, BLOCK_NUM, TARGET_RES = 8, 2, 32
    B = 2

    key = jax.random.PRNGKey(0)
    pkey, skey = jax.random.split(key)
    params = init_decoder_params(pkey, SLOT_DIM, HID_DIM, OUT_DIM,
                                 RESOLUTION, BLOCK_NUM, TARGET_RES)
    slots = jax.random.normal(skey, (B, SLOT_DIM), jnp.float32)

    fwd = jax.jit(decoder_forward)
    out = jax.block_until_ready(fwd(params, slots))
    assert out.shape == (B, OUT_DIM + 1, TARGET_RES, TARGET_RES), out.shape
    assert bool(jnp.all(jnp.isfinite(out)))
    print("KERNEL_OK")
</pallas_src>

<mosaic_0001>
module attributes {stable_mosaic.version = 11 : i64} {
  func.func @_decoder_kernel(%arg0: i32, %arg1: memref<1x16x64xf32, #tpu.memory_space<vmem>>, %arg2: memref<1x16x1xf32, #tpu.memory_space<vmem>>, %arg3: memref<1x16x1xf32, #tpu.memory_space<vmem>>, %arg4: memref<16x1xf32, #tpu.memory_space<vmem>>, %arg5: memref<16x1xf32, #tpu.memory_space<vmem>>, %arg6: memref<16x144xbf16, #tpu.memory_space<vmem>>, %arg7: memref<16x1xf32, #tpu.memory_space<vmem>>, %arg8: memref<16x1xf32, #tpu.memory_space<vmem>>, %arg9: memref<16x1xf32, #tpu.memory_space<vmem>>, %arg10: memref<16x144xbf16, #tpu.memory_space<vmem>>, %arg11: memref<16x1xf32, #tpu.memory_space<vmem>>, %arg12: memref<16x1xf32, #tpu.memory_space<vmem>>, %arg13: memref<16x1xf32, #tpu.memory_space<vmem>>, %arg14: memref<9x64xf32, #tpu.memory_space<vmem>>, %arg15: memref<8x16xbf16, #tpu.memory_space<vmem>>, %arg16: memref<8x1xf32, #tpu.memory_space<vmem>>, %arg17: memref<64x256xf32, #tpu.memory_space<vmem>>, %arg18: memref<1x8x1xf32, #tpu.memory_space<vmem>>, %arg19: memref<1x8x1xf32, #tpu.memory_space<vmem>>, %arg20: memref<8x1xf32, #tpu.memory_space<vmem>>, %arg21: memref<8x1xf32, #tpu.memory_space<vmem>>, %arg22: memref<8x72xbf16, #tpu.memory_space<vmem>>, %arg23: memref<8x1xf32, #tpu.memory_space<vmem>>, %arg24: memref<8x1xf32, #tpu.memory_space<vmem>>, %arg25: memref<8x1xf32, #tpu.memory_space<vmem>>, %arg26: memref<8x72xbf16, #tpu.memory_space<vmem>>, %arg27: memref<8x1xf32, #tpu.memory_space<vmem>>, %arg28: memref<8x1xf32, #tpu.memory_space<vmem>>, %arg29: memref<8x1xf32, #tpu.memory_space<vmem>>, %arg30: memref<9x256xf32, #tpu.memory_space<vmem>>, %arg31: memref<4x8xbf16, #tpu.memory_space<vmem>>, %arg32: memref<4x1xf32, #tpu.memory_space<vmem>>, %arg33: memref<256x1024xf32, #tpu.memory_space<vmem>>, %arg34: memref<4x4xbf16, #tpu.memory_space<vmem>>, %arg35: memref<4x1xf32, #tpu.memory_space<vmem>>, %arg36: memref<4x1xf32, #tpu.memory_space<vmem>>, %arg37: memref<4x1xf32, #tpu.memory_space<vmem>>, %arg38: memref<4x4xbf16, #tpu.memory_space<vmem>>, %arg39: memref<4x1xf32, #tpu.memory_space<vmem>>, %arg40: memref<1x4x1024xf32, #tpu.memory_space<vmem>>) attributes {dimension_semantics = [#tpu.dimension_semantics<parallel>], iteration_bounds = array<i64: 2>, scalar_prefetch = 0 : i64, scratch_operands = 0 : i64, tpu.core_type = #tpu.core_type<tc>, window_params = [{pipeline_mode = #tpu.pipeline_mode<synchronous>, transform_indices = @transform_0, window_bounds = array<i64: 1, 16, 64>}, {transform_indices = @transform_1, window_bounds = array<i64: 1, 16, 1>}, {transform_indices = @transform_2, window_bounds = array<i64: 1, 16, 1>}, {pipeline_mode = #tpu.pipeline_mode<synchronous>, transform_indices = @transform_3, window_bounds = array<i64: 16, 1>}, {pipeline_mode = #tpu.pipeline_mode<synchronous>, transform_indices = @transform_4, window_bounds = array<i64: 16, 1>}, {pipeline_mode = #tpu.pipeline_mode<synchronous>, transform_indices = @transform_5, window_bounds = array<i64: 16, 144>}, {pipeline_mode = #tpu.pipeline_mode<synchronous>, transform_indices = @transform_6, window_bounds = array<i64: 16, 1>}, {pipeline_mode = #tpu.pipeline_mode<synchronous>, transform_indices = @transform_7, window_bounds = array<i64: 16, 1>}, {pipeline_mode = #tpu.pipeline_mode<synchronous>, transform_indices = @transform_8, window_bounds = array<i64: 16, 1>}, {pipeline_mode = #tpu.pipeline_mode<synchronous>, transform_indices = @transform_9, window_bounds = array<i64: 16, 144>}, {pipeline_mode = #tpu.pipeline_mode<synchronous>, transform_indices = @transform_10, window_bounds = array<i64: 16, 1>}, {pipeline_mode = #tpu.pipeline_mode<synchronous>, transform_indices = @transform_11, window_bounds = array<i64: 16, 1>}, {pipeline_mode = #tpu.pipeline_mode<synchronous>, transform_indices = @transform_12, window_bounds = array<i64: 16, 1>}, {pipeline_mode = #tpu.pipeline_mode<synchronous>, transform_indices = @transform_13, window_bounds = array<i64: 9, 64>}, {pipeline_mode = #tpu.pipeline_mode<synchronous>, transform_indices = @transform_14, window_bounds = array<i64: 8, 16>}, {pipeline_mode = #tpu.pipeline_mode<synchronous>, transform_indices = @transform_15, window_bounds = array<i64: 8, 1>}, {pipeline_mode = #tpu.pipeline_mode<synchronous>, transform_indices = @transform_16, window_bounds = array<i64: 64, 256>}, {transform_indices = @transform_17, window_bounds = array<i64: 1, 8, 1>}, {transform_indices = @transform_18, window_bounds = array<i64: 1, 8, 1>}, {pipeline_mode = #tpu.pipeline_mode<synchronous>, transform_indices = @transform_19, window_bounds = array<i64: 8, 1>}, {pipeline_mode = #tpu.pipeline_mode<synchronous>, transform_indices = @transform_20, window_bounds = array<i64: 8, 1>}, {pipeline_mode = #tpu.pipeline_mode<synchronous>, transform_indices = @transform_21, window_bounds = array<i64: 8, 72>}, {pipeline_mode = #tpu.pipeline_mode<synchronous>, transform_indices = @transform_22, window_bounds = array<i64: 8, 1>}, {pipeline_mode = #tpu.pipeline_mode<synchronous>, transform_indices = @transform_23, window_bounds = array<i64: 8, 1>}, {pipeline_mode = #tpu.pipeline_mode<synchronous>, transform_indices = @transform_24, window_bounds = array<i64: 8, 1>}, {pipeline_mode = #tpu.pipeline_mode<synchronous>, transform_indices = @transform_25, window_bounds = array<i64: 8, 72>}, {pipeline_mode = #tpu.pipeline_mode<synchronous>, transform_indices = @transform_26, window_bounds = array<i64: 8, 1>}, {pipeline_mode = #tpu.pipeline_mode<synchronous>, transform_indices = @transform_27, window_bounds = array<i64: 8, 1>}, {pipeline_mode = #tpu.pipeline_mode<synchronous>, transform_indices = @transform_28, window_bounds = array<i64: 8, 1>}, {pipeline_mode = #tpu.pipeline_mode<synchronous>, transform_indices = @transform_29, window_bounds = array<i64: 9, 256>}, {pipeline_mode = #tpu.pipeline_mode<synchronous>, transform_indices = @transform_30, window_bounds = array<i64: 4, 8>}, {pipeline_mode = #tpu.pipeline_mode<synchronous>, transform_indices = @transform_31, window_bounds = array<i64: 4, 1>}, {pipeline_mode = #tpu.pipeline_mode<synchronous>, transform_indices = @transform_32, window_bounds = array<i64: 256, 1024>}, {pipeline_mode = #tpu.pipeline_mode<synchronous>, transform_indices = @transform_33, window_bounds = array<i64: 4, 4>}, {pipeline_mode = #tpu.pipeline_mode<synchronous>, transform_indices = @transform_34, window_bounds = array<i64: 4, 1>}, {pipeline_mode = #tpu.pipeline_mode<synchronous>, transform_indices = @transform_35, window_bounds = array<i64: 4, 1>}, {pipeline_mode = #tpu.pipeline_mode<synchronous>, transform_indices = @transform_36, window_bounds = array<i64: 4, 1>}, {pipeline_mode = #tpu.pipeline_mode<synchronous>, transform_indices = @transform_37, window_bounds = array<i64: 4, 4>}, {pipeline_mode = #tpu.pipeline_mode<synchronous>, transform_indices = @transform_38, window_bounds = array<i64: 4, 1>}, {transform_indices = @transform_39, window_bounds = array<i64: 1, 4, 1024>}]} {
    %c0 = arith.constant 0 : index
    %c0_0 = arith.constant 0 : index
    %c0_1 = arith.constant 0 : index
    %0 = vector.load %arg1[%c0, %c0_0, %c0_1] : memref<1x16x64xf32, #tpu.memory_space<vmem>>, vector<1x16x64xf32>
    %1 = vector.shape_cast %0 : vector<1x16x64xf32> to vector<16x64xf32>
    %c0_2 = arith.constant 0 : index
    %c0_3 = arith.constant 0 : index
    %2 = vector.load %arg14[%c0_2, %c0_3] : memref<9x64xf32, #tpu.memory_space<vmem>>, vector<9x64xf32>
    %c0_4 = arith.constant 0 : index
    %c0_5 = arith.constant 0 : index
    %c0_6 = arith.constant 0 : index
    %3 = vector.load %arg2[%c0_4, %c0_5, %c0_6] : memref<1x16x1xf32, #tpu.memory_space<vmem>>, vector<1x16x1xf32>
    %4 = vector.shape_cast %3 : vector<1x16x1xf32> to vector<16x1xf32>
    %cst = arith.constant 1.000000e+00 : f32
    %5 = vector.broadcast %cst : f32 to vector<16x1xf32>
    %6 = arith.addf %5, %4 : vector<16x1xf32>
    %c0_7 = arith.constant 0 : index
    %c0_8 = arith.constant 0 : index
    %7 = vector.load %arg4[%c0_7, %c0_8] : memref<16x1xf32, #tpu.memory_space<vmem>>, vector<16x1xf32>
    %c0_9 = arith.constant 0 : index
    %c0_10 = arith.constant 0 : index
    %8 = vector.load %arg5[%c0_9, %c0_10] : memref<16x1xf32, #tpu.memory_space<vmem>>, vector<16x1xf32>
    %9 = vector.shape_cast %1 : vector<16x64xf32> to vector<1x16x64xf32>
    %cst_11 = arith.constant dense<0.000000e+00> : vector<1xf32>
    %10 = vector.multi_reduction <add>, %9, %cst_11 [1, 2] : vector<1x16x64xf32> to vector<1xf32>
    %11 = vector.shape_cast %10 : vector<1xf32> to vector<1x1x1xf32>
    %12 = vector.extract %11[0, 0, 0] : f32 from vector<1x1x1xf32>
    %cst_12 = arith.constant 1.024000e+03 : f32
    %13 = arith.divf %12, %cst_12 : f32
    %14 = vector.broadcast %13 : f32 to vector<16x64xf32>
    %15 = arith.subf %1, %14 : vector<16x64xf32>
    %16 = arith.mulf %15, %15 : vector<16x64xf32>
    %17 = vector.shape_cast %16 : vector<16x64xf32> to vector<1x16x64xf32>
    %cst_13 = arith.constant dense<0.000000e+00> : vector<1xf32>
    %18 = vector.multi_reduction <add>, %17, %cst_13 [1, 2] : vector<1x16x64xf32> to vector<1xf32>
    %19 = vector.shape_cast %18 : vector<1xf32> to vector<1x1x1xf32>
    %20 = vector.extract %19[0, 0, 0] : f32 from vector<1x1x1xf32>
    %cst_14 = arith.constant 1.024000e+03 : f32
    %21 = arith.divf %20, %cst_14 : f32
    %22 = vector.broadcast %13 : f32 to vector<16x64xf32>
    %23 = arith.subf %1, %22 : vector<16x64xf32>
    %cst_15 = arith.constant 9.99999974E-6 : f32
    %24 = arith.addf %21, %cst_15 : f32
    %25 = math.rsqrt %24 : f32
    %26 = vector.broadcast %25 : f32 to vector<16x64xf32>
    %27 = arith.mulf %23, %26 : vector<16x64xf32>
    %28 = vector.broadcast %7 : vector<16x1xf32> to vector<16x64xf32>
    %29 = arith.mulf %27, %28 : vector<16x64xf32>
    %30 = vector.broadcast %8 : vector<16x1xf32> to vector<16x64xf32>
    %31 = arith.addf %29, %30 : vector<16x64xf32>
    %32 = vector.broadcast %6 : vector<16x1xf32> to vector<16x64xf32>
    %33 = arith.mulf %32, %31 : vector<16x64xf32>
    %c0_16 = arith.constant 0 : index
    %c0_17 = arith.constant 0 : index
    %c0_18 = arith.constant 0 : index
    %34 = vector.load %arg3[%c0_16, %c0_17, %c0_18] : memref<1x16x1xf32, #tpu.memory_space<vmem>>, vector<1x16x1xf32>
    %35 = vector.shape_cast %34 : vector<1x16x1xf32> to vector<16x1xf32>
    %36 = vector.broadcast %35 : vector<16x1xf32> to vector<16x64xf32>
    %37 = arith.addf %33, %36 : vector<16x64xf32>
    %c0_19 = arith.constant 0 : index
    %c0_20 = arith.constant 0 : index
    %38 = vector.load %arg6[%c0_19, %c0_20] : memref<16x144xbf16, #tpu.memory_space<vmem>>, vector<16x144xbf16>
    %c0_21 = arith.constant 0 : index
    %c0_22 = arith.constant 0 : index
    %39 = vector.load %arg7[%c0_21, %c0_22] : memref<16x1xf32, #tpu.memory_space<vmem>>, vector<16x1xf32>
    %40 = vector.extract_strided_slice %37 {offsets = [0, 55], sizes = [16, 9], strides = [1, 1]} : vector<16x64xf32> to vector<16x9xf32>
    %41 = vector.extract_strided_slice %37 {offsets = [0, 0], sizes = [16, 55], strides = [1, 1]} : vector<16x64xf32> to vector<16x55xf32>
    %42 = tpu.concatenate %40, %41 in 1 : vector<16x9xf32>, vector<16x55xf32> -> vector<16x64xf32>
    %43 = vector.extract_strided_slice %2 {offsets = [0, 0], sizes = [1, 64], strides = [1, 1]} : vector<9x64xf32> to vector<1x64xf32>
    %44 = vector.shape_cast %43 : vector<1x64xf32> to vector<64xf32>
    %45 = vector.shape_cast %44 : vector<64xf32> to vector<1x64xf32>
    %46 = vector.broadcast %45 : vector<1x64xf32> to vector<16x64xf32>
    %47 = arith.mulf %42, %46 : vector<16x64xf32>
    %48 = vector.extract_strided_slice %37 {offsets = [0, 56], sizes = [16, 8], strides = [1, 1]} : vector<16x64xf32> to vector<16x8xf32>
    %49 = vector.extract_strided_slice %37 {offsets = [0, 0], sizes = [16, 56], strides = [1, 1]} : vector<16x64xf32> to vector<16x56xf32>
    %50 = tpu.concatenate %48, %49 in 1 : vector<16x8xf32>, vector<16x56xf32> -> vector<16x64xf32>
    %51 = vector.extract_strided_slice %2 {offsets = [1, 0], sizes = [1, 64], strides = [1, 1]} : vector<9x64xf32> to vector<1x64xf32>
    %52 = vector.shape_cast %51 : vector<1x64xf32> to vector<64xf32>
    %53 = vector.shape_cast %52 : vector<64xf32> to vector<1x64xf32>
    %54 = vector.broadcast %53 : vector<1x64xf32> to vector<16x64xf32>
    %55 = arith.mulf %50, %54 : vector<16x64xf32>
    %56 = vector.extract_strided_slice %37 {offsets = [0, 57], sizes = [16, 7], strides = [1, 1]} : vector<16x64xf32> to vector<16x7xf32>
    %57 = vector.extract_strided_slice %37 {offsets = [0, 0], sizes = [16, 57], strides = [1, 1]} : vector<16x64xf32> to vector<16x57xf32>
    %58 = tpu.concatenate %56, %57 in 1 : vector<16x7xf32>, vector<16x57xf32> -> vector<16x64xf32>
    %59 = vector.extract_strided_slice %2 {offsets = [2, 0], sizes = [1, 64], strides = [1, 1]} : vector<9x64xf32> to vector<1x64xf32>
    %60 = vector.shape_cast %59 : vector<1x64xf32> to vector<64xf32>
    %61 = vector.shape_cast %60 : vector<64xf32> to vector<1x64xf32>
    %62 = vector.broadcast %61 : vector<1x64xf32> to vector<16x64xf32>
    %63 = arith.mulf %58, %62 : vector<16x64xf32>
    %64 = vector.extract_strided_slice %37 {offsets = [0, 63], sizes = [16, 1], strides = [1, 1]} : vector<16x64xf32> to vector<16x1xf32>
    %65 = vector.extract_strided_slice %37 {offsets = [0, 0], sizes = [16, 63], strides = [1, 1]} : vector<16x64xf32> to vector<16x63xf32>
    %66 = tpu.concatenate %64, %65 in 1 : vector<16x1xf32>, vector<16x63xf32> -> vector<16x64xf32>
    %67 = vector.extract_strided_slice %2 {offsets = [3, 0], sizes = [1, 64], strides = [1, 1]} : vector<9x64xf32> to vector<1x64xf32>
    %68 = vector.shape_cast %67 : vector<1x64xf32> to vector<64xf32>
    %69 = vector.shape_cast %68 : vector<64xf32> to vector<1x64xf32>
    %70 = vector.broadcast %69 : vector<1x64xf32> to vector<16x64xf32>
    %71 = arith.mulf %66, %70 : vector<16x64xf32>
    %72 = vector.extract_strided_slice %37 {offsets = [0, 1], sizes = [16, 63], strides = [1, 1]} : vector<16x64xf32> to vector<16x63xf32>
    %73 = vector.extract_strided_slice %37 {offsets = [0, 0], sizes = [16, 1], strides = [1, 1]} : vector<16x64xf32> to vector<16x1xf32>
    %74 = tpu.concatenate %72, %73 in 1 : vector<16x63xf32>, vector<16x1xf32> -> vector<16x64xf32>
    %75 = vector.extract_strided_slice %2 {offsets = [5, 0], sizes = [1, 64], strides = [1, 1]} : vector<9x64xf32> to vector<1x64xf32>
    %76 = vector.shape_cast %75 : vector<1x64xf32> to vector<64xf32>
    %77 = vector.shape_cast %76 : vector<64xf32> to vector<1x64xf32>
    %78 = vector.broadcast %77 : vector<1x64xf32> to vector<16x64xf32>
    %79 = arith.mulf %74, %78 : vector<16x64xf32>
    %80 = vector.extract_strided_slice %37 {offsets = [0, 7], sizes = [16, 57], strides = [1, 1]} : vector<16x64xf32> to vector<16x57xf32>
    %81 = vector.extract_strided_slice %37 {offsets = [0, 0], sizes = [16, 7], strides = [1, 1]} : vector<16x64xf32> to vector<16x7xf32>
    %82 = tpu.concatenate %80, %81 in 1 : vector<16x57xf32>, vector<16x7xf32> -> vector<16x64xf32>
    %83 = vector.extract_strided_slice %2 {offsets = [6, 0], sizes = [1, 64], strides = [1, 1]} : vector<9x64xf32> to vector<1x64xf32>
    %84 = vector.shape_cast %83 : vector<1x64xf32> to vector<64xf32>
    %85 = vector.shape_cast %84 : vector<64xf32> to vector<1x64xf32>
    %86 = vector.broadcast %85 : vector<1x64xf32> to vector<16x64xf32>
    %87 = arith.mulf %82, %86 : vector<16x64xf32>
    %88 = vector.extract_strided_slice %37 {offsets = [0, 8], sizes = [16, 56], strides = [1, 1]} : vector<16x64xf32> to vector<16x56xf32>
    %89 = vector.extract_strided_slice %37 {offsets = [0, 0], sizes = [16, 8], strides = [1, 1]} : vector<16x64xf32> to vector<16x8xf32>
    %90 = tpu.concatenate %88, %89 in 1 : vector<16x56xf32>, vector<16x8xf32> -> vector<16x64xf32>
    %91 = vector.extract_strided_slice %2 {offsets = [7, 0], sizes = [1, 64], strides = [1, 1]} : vector<9x64xf32> to vector<1x64xf32>
    %92 = vector.shape_cast %91 : vector<1x64xf32> to vector<64xf32>
    %93 = vector.shape_cast %92 : vector<64xf32> to vector<1x64xf32>
    %94 = vector.broadcast %93 : vector<1x64xf32> to vector<16x64xf32>
    %95 = arith.mulf %90, %94 : vector<16x64xf32>
    %96 = vector.extract_strided_slice %37 {offsets = [0, 9], sizes = [16, 55], strides = [1, 1]} : vector<16x64xf32> to vector<16x55xf32>
    %97 = vector.extract_strided_slice %37 {offsets = [0, 0], sizes = [16, 9], strides = [1, 1]} : vector<16x64xf32> to vector<16x9xf32>
    %98 = tpu.concatenate %96, %97 in 1 : vector<16x55xf32>, vector<16x9xf32> -> vector<16x64xf32>
    %99 = vector.extract_strided_slice %2 {offsets = [8, 0], sizes = [1, 64], strides = [1, 1]} : vector<9x64xf32> to vector<1x64xf32>
    %100 = vector.shape_cast %99 : vector<1x64xf32> to vector<64xf32>
    %101 = vector.shape_cast %100 : vector<64xf32> to vector<1x64xf32>
    %102 = vector.broadcast %101 : vector<1x64xf32> to vector<16x64xf32>
    %103 = arith.mulf %98, %102 : vector<16x64xf32>
    %104 = tpu.concatenate %47, %55, %63, %71, %37, %79, %87, %95, %103 in 0 : vector<16x64xf32>, vector<16x64xf32>, vector<16x64xf32>, vector<16x64xf32>, vector<16x64xf32>, vector<16x64xf32>, vector<16x64xf32>, vector<16x64xf32>, vector<16x64xf32> -> vector<144x64xf32>
    %105 = arith.truncf %104 : vector<144x64xf32> to vector<144x64xbf16>
    %cst_23 = arith.constant dense<0.000000e+00> : vector<16x64xf32>
    %106 = tpu.matmul %38, %105, %cst_23 {dimension_numbers = #tpu.dot_dimension_numbers<[1], [0], [0], [1], [0, 0, 1, 1], [], []>} : vector<16x144xbf16>, vector<144x64xbf16>, vector<16x64xf32> -> vector<16x64xf32>
    %107 = vector.broadcast %39 : vector<16x1xf32> to vector<16x64xf32>
    %108 = arith.addf %106, %107 : vector<16x64xf32>
    %c0_24 = arith.constant 0 : index
    %c0_25 = arith.constant 0 : index
    %109 = vector.load %arg8[%c0_24, %c0_25] : memref<16x1xf32, #tpu.memory_space<vmem>>, vector<16x1xf32>
    %c0_26 = arith.constant 0 : index
    %c0_27 = arith.constant 0 : index
    %110 = vector.load %arg9[%c0_26, %c0_27] : memref<16x1xf32, #tpu.memory_space<vmem>>, vector<16x1xf32>
    %111 = vector.shape_cast %108 : vector<16x64xf32> to vector<1x16x64xf32>
    %cst_28 = arith.constant dense<0.000000e+00> : vector<1xf32>
    %112 = vector.multi_reduction <add>, %111, %cst_28 [1, 2] : vector<1x16x64xf32> to vector<1xf32>
    %113 = vector.shape_cast %112 : vector<1xf32> to vector<1x1x1xf32>
    %114 = vector.extract %113[0, 0, 0] : f32 from vector<1x1x1xf32>
    %cst_29 = arith.constant 1.024000e+03 : f32
    %115 = arith.divf %114, %cst_29 : f32
    %116 = vector.broadcast %115 : f32 to vector<16x64xf32>
    %117 = arith.subf %108, %116 : vector<16x64xf32>
    %118 = arith.mulf %117, %117 : vector<16x64xf32>
    %119 = vector.shape_cast %118 : vector<16x64xf32> to vector<1x16x64xf32>
    %cst_30 = arith.constant dense<0.000000e+00> : vector<1xf32>
    %120 = vector.multi_reduction <add>, %119, %cst_30 [1, 2] : vector<1x16x64xf32> to vector<1xf32>
    %121 = vector.shape_cast %120 : vector<1xf32> to vector<1x1x1xf32>
    %122 = vector.extract %121[0, 0, 0] : f32 from vector<1x1x1xf32>
    %cst_31 = arith.constant 1.024000e+03 : f32
    %123 = arith.divf %122, %cst_31 : f32
    %124 = vector.broadcast %115 : f32 to vector<16x64xf32>
    %125 = arith.subf %108, %124 : vector<16x64xf32>
    %cst_32 = arith.constant 9.99999974E-6 : f32
    %126 = arith.addf %123, %cst_32 : f32
    %127 = math.rsqrt %126 : f32
    %128 = vector.broadcast %127 : f32 to vector<16x64xf32>
    %129 = arith.mulf %125, %128 : vector<16x64xf32>
    %130 = vector.broadcast %109 : vector<16x1xf32> to vector<16x64xf32>
    %131 = arith.mulf %129, %130 : vector<16x64xf32>
    %132 = vector.broadcast %110 : vector<16x1xf32> to vector<16x64xf32>
    %133 = arith.addf %131, %132 : vector<16x64xf32>
    %cst_33 = arith.constant 5.000000e-01 : f32
    %134 = vector.broadcast %cst_33 : f32 to vector<16x64xf32>
    %135 = arith.mulf %134, %133 : vector<16x64xf32>
    %cst_34 = arith.constant 1.41421354 : f32
    %136 = vector.broadcast %cst_34 : f32 to vector<16x64xf32>
    %137 = arith.divf %133, %136 : vector<16x64xf32>
    %138 = math.erf %137 : vector<16x64xf32>
    %cst_35 = arith.constant 1.000000e+00 : f32
    %139 = vector.broadcast %cst_35 : f32 to vector<16x64xf32>
    %140 = arith.addf %139, %138 : vector<16x64xf32>
    %141 = arith.mulf %135, %140 : vector<16x64xf32>
    %c0_36 = arith.constant 0 : index
    %c0_37 = arith.constant 0 : index
    %142 = vector.load %arg10[%c0_36, %c0_37] : memref<16x144xbf16, #tpu.memory_space<vmem>>, vector<16x144xbf16>
    %c0_38 = arith.constant 0 : index
    %c0_39 = arith.constant 0 : index
    %143 = vector.load %arg11[%c0_38, %c0_39] : memref<16x1xf32, #tpu.memory_space<vmem>>, vector<16x1xf32>
    %144 = vector.extract_strided_slice %141 {offsets = [0, 55], sizes = [16, 9], strides = [1, 1]} : vector<16x64xf32> to vector<16x9xf32>
    %145 = vector.extract_strided_slice %141 {offsets = [0, 0], sizes = [16, 55], strides = [1, 1]} : vector<16x64xf32> to vector<16x55xf32>
    %146 = tpu.concatenate %144, %145 in 1 : vector<16x9xf32>, vector<16x55xf32> -> vector<16x64xf32>
    %147 = vector.extract_strided_slice %2 {offsets = [0, 0], sizes = [1, 64], strides = [1, 1]} : vector<9x64xf32> to vector<1x64xf32>
    %148 = vector.shape_cast %147 : vector<1x64xf32> to vector<64xf32>
    %149 = vector.shape_cast %148 : vector<64xf32> to vector<1x64xf32>
    %150 = vector.broadcast %149 : vector<1x64xf32> to vector<16x64xf32>
    %151 = arith.mulf %146, %150 : vector<16x64xf32>
    %152 = vector.extract_strided_slice %141 {offsets = [0, 56], sizes = [16, 8], strides = [1, 1]} : vector<16x64xf32> to vector<16x8xf32>
    %153 = vector.extract_strided_slice %141 {offsets = [0, 0], sizes = [16, 56], strides = [1, 1]} : vector<16x64xf32> to vector<16x56xf32>
    %154 = tpu.concatenate %152, %153 in 1 : vector<16x8xf32>, vector<16x56xf32> -> vector<16x64xf32>
    %155 = vector.extract_strided_slice %2 {offsets = [1, 0], sizes = [1, 64], strides = [1, 1]} : vector<9x64xf32> to vector<1x64xf32>
    %156 = vector.shape_cast %155 : vector<1x64xf32> to vector<64xf32>
    %157 = vector.shape_cast %156 : vector<64xf32> to vector<1x64xf32>
    %158 = vector.broadcast %157 : vector<1x64xf32> to vector<16x64xf32>
    %159 = arith.mulf %154, %158 : vector<16x64xf32>
    %160 = vector.extract_strided_slice %141 {offsets = [0, 57], sizes = [16, 7], strides = [1, 1]} : vector<16x64xf32> to vector<16x7xf32>
    %161 = vector.extract_strided_slice %141 {offsets = [0, 0], sizes = [16, 57], strides = [1, 1]} : vector<16x64xf32> to vector<16x57xf32>
    %162 = tpu.concatenate %160, %161 in 1 : vector<16x7xf32>, vector<16x57xf32> -> vector<16x64xf32>
    %163 = vector.extract_strided_slice %2 {offsets = [2, 0], sizes = [1, 64], strides = [1, 1]} : vector<9x64xf32> to vector<1x64xf32>
    %164 = vector.shape_cast %163 : vector<1x64xf32> to vector<64xf32>
    %165 = vector.shape_cast %164 : vector<64xf32> to vector<1x64xf32>
    %166 = vector.broadcast %165 : vector<1x64xf32> to vector<16x64xf32>
    %167 = arith.mulf %162, %166 : vector<16x64xf32>
    %168 = vector.extract_strided_slice %141 {offsets = [0, 63], sizes = [16, 1], strides = [1, 1]} : vector<16x64xf32> to vector<16x1xf32>
    %169 = vector.extract_strided_slice %141 {offsets = [0, 0], sizes = [16, 63], strides = [1, 1]} : vector<16x64xf32> to vector<16x63xf32>
    %170 = tpu.concatenate %168, %169 in 1 : vector<16x1xf32>, vector<16x63xf32> -> vector<16x64xf32>
    %171 = vector.extract_strided_slice %2 {offsets = [3, 0], sizes = [1, 64], strides = [1, 1]} : vector<9x64xf32> to vector<1x64xf32>
    %172 = vector.shape_cast %171 : vector<1x64xf32> to vector<64xf32>
    %173 = vector.shape_cast %172 : vector<64xf32> to vector<1x64xf32>
    %174 = vector.broadcast %173 : vector<1x64xf32> to vector<16x64xf32>
    %175 = arith.mulf %170, %174 : vector<16x64xf32>
    %176 = vector.extract_strided_slice %141 {offsets = [0, 1], sizes = [16, 63], strides = [1, 1]} : vector<16x64xf32> to vector<16x63xf32>
    %177 = vector.extract_strided_slice %141 {offsets = [0, 0], sizes = [16, 1], strides = [1, 1]} : vector<16x64xf32> to vector<16x1xf32>
    %178 = tpu.concatenate %176, %177 in 1 : vector<16x63xf32>, vector<16x1xf32> -> vector<16x64xf32>
    %179 = vector.extract_strided_slice %2 {offsets = [5, 0], sizes = [1, 64], strides = [1, 1]} : vector<9x64xf32> to vector<1x64xf32>
    %180 = vector.shape_cast %179 : vector<1x64xf32> to vector<64xf32>
    %181 = vector.shape_cast %180 : vector<64xf32> to vector<1x64xf32>
    %182 = vector.broadcast %181 : vector<1x64xf32> to vector<16x64xf32>
    %183 = arith.mulf %178, %182 : vector<16x64xf32>
    %184 = vector.extract_strided_slice %141 {offsets = [0, 7], sizes = [16, 57], strides = [1, 1]} : vector<16x64xf32> to vector<16x57xf32>
    %185 = vector.extract_strided_slice %141 {offsets = [0, 0], sizes = [16, 7], strides = [1, 1]} : vector<16x64xf32> to vector<16x7xf32>
    %186 = tpu.concatenate %184, %185 in 1 : vector<16x57xf32>, vector<16x7xf32> -> vector<16x64xf32>
    %187 = vector.extract_strided_slice %2 {offsets = [6, 0], sizes = [1, 64], strides = [1, 1]} : vector<9x64xf32> to vector<1x64xf32>
    %188 = vector.shape_cast %187 : vector<1x64xf32> to vector<64xf32>
    %189 = vector.shape_cast %188 : vector<64xf32> to vector<1x64xf32>
    %190 = vector.broadcast %189 : vector<1x64xf32> to vector<16x64xf32>
    %191 = arith.mulf %186, %190 : vector<16x64xf32>
    %192 = vector.extract_strided_slice %141 {offsets = [0, 8], sizes = [16, 56], strides = [1, 1]} : vector<16x64xf32> to vector<16x56xf32>
    %193 = vector.extract_strided_slice %141 {offsets = [0, 0], sizes = [16, 8], strides = [1, 1]} : vector<16x64xf32> to vector<16x8xf32>
    %194 = tpu.concatenate %192, %193 in 1 : vector<16x56xf32>, vector<16x8xf32> -> vector<16x64xf32>
    %195 = vector.extract_strided_slice %2 {offsets = [7, 0], sizes = [1, 64], strides = [1, 1]} : vector<9x64xf32> to vector<1x64xf32>
    %196 = vector.shape_cast %195 : vector<1x64xf32> to vector<64xf32>
    %197 = vector.shape_cast %196 : vector<64xf32> to vector<1x64xf32>
    %198 = vector.broadcast %197 : vector<1x64xf32> to vector<16x64xf32>
    %199 = arith.mulf %194, %198 : vector<16x64xf32>
    %200 = vector.extract_strided_slice %141 {offsets = [0, 9], sizes = [16, 55], strides = [1, 1]} : vector<16x64xf32> to vector<16x55xf32>
    %201 = vector.extract_strided_slice %141 {offsets = [0, 0], sizes = [16, 9], strides = [1, 1]} : vector<16x64xf32> to vector<16x9xf32>
    %202 = tpu.concatenate %200, %201 in 1 : vector<16x55xf32>, vector<16x9xf32> -> vector<16x64xf32>
    %203 = vector.extract_strided_slice %2 {offsets = [8, 0], sizes = [1, 64], strides = [1, 1]} : vector<9x64xf32> to vector<1x64xf32>
    %204 = vector.shape_cast %203 : vector<1x64xf32> to vector<64xf32>
    %205 = vector.shape_cast %204 : vector<64xf32> to vector<1x64xf32>
    %206 = vector.broadcast %205 : vector<1x64xf32> to vector<16x64xf32>
    %207 = arith.mulf %202, %206 : vector<16x64xf32>
    %208 = tpu.concatenate %151, %159, %167, %175, %141, %183, %191, %199, %207 in 0 : vector<16x64xf32>, vector<16x64xf32>, vector<16x64xf32>, vector<16x64xf32>, vector<16x64xf32>, vector<16x64xf32>, vector<16x64xf32>, vector<16x64xf32>, vector<16x64xf32> -> vector<144x64xf32>
    %209 = arith.truncf %208 : vector<144x64xf32> to vector<144x64xbf16>
    %cst_40 = arith.constant dense<0.000000e+00> : vector<16x64xf32>
    %210 = tpu.matmul %142, %209, %cst_40 {dimension_numbers = #tpu.dot_dimension_numbers<[1], [0], [0], [1], [0, 0, 1, 1], [], []>} : vector<16x144xbf16>, vector<144x64xbf16>, vector<16x64xf32> -> vector<16x64xf32>
    %211 = vector.broadcast %143 : vector<16x1xf32> to vector<16x64xf32>
    %212 = arith.addf %210, %211 : vector<16x64xf32>
    %c0_41 = arith.constant 0 : index
    %c0_42 = arith.constant 0 : index
    %213 = vector.load %arg12[%c0_41, %c0_42] : memref<16x1xf32, #tpu.memory_space<vmem>>, vector<16x1xf32>
    %c0_43 = arith.constant 0 : index
    %c0_44 = arith.constant 0 : index
    %214 = vector.load %arg13[%c0_43, %c0_44] : memref<16x1xf32, #tpu.memory_space<vmem>>, vector<16x1xf32>
    %215 = vector.shape_cast %212 : vector<16x64xf32> to vector<1x16x64xf32>
    %cst_45 = arith.constant dense<0.000000e+00> : vector<1xf32>
    %216 = vector.multi_reduction <add>, %215, %cst_45 [1, 2] : vector<1x16x64xf32> to vector<1xf32>
    %217 = vector.shape_cast %216 : vector<1xf32> to vector<1x1x1xf32>
    %218 = vector.extract %217[0, 0, 0] : f32 from vector<1x1x1xf32>
    %cst_46 = arith.constant 1.024000e+03 : f32
    %219 = arith.divf %218, %cst_46 : f32
    %220 = vector.broadcast %219 : f32 to vector<16x64xf32>
    %221 = arith.subf %212, %220 : vector<16x64xf32>
    %222 = arith.mulf %221, %221 : vector<16x64xf32>
    %223 = vector.shape_cast %222 : vector<16x64xf32> to vector<1x16x64xf32>
    %cst_47 = arith.constant dense<0.000000e+00> : vector<1xf32>
    %224 = vector.multi_reduction <add>, %223, %cst_47 [1, 2] : vector<1x16x64xf32> to vector<1xf32>
    %225 = vector.shape_cast %224 : vector<1xf32> to vector<1x1x1xf32>
    %226 = vector.extract %225[0, 0, 0] : f32 from vector<1x1x1xf32>
    %cst_48 = arith.constant 1.024000e+03 : f32
    %227 = arith.divf %226, %cst_48 : f32
    %228 = vector.broadcast %219 : f32 to vector<16x64xf32>
    %229 = arith.subf %212, %228 : vector<16x64xf32>
    %cst_49 = arith.constant 9.99999974E-6 : f32
    %230 = arith.addf %227, %cst_49 : f32
    %231 = math.rsqrt %230 : f32
    %232 = vector.broadcast %231 : f32 to vector<16x64xf32>
    %233 = arith.mulf %229, %232 : vector<16x64xf32>
    %234 = vector.broadcast %213 : vector<16x1xf32> to vector<16x64xf32>
    %235 = arith.mulf %233, %234 : vector<16x64xf32>
    %236 = vector.broadcast %214 : vector<16x1xf32> to vector<16x64xf32>
    %237 = arith.addf %235, %236 : vector<16x64xf32>
    %238 = arith.addf %237, %37 : vector<16x64xf32>
    %c0_50 = arith.constant 0 : index
    %c0_51 = arith.constant 0 : index
    %239 = vector.load %arg15[%c0_50, %c0_51] : memref<8x16xbf16, #tpu.memory_space<vmem>>, vector<8x16xbf16>
    %240 = arith.truncf %238 : vector<16x64xf32> to vector<16x64xbf16>
    %cst_52 = arith.constant dense<0.000000e+00> : vector<8x64xf32>
    %241 = tpu.matmul %239, %240, %cst_52 {dimension_numbers = #tpu.dot_dimension_numbers<[1], [0], [0], [1], [0, 0, 1, 1], [], []>} : vector<8x16xbf16>, vector<16x64xbf16>, vector<8x64xf32> -> vector<8x64xf32>
    %c0_53 = arith.constant 0 : index
    %c0_54 = arith.constant 0 : index
    %242 = vector.load %arg16[%c0_53, %c0_54] : memref<8x1xf32, #tpu.memory_space<vmem>>, vector<8x1xf32>
    %243 = vector.broadcast %242 : vector<8x1xf32> to vector<8x64xf32>
    %244 = arith.addf %241, %243 : vector<8x64xf32>
    %c0_55 = arith.constant 0 : index
    %c0_56 = arith.constant 0 : index
    %245 = vector.load %arg17[%c0_55, %c0_56] : memref<64x256xf32, #tpu.memory_space<vmem>>, vector<64x256xf32>
    %cst_57 = arith.constant dense<0.000000e+00> : vector<8x256xf32>
    %246 = tpu.matmul %244, %245, %cst_57 {dimension_numbers = #tpu.dot_dimension_numbers<[1], [0], [0], [1], [0, 0, 1, 1], [], []>} : vector<8x64xf32>, vector<64x256xf32>, vector<8x256xf32> -> vector<8x256xf32>
    %cst_58 = arith.constant 5.000000e-01 : f32
    %247 = vector.broadcast %cst_58 : f32 to vector<8x256xf32>
    %248 = arith.mulf %247, %246 : vector<8x256xf32>
    %cst_59 = arith.constant 1.41421354 : f32
    %249 = vector.broadcast %cst_59 : f32 to vector<8x256xf32>
    %250 = arith.divf %246, %249 : vector<8x256xf32>
    %251 = math.erf %250 : vector<8x256xf32>
    %cst_60 = arith.constant 1.000000e+00 : f32
    %252 = vector.broadcast %cst_60 : f32 to vector<8x256xf32>
    %253 = arith.addf %252, %251 : vector<8x256xf32>
    %254 = arith.mulf %248, %253 : vector<8x256xf32>
    %c0_61 = arith.constant 0 : index
    %c0_62 = arith.constant 0 : index
    %255 = vector.load %arg30[%c0_61, %c0_62] : memref<9x256xf32, #tpu.memory_space<vmem>>, vector<9x256xf32>
    %c0_63 = arith.constant 0 : index
    %c0_64 = arith.constant 0 : index
    %c0_65 = arith.constant 0 : index
    %256 = vector.load %arg18[%c0_63, %c0_64, %c0_65] : memref<1x8x1xf32, #tpu.memory_space<vmem>>, vector<1x8x1xf32>
    %257 = vector.shape_cast %256 : vector<1x8x1xf32> to vector<8x1xf32>
    %cst_66 = arith.constant 1.000000e+00 : f32
    %258 = vector.broadcast %cst_66 : f32 to vector<8x1xf32>
    %259 = arith.addf %258, %257 : vector<8x1xf32>
    %c0_67 = arith.constant 0 : index
    %c0_68 = arith.constant 0 : index
    %260 = vector.load %arg20[%c0_67, %c0_68] : memref<8x1xf32, #tpu.memory_space<vmem>>, vector<8x1xf32>
    %c0_69 = arith.constant 0 : index
    %c0_70 = arith.constant 0 : index
    %261 = vector.load %arg21[%c0_69, %c0_70] : memref<8x1xf32, #tpu.memory_space<vmem>>, vector<8x1xf32>
    %262 = vector.shape_cast %254 : vector<8x256xf32> to vector<1x8x256xf32>
    %cst_71 = arith.constant dense<0.000000e+00> : vector<1xf32>
    %263 = vector.multi_reduction <add>, %262, %cst_71 [1, 2] : vector<1x8x256xf32> to vector<1xf32>
    %264 = vector.shape_cast %263 : vector<1xf32> to vector<1x1x1xf32>
    %265 = vector.extract %264[0, 0, 0] : f32 from vector<1x1x1xf32>
    %cst_72 = arith.constant 2.048000e+03 : f32
    %266 = arith.divf %265, %cst_72 : f32
    %267 = vector.broadcast %266 : f32 to vector<8x256xf32>
    %268 = arith.subf %254, %267 : vector<8x256xf32>
    %269 = arith.mulf %268, %268 : vector<8x256xf32>
    %270 = vector.shape_cast %269 : vector<8x256xf32> to vector<1x8x256xf32>
    %cst_73 = arith.constant dense<0.000000e+00> : vector<1xf32>
    %271 = vector.multi_reduction <add>, %270, %cst_73 [1, 2] : vector<1x8x256xf32> to vector<1xf32>
    %272 = vector.shape_cast %271 : vector<1xf32> to vector<1x1x1xf32>
    %273 = vector.extract %272[0, 0, 0] : f32 from vector<1x1x1xf32>
    %cst_74 = arith.constant 2.048000e+03 : f32
    %274 = arith.divf %273, %cst_74 : f32
    %275 = vector.broadcast %266 : f32 to vector<8x256xf32>
    %276 = arith.subf %254, %275 : vector<8x256xf32>
    %cst_75 = arith.constant 9.99999974E-6 : f32
    %277 = arith.addf %274, %cst_75 : f32
    %278 = math.rsqrt %277 : f32
    %279 = vector.broadcast %278 : f32 to vector<8x256xf32>
    %280 = arith.mulf %276, %279 : vector<8x256xf32>
    %281 = vector.broadcast %260 : vector<8x1xf32> to vector<8x256xf32>
    %282 = arith.mulf %280, %281 : vector<8x256xf32>
    %283 = vector.broadcast %261 : vector<8x1xf32> to vector<8x256xf32>
    %284 = arith.addf %282, %283 : vector<8x256xf32>
    %285 = vector.broadcast %259 : vector<8x1xf32> to vector<8x256xf32>
    %286 = arith.mulf %285, %284 : vector<8x256xf32>
    %c0_76 = arith.constant 0 : index
    %c0_77 = arith.constant 0 : index
    %c0_78 = arith.constant 0 : index
    %287 = vector.load %arg19[%c0_76, %c0_77, %c0_78] : memref<1x8x1xf32, #tpu.memory_space<vmem>>, vector<1x8x1xf32>
    %288 = vector.shape_cast %287 : vector<1x8x1xf32> to vector<8x1xf32>
    %289 = vector.broadcast %288 : vector<8x1xf32> to vector<8x256xf32>
    %290 = arith.addf %286, %289 : vector<8x256xf32>
    %c0_79 = arith.constant 0 : index
    %c0_80 = arith.constant 0 : index
    %291 = vector.load %arg22[%c0_79, %c0_80] : memref<8x72xbf16, #tpu.memory_space<vmem>>, vector<8x72xbf16>
    %c0_81 = arith.constant 0 : index
    %c0_82 = arith.constant 0 : index
    %292 = vector.load %arg23[%c0_81, %c0_82] : memref<8x1xf32, #tpu.memory_space<vmem>>, vector<8x1xf32>
    %293 = vector.extract_strided_slice %290 {offsets = [0, 239], sizes = [8, 17], strides = [1, 1]} : vector<8x256xf32> to vector<8x17xf32>
    %294 = vector.extract_strided_slice %290 {offsets = [0, 0], sizes = [8, 239], strides = [1, 1]} : vector<8x256xf32> to vector<8x239xf32>
    %295 = tpu.concatenate %293, %294 in 1 : vector<8x17xf32>, vector<8x239xf32> -> vector<8x256xf32>
    %296 = vector.extract_strided_slice %255 {offsets = [0, 0], sizes = [1, 256], strides = [1, 1]} : vector<9x256xf32> to vector<1x256xf32>
    %297 = vector.shape_cast %296 : vector<1x256xf32> to vector<256xf32>
    %298 = vector.shape_cast %297 : vector<256xf32> to vector<1x256xf32>
    %299 = vector.broadcast %298 : vector<1x256xf32> to vector<8x256xf32>
    %300 = arith.mulf %295, %299 : vector<8x256xf32>
    %301 = vector.extract_strided_slice %290 {offsets = [0, 240], sizes = [8, 16], strides = [1, 1]} : vector<8x256xf32> to vector<8x16xf32>
    %302 = vector.extract_strided_slice %290 {offsets = [0, 0], sizes = [8, 240], strides = [1, 1]} : vector<8x256xf32> to vector<8x240xf32>
    %303 = tpu.concatenate %301, %302 in 1 : vector<8x16xf32>, vector<8x240xf32> -> vector<8x256xf32>
    %304 = vector.extract_strided_slice %255 {offsets = [1, 0], sizes = [1, 256], strides = [1, 1]} : vector<9x256xf32> to vector<1x256xf32>
    %305 = vector.shape_cast %304 : vector<1x256xf32> to vector<256xf32>
    %306 = vector.shape_cast %305 : vector<256xf32> to vector<1x256xf32>
    %307 = vector.broadcast %306 : vector<1x256xf32> to vector<8x256xf32>
    %308 = arith.mulf %303, %307 : vector<8x256xf32>
    %309 = vector.extract_strided_slice %290 {offsets = [0, 241], sizes = [8, 15], strides = [1, 1]} : vector<8x256xf32> to vector<8x15xf32>
    %310 = vector.extract_strided_slice %290 {offsets = [0, 0], sizes = [8, 241], strides = [1, 1]} : vector<8x256xf32> to vector<8x241xf32>
    %311 = tpu.concatenate %309, %310 in 1 : vector<8x15xf32>, vector<8x241xf32> -> vector<8x256xf32>
    %312 = vector.extract_strided_slice %255 {offsets = [2, 0], sizes = [1, 256], strides = [1, 1]} : vector<9x256xf32> to vector<1x256xf32>
    %313 = vector.shape_cast %312 : vector<1x256xf32> to vector<256xf32>
    %314 = vector.shape_cast %313 : vector<256xf32> to vector<1x256xf32>
    %315 = vector.broadcast %314 : vector<1x256xf32> to vector<8x256xf32>
    %316 = arith.mulf %311, %315 : vector<8x256xf32>
    %317 = vector.extract_strided_slice %290 {offsets = [0, 255], sizes = [8, 1], strides = [1, 1]} : vector<8x256xf32> to vector<8x1xf32>
    %318 = vector.extract_strided_slice %290 {offsets = [0, 0], sizes = [8, 255], strides = [1, 1]} : vector<8x256xf32> to vector<8x255xf32>
    %319 = tpu.concatenate %317, %318 in 1 : vector<8x1xf32>, vector<8x255xf32> -> vector<8x256xf32>
    %320 = vector.extract_strided_slice %255 {offsets = [3, 0], sizes = [1, 256], strides = [1, 1]} : vector<9x256xf32> to vector<1x256xf32>
    %321 = vector.shape_cast %320 : vector<1x256xf32> to vector<256xf32>
    %322 = vector.shape_cast %321 : vector<256xf32> to vector<1x256xf32>
    %323 = vector.broadcast %322 : vector<1x256xf32> to vector<8x256xf32>
    %324 = arith.mulf %319, %323 : vector<8x256xf32>
    %325 = vector.extract_strided_slice %290 {offsets = [0, 1], sizes = [8, 255], strides = [1, 1]} : vector<8x256xf32> to vector<8x255xf32>
    %326 = vector.extract_strided_slice %290 {offsets = [0, 0], sizes = [8, 1], strides = [1, 1]} : vector<8x256xf32> to vector<8x1xf32>
    %327 = tpu.concatenate %325, %326 in 1 : vector<8x255xf32>, vector<8x1xf32> -> vector<8x256xf32>
    %328 = vector.extract_strided_slice %255 {offsets = [5, 0], sizes = [1, 256], strides = [1, 1]} : vector<9x256xf32> to vector<1x256xf32>
    %329 = vector.shape_cast %328 : vector<1x256xf32> to vector<256xf32>
    %330 = vector.shape_cast %329 : vector<256xf32> to vector<1x256xf32>
    %331 = vector.broadcast %330 : vector<1x256xf32> to vector<8x256xf32>
    %332 = arith.mulf %327, %331 : vector<8x256xf32>
    %333 = vector.extract_strided_slice %290 {offsets = [0, 15], sizes = [8, 241], strides = [1, 1]} : vector<8x256xf32> to vector<8x241xf32>
    %334 = vector.extract_strided_slice %290 {offsets = [0, 0], sizes = [8, 15], strides = [1, 1]} : vector<8x256xf32> to vector<8x15xf32>
    %335 = tpu.concatenate %333, %334 in 1 : vector<8x241xf32>, vector<8x15xf32> -> vector<8x256xf32>
    %336 = vector.extract_strided_slice %255 {offsets = [6, 0], sizes = [1, 256], strides = [1, 1]} : vector<9x256xf32> to vector<1x256xf32>
    %337 = vector.shape_cast %336 : vector<1x256xf32> to vector<256xf32>
    %338 = vector.shape_cast %337 : vector<256xf32> to vector<1x256xf32>
    %339 = vector.broadcast %338 : vector<1x256xf32> to vector<8x256xf32>
    %340 = arith.mulf %335, %339 : vector<8x256xf32>
    %341 = vector.extract_strided_slice %290 {offsets = [0, 16], sizes = [8, 240], strides = [1, 1]} : vector<8x256xf32> to vector<8x240xf32>
    %342 = vector.extract_strided_slice %290 {offsets = [0, 0], sizes = [8, 16], strides = [1, 1]} : vector<8x256xf32> to vector<8x16xf32>
    %343 = tpu.concatenate %341, %342 in 1 : vector<8x240xf32>, vector<8x16xf32> -> vector<8x256xf32>
    %344 = vector.extract_strided_slice %255 {offsets = [7, 0], sizes = [1, 256], strides = [1, 1]} : vector<9x256xf32> to vector<1x256xf32>
    %345 = vector.shape_cast %344 : vector<1x256xf32> to vector<256xf32>
    %346 = vector.shape_cast %345 : vector<256xf32> to vector<1x256xf32>
    %347 = vector.broadcast %346 : vector<1x256xf32> to vector<8x256xf32>
    %348 = arith.mulf %343, %347 : vector<8x256xf32>
    %349 = vector.extract_strided_slice %290 {offsets = [0, 17], sizes = [8, 239], strides = [1, 1]} : vector<8x256xf32> to vector<8x239xf32>
    %350 = vector.extract_strided_slice %290 {offsets = [0, 0], sizes = [8, 17], strides = [1, 1]} : vector<8x256xf32> to vector<8x17xf32>
    %351 = tpu.concatenate %349, %350 in 1 : vector<8x239xf32>, vector<8x17xf32> -> vector<8x256xf32>
    %352 = vector.extract_strided_slice %255 {offsets = [8, 0], sizes = [1, 256], strides = [1, 1]} : vector<9x256xf32> to vector<1x256xf32>
    %353 = vector.shape_cast %352 : vector<1x256xf32> to vector<256xf32>
    %354 = vector.shape_cast %353 : vector<256xf32> to vector<1x256xf32>
    %355 = vector.broadcast %354 : vector<1x256xf32> to vector<8x256xf32>
    %356 = arith.mulf %351, %355 : vector<8x256xf32>
    %357 = tpu.concatenate %300, %308, %316, %324, %290, %332, %340, %348, %356 in 0 : vector<8x256xf32>, vector<8x256xf32>, vector<8x256xf32>, vector<8x256xf32>, vector<8x256xf32>, vector<8x256xf32>, vector<8x256xf32>, vector<8x256xf32>, vector<8x256xf32> -> vector<72x256xf32>
    %358 = arith.truncf %357 : vector<72x256xf32> to vector<72x256xbf16>
    %cst_83 = arith.constant dense<0.000000e+00> : vector<8x256xf32>
    %359 = tpu.matmul %291, %358, %cst_83 {dimension_numbers = #tpu.dot_dimension_numbers<[1], [0], [0], [1], [0, 0, 1, 1], [], []>} : vector<8x72xbf16>, vector<72x256xbf16>, vector<8x256xf32> -> vector<8x256xf32>
    %360 = vector.broadcast %292 : vector<8x1xf32> to vector<8x256xf32>
    %361 = arith.addf %359, %360 : vector<8x256xf32>
    %c0_84 = arith.constant 0 : index
    %c0_85 = arith.constant 0 : index
    %362 = vector.load %arg24[%c0_84, %c0_85] : memref<8x1xf32, #tpu.memory_space<vmem>>, vector<8x1xf32>
    %c0_86 = arith.constant 0 : index
    %c0_87 = arith.constant 0 : index
    %363 = vector.load %arg25[%c0_86, %c0_87] : memref<8x1xf32, #tpu.memory_space<vmem>>, vector<8x1xf32>
    %364 = vector.shape_cast %361 : vector<8x256xf32> to vector<1x8x256xf32>
    %cst_88 = arith.constant dense<0.000000e+00> : vector<1xf32>
    %365 = vector.multi_reduction <add>, %364, %cst_88 [1, 2] : vector<1x8x256xf32> to vector<1xf32>
    %366 = vector.shape_cast %365 : vector<1xf32> to vector<1x1x1xf32>
    %367 = vector.extract %366[0, 0, 0] : f32 from vector<1x1x1xf32>
    %cst_89 = arith.constant 2.048000e+03 : f32
    %368 = arith.divf %367, %cst_89 : f32
    %369 = vector.broadcast %368 : f32 to vector<8x256xf32>
    %370 = arith.subf %361, %369 : vector<8x256xf32>
    %371 = arith.mulf %370, %370 : vector<8x256xf32>
    %372 = vector.shape_cast %371 : vector<8x256xf32> to vector<1x8x256xf32>
    %cst_90 = arith.constant dense<0.000000e+00> : vector<1xf32>
    %373 = vector.multi_reduction <add>, %372, %cst_90 [1, 2] : vector<1x8x256xf32> to vector<1xf32>
    %374 = vector.shape_cast %373 : vector<1xf32> to vector<1x1x1xf32>
    %375 = vector.extract %374[0, 0, 0] : f32 from vector<1x1x1xf32>
    %cst_91 = arith.constant 2.048000e+03 : f32
    %376 = arith.divf %375, %cst_91 : f32
    %377 = vector.broadcast %368 : f32 to vector<8x256xf32>
    %378 = arith.subf %361, %377 : vector<8x256xf32>
    %cst_92 = arith.constant 9.99999974E-6 : f32
    %379 = arith.addf %376, %cst_92 : f32
    %380 = math.rsqrt %379 : f32
    %381 = vector.broadcast %380 : f32 to vector<8x256xf32>
    %382 = arith.mulf %378, %381 : vector<8x256xf32>
    %383 = vector.broadcast %362 : vector<8x1xf32> to vector<8x256xf32>
    %384 = arith.mulf %382, %383 : vector<8x256xf32>
    %385 = vector.broadcast %363 : vector<8x1xf32> to vector<8x256xf32>
    %386 = arith.addf %384, %385 : vector<8x256xf32>
    %cst_93 = arith.constant 5.000000e-01 : f32
    %387 = vector.broadcast %cst_93 : f32 to vector<8x256xf32>
    %388 = arith.mulf %387, %386 : vector<8x256xf32>
    %cst_94 = arith.constant 1.41421354 : f32
    %389 = vector.broadcast %cst_94 : f32 to vector<8x256xf32>
    %390 = arith.divf %386, %389 : vector<8x256xf32>
    %391 = math.erf %390 : vector<8x256xf32>
    %cst_95 = arith.constant 1.000000e+00 : f32
    %392 = vector.broadcast %cst_95 : f32 to vector<8x256xf32>
    %393 = arith.addf %392, %391 : vector<8x256xf32>
    %394 = arith.mulf %388, %393 : vector<8x256xf32>
    %c0_96 = arith.constant 0 : index
    %c0_97 = arith.constant 0 : index
    %395 = vector.load %arg26[%c0_96, %c0_97] : memref<8x72xbf16, #tpu.memory_space<vmem>>, vector<8x72xbf16>
    %c0_98 = arith.constant 0 : index
    %c0_99 = arith.constant 0 : index
    %396 = vector.load %arg27[%c0_98, %c0_99] : memref<8x1xf32, #tpu.memory_space<vmem>>, vector<8x1xf32>
    %397 = vector.extract_strided_slice %394 {offsets = [0, 239], sizes = [8, 17], strides = [1, 1]} : vector<8x256xf32> to vector<8x17xf32>
    %398 = vector.extract_strided_slice %394 {offsets = [0, 0], sizes = [8, 239], strides = [1, 1]} : vector<8x256xf32> to vector<8x239xf32>
    %399 = tpu.concatenate %397, %398 in 1 : vector<8x17xf32>, vector<8x239xf32> -> vector<8x256xf32>
    %400 = vector.extract_strided_slice %255 {offsets = [0, 0], sizes = [1, 256], strides = [1, 1]} : vector<9x256xf32> to vector<1x256xf32>
    %401 = vector.shape_cast %400 : vector<1x256xf32> to vector<256xf32>
    %402 = vector.shape_cast %401 : vector<256xf32> to vector<1x256xf32>
    %403 = vector.broadcast %402 : vector<1x256xf32> to vector<8x256xf32>
    %404 = arith.mulf %399, %403 : vector<8x256xf32>
    %405 = vector.extract_strided_slice %394 {offsets = [0, 240], sizes = [8, 16], strides = [1, 1]} : vector<8x256xf32> to vector<8x16xf32>
    %406 = vector.extract_strided_slice %394 {offsets = [0, 0], sizes = [8, 240], strides = [1, 1]} : vector<8x256xf32> to vector<8x240xf32>
    %407 = tpu.concatenate %405, %406 in 1 : vector<8x16xf32>, vector<8x240xf32> -> vector<8x256xf32>
    %408 = vector.extract_strided_slice %255 {offsets = [1, 0], sizes = [1, 256], strides = [1, 1]} : vector<9x256xf32> to vector<1x256xf32>
    %409 = vector.shape_cast %408 : vector<1x256xf32> to vector<256xf32>
    %410 = vector.shape_cast %409 : vector<256xf32> to vector<1x256xf32>
    %411 = vector.broadcast %410 : vector<1x256xf32> to vector<8x256xf32>
    %412 = arith.mulf %407, %411 : vector<8x256xf32>
    %413 = vector.extract_strided_slice %394 {offsets = [0, 241], sizes = [8, 15], strides = [1, 1]} : vector<8x256xf32> to vector<8x15xf32>
    %414 = vector.extract_strided_slice %394 {offsets = [0, 0], sizes = [8, 241], strides = [1, 1]} : vector<8x256xf32> to vector<8x241xf32>
    %415 = tpu.concatenate %413, %414 in 1 : vector<8x15xf32>, vector<8x241xf32> -> vector<8x256xf32>
    %416 = vector.extract_strided_slice %255 {offsets = [2, 0], sizes = [1, 256], strides = [1, 1]} : vector<9x256xf32> to vector<1x256xf32>
    %417 = vector.shape_cast %416 : vector<1x256xf32> to vector<256xf32>
    %418 = vector.shape_cast %417 : vector<256xf32> to vector<1x256xf32>
    %419 = vector.broadcast %418 : vector<1x256xf32> to vector<8x256xf32>
    %420 = arith.mulf %415, %419 : vector<8x256xf32>
    %421 = vector.extract_strided_slice %394 {offsets = [0, 255], sizes = [8, 1], strides = [1, 1]} : vector<8x256xf32> to vector<8x1xf32>
    %422 = vector.extract_strided_slice %394 {offsets = [0, 0], sizes = [8, 255], strides = [1, 1]} : vector<8x256xf32> to vector<8x255xf32>
    %423 = tpu.concatenate %421, %422 in 1 : vector<8x1xf32>, vector<8x255xf32> -> vector<8x256xf32>
    %424 = vector.extract_strided_slice %255 {offsets = [3, 0], sizes = [1, 256], strides = [1, 1]} : vector<9x256xf32> to vector<1x256xf32>
    %425 = vector.shape_cast %424 : vector<1x256xf32> to vector<256xf32>
    %426 = vector.shape_cast %425 : vector<256xf32> to vector<1x256xf32>
    %427 = vector.broadcast %426 : vector<1x256xf32> to vector<8x256xf32>
    %428 = arith.mulf %423, %427 : vector<8x256xf32>
    %429 = vector.extract_strided_slice %394 {offsets = [0, 1], sizes = [8, 255], strides = [1, 1]} : vector<8x256xf32> to vector<8x255xf32>
    %430 = vector.extract_strided_slice %394 {offsets = [0, 0], sizes = [8, 1], strides = [1, 1]} : vector<8x256xf32> to vector<8x1xf32>
    %431 = tpu.concatenate %429, %430 in 1 : vector<8x255xf32>, vector<8x1xf32> -> vector<8x256xf32>
    %432 = vector.extract_strided_slice %255 {offsets = [5, 0], sizes = [1, 256], strides = [1, 1]} : vector<9x256xf32> to vector<1x256xf32>
    %433 = vector.shape_cast %432 : vector<1x256xf32> to vector<256xf32>
    %434 = vector.shape_cast %433 : vector<256xf32> to vector<1x256xf32>
    %435 = vector.broadcast %434 : vector<1x256xf32> to vector<8x256xf32>
    %436 = arith.mulf %431, %435 : vector<8x256xf32>
    %437 = vector.extract_strided_slice %394 {offsets = [0, 15], sizes = [8, 241], strides = [1, 1]} : vector<8x256xf32> to vector<8x241xf32>
    %438 = vector.extract_strided_slice %394 {offsets = [0, 0], sizes = [8, 15], strides = [1, 1]} : vector<8x256xf32> to vector<8x15xf32>
    %439 = tpu.concatenate %437, %438 in 1 : vector<8x241xf32>, vector<8x15xf32> -> vector<8x256xf32>
    %440 = vector.extract_strided_slice %255 {offsets = [6, 0], sizes = [1, 256], strides = [1, 1]} : vector<9x256xf32> to vector<1x256xf32>
    %441 = vector.shape_cast %440 : vector<1x256xf32> to vector<256xf32>
    %442 = vector.shape_cast %441 : vector<256xf32> to vector<1x256xf32>
    %443 = vector.broadcast %442 : vector<1x256xf32> to vector<8x256xf32>
    %444 = arith.mulf %439, %443 : vector<8x256xf32>
    %445 = vector.extract_strided_slice %394 {offsets = [0, 16], sizes = [8, 240], strides = [1, 1]} : vector<8x256xf32> to vector<8x240xf32>
    %446 = vector.extract_strided_slice %394 {offsets = [0, 0], sizes = [8, 16], strides = [1, 1]} : vector<8x256xf32> to vector<8x16xf32>
    %447 = tpu.concatenate %445, %446 in 1 : vector<8x240xf32>, vector<8x16xf32> -> vector<8x256xf32>
    %448 = vector.extract_strided_slice %255 {offsets = [7, 0], sizes = [1, 256], strides = [1, 1]} : vector<9x256xf32> to vector<1x256xf32>
    %449 = vector.shape_cast %448 : vector<1x256xf32> to vector<256xf32>
    %450 = vector.shape_cast %449 : vector<256xf32> to vector<1x256xf32>
    %451 = vector.broadcast %450 : vector<1x256xf32> to vector<8x256xf32>
    %452 = arith.mulf %447, %451 : vector<8x256xf32>
    %453 = vector.extract_strided_slice %394 {offsets = [0, 17], sizes = [8, 239], strides = [1, 1]} : vector<8x256xf32> to vector<8x239xf32>
    %454 = vector.extract_strided_slice %394 {offsets = [0, 0], sizes = [8, 17], strides = [1, 1]} : vector<8x256xf32> to vector<8x17xf32>
    %455 = tpu.concatenate %453, %454 in 1 : vector<8x239xf32>, vector<8x17xf32> -> vector<8x256xf32>
    %456 = vector.extract_strided_slice %255 {offsets = [8, 0], sizes = [1, 256], strides = [1, 1]} : vector<9x256xf32> to vector<1x256xf32>
    %457 = vector.shape_cast %456 : vector<1x256xf32> to vector<256xf32>
    %458 = vector.shape_cast %457 : vector<256xf32> to vector<1x256xf32>
    %459 = vector.broadcast %458 : vector<1x256xf32> to vector<8x256xf32>
    %460 = arith.mulf %455, %459 : vector<8x256xf32>
    %461 = tpu.concatenate %404, %412, %420, %428, %394, %436, %444, %452, %460 in 0 : vector<8x256xf32>, vector<8x256xf32>, vector<8x256xf32>, vector<8x256xf32>, vector<8x256xf32>, vector<8x256xf32>, vector<8x256xf32>, vector<8x256xf32>, vector<8x256xf32> -> vector<72x256xf32>
    %462 = arith.truncf %461 : vector<72x256xf32> to vector<72x256xbf16>
    %cst_100 = arith.constant dense<0.000000e+00> : vector<8x256xf32>
    %463 = tpu.matmul %395, %462, %cst_100 {dimension_numbers = #tpu.dot_dimension_numbers<[1], [0], [0], [1], [0, 0, 1, 1], [], []>} : vector<8x72xbf16>, vector<72x256xbf16>, vector<8x256xf32> -> vector<8x256xf32>
    %464 = vector.broadcast %396 : vector<8x1xf32> to vector<8x256xf32>
    %465 = arith.addf %463, %464 : vector<8x256xf32>
    %c0_101 = arith.constant 0 : index
    %c0_102 = arith.constant 0 : index
    %466 = vector.load %arg28[%c0_101, %c0_102] : memref<8x1xf32, #tpu.memory_space<vmem>>, vector<8x1xf32>
    %c0_103 = arith.constant 0 : index
    %c0_104 = arith.constant 0 : index
    %467 = vector.load %arg29[%c0_103, %c0_104] : memref<8x1xf32, #tpu.memory_space<vmem>>, vector<8x1xf32>
    %468 = vector.shape_cast %465 : vector<8x256xf32> to vector<1x8x256xf32>
    %cst_105 = arith.constant dense<0.000000e+00> : vector<1xf32>
    %469 = vector.multi_reduction <add>, %468, %cst_105 [1, 2] : vector<1x8x256xf32> to vector<1xf32>
    %470 = vector.shape_cast %469 : vector<1xf32> to vector<1x1x1xf32>
    %471 = vector.extract %470[0, 0, 0] : f32 from vector<1x1x1xf32>
    %cst_106 = arith.constant 2.048000e+03 : f32
    %472 = arith.divf %471, %cst_106 : f32
    %473 = vector.broadcast %472 : f32 to vector<8x256xf32>
    %474 = arith.subf %465, %473 : vector<8x256xf32>
    %475 = arith.mulf %474, %474 : vector<8x256xf32>
    %476 = vector.shape_cast %475 : vector<8x256xf32> to vector<1x8x256xf32>
    %cst_107 = arith.constant dense<0.000000e+00> : vector<1xf32>
    %477 = vector.multi_reduction <add>, %476, %cst_107 [1, 2] : vector<1x8x256xf32> to vector<1xf32>
    %478 = vector.shape_cast %477 : vector<1xf32> to vector<1x1x1xf32>
    %479 = vector.extract %478[0, 0, 0] : f32 from vector<1x1x1xf32>
    %cst_108 = arith.constant 2.048000e+03 : f32
    %480 = arith.divf %479, %cst_108 : f32
    %481 = vector.broadcast %472 : f32 to vector<8x256xf32>
    %482 = arith.subf %465, %481 : vector<8x256xf32>
    %cst_109 = arith.constant 9.99999974E-6 : f32
    %483 = arith.addf %480, %cst_109 : f32
    %484 = math.rsqrt %483 : f32
    %485 = vector.broadcast %484 : f32 to vector<8x256xf32>
    %486 = arith.mulf %482, %485 : vector<8x256xf32>
    %487 = vector.broadcast %466 : vector<8x1xf32> to vector<8x256xf32>
    %488 = arith.mulf %486, %487 : vector<8x256xf32>
    %489 = vector.broadcast %467 : vector<8x1xf32> to vector<8x256xf32>
    %490 = arith.addf %488, %489 : vector<8x256xf32>
    %491 = arith.addf %490, %290 : vector<8x256xf32>
    %c0_110 = arith.constant 0 : index
    %c0_111 = arith.constant 0 : index
    %492 = vector.load %arg31[%c0_110, %c0_111] : memref<4x8xbf16, #tpu.memory_space<vmem>>, vector<4x8xbf16>
    %493 = arith.truncf %491 : vector<8x256xf32> to vector<8x256xbf16>
    %cst_112 = arith.constant dense<0.000000e+00> : vector<4x256xf32>
    %494 = tpu.matmul %492, %493, %cst_112 {dimension_numbers = #tpu.dot_dimension_numbers<[1], [0], [0], [1], [0, 0, 1, 1], [], []>} : vector<4x8xbf16>, vector<8x256xbf16>, vector<4x256xf32> -> vector<4x256xf32>
    %c0_113 = arith.constant 0 : index
    %c0_114 = arith.constant 0 : index
    %495 = vector.load %arg32[%c0_113, %c0_114] : memref<4x1xf32, #tpu.memory_space<vmem>>, vector<4x1xf32>
    %496 = vector.broadcast %495 : vector<4x1xf32> to vector<4x256xf32>
    %497 = arith.addf %494, %496 : vector<4x256xf32>
    %c0_115 = arith.constant 0 : index
    %c0_116 = arith.constant 0 : index
    %498 = vector.load %arg33[%c0_115, %c0_116] : memref<256x1024xf32, #tpu.memory_space<vmem>>, vector<256x1024xf32>
    %cst_117 = arith.constant dense<0.000000e+00> : vector<4x1024xf32>
    %499 = tpu.matmul %497, %498, %cst_117 {dimension_numbers = #tpu.dot_dimension_numbers<[1], [0], [0], [1], [0, 0, 1, 1], [], []>} : vector<4x256xf32>, vector<256x1024xf32>, vector<4x1024xf32> -> vector<4x1024xf32>
    %cst_118 = arith.constant 5.000000e-01 : f32
    %500 = vector.broadcast %cst_118 : f32 to vector<4x1024xf32>
    %501 = arith.mulf %500, %499 : vector<4x1024xf32>
    %cst_119 = arith.constant 1.41421354 : f32
    %502 = vector.broadcast %cst_119 : f32 to vector<4x1024xf32>
    %503 = arith.divf %499, %502 : vector<4x1024xf32>
    %504 = math.erf %503 : vector<4x1024xf32>
    %cst_120 = arith.constant 1.000000e+00 : f32
    %505 = vector.broadcast %cst_120 : f32 to vector<4x1024xf32>
    %506 = arith.addf %505, %504 : vector<4x1024xf32>
    %507 = arith.mulf %501, %506 : vector<4x1024xf32>
    %c0_121 = arith.constant 0 : index
    %c0_122 = arith.constant 0 : index
    %508 = vector.load %arg34[%c0_121, %c0_122] : memref<4x4xbf16, #tpu.memory_space<vmem>>, vector<4x4xbf16>
    %509 = arith.truncf %507 : vector<4x1024xf32> to vector<4x1024xbf16>
    %cst_123 = arith.constant dense<0.000000e+00> : vector<4x1024xf32>
    %510 = tpu.matmul %508, %509, %cst_123 {dimension_numbers = #tpu.dot_dimension_numbers<[1], [0], [0], [1], [0, 0, 1, 1], [], []>} : vector<4x4xbf16>, vector<4x1024xbf16>, vector<4x1024xf32> -> vector<4x1024xf32>
    %c0_124 = arith.constant 0 : index
    %c0_125 = arith.constant 0 : index
    %511 = vector.load %arg35[%c0_124, %c0_125] : memref<4x1xf32, #tpu.memory_space<vmem>>, vector<4x1xf32>
    %512 = vector.broadcast %511 : vector<4x1xf32> to vector<4x1024xf32>
    %513 = arith.addf %510, %512 : vector<4x1024xf32>
    %c0_126 = arith.constant 0 : index
    %c0_127 = arith.constant 0 : index
    %514 = vector.load %arg36[%c0_126, %c0_127] : memref<4x1xf32, #tpu.memory_space<vmem>>, vector<4x1xf32>
    %c0_128 = arith.constant 0 : index
    %c0_129 = arith.constant 0 : index
    %515 = vector.load %arg37[%c0_128, %c0_129] : memref<4x1xf32, #tpu.memory_space<vmem>>, vector<4x1xf32>
    %516 = vector.shape_cast %513 : vector<4x1024xf32> to vector<1x4x1024xf32>
    %cst_130 = arith.constant dense<0.000000e+00> : vector<1xf32>
    %517 = vector.multi_reduction <add>, %516, %cst_130 [1, 2] : vector<1x4x1024xf32> to vector<1xf32>
    %518 = vector.shape_cast %517 : vector<1xf32> to vector<1x1x1xf32>
    %519 = vector.extract %518[0, 0, 0] : f32 from vector<1x1x1xf32>
    %cst_131 = arith.constant 4.096000e+03 : f32
    %520 = arith.divf %519, %cst_131 : f32
    %521 = vector.broadcast %520 : f32 to vector<4x1024xf32>
    %522 = arith.subf %513, %521 : vector<4x1024xf32>
    %523 = arith.mulf %522, %522 : vector<4x1024xf32>
    %524 = vector.shape_cast %523 : vector<4x1024xf32> to vector<1x4x1024xf32>
    %cst_132 = arith.constant dense<0.000000e+00> : vector<1xf32>
    %525 = vector.multi_reduction <add>, %524, %cst_132 [1, 2] : vector<1x4x1024xf32> to vector<1xf32>
    %526 = vector.shape_cast %525 : vector<1xf32> to vector<1x1x1xf32>
    %527 = vector.extract %526[0, 0, 0] : f32 from vector<1x1x1xf32>
    %cst_133 = arith.constant 4.096000e+03 : f32
    %528 = arith.divf %527, %cst_133 : f32
    %529 = vector.broadcast %520 : f32 to vector<4x1024xf32>
    %530 = arith.subf %513, %529 : vector<4x1024xf32>
    %cst_134 = arith.constant 9.99999974E-6 : f32
    %531 = arith.addf %528, %cst_134 : f32
    %532 = math.rsqrt %531 : f32
    %533 = vector.broadcast %532 : f32 to vector<4x1024xf32>
    %534 = arith.mulf %530, %533 : vector<4x1024xf32>
    %535 = vector.broadcast %514 : vector<4x1xf32> to vector<4x1024xf32>
    %536 = arith.mulf %534, %535 : vector<4x1024xf32>
    %537 = vector.broadcast %515 : vector<4x1xf32> to vector<4x1024xf32>
    %538 = arith.addf %536, %537 : vector<4x1024xf32>
    %cst_135 = arith.constant 5.000000e-01 : f32
    %539 = vector.broadcast %cst_135 : f32 to vector<4x1024xf32>
    %540 = arith.mulf %539, %538 : vector<4x1024xf32>
    %cst_136 = arith.constant 1.41421354 : f32
    %541 = vector.broadcast %cst_136 : f32 to vector<4x1024xf32>
    %542 = arith.divf %538, %541 : vector<4x1024xf32>
    %543 = math.erf %542 : vector<4x1024xf32>
    %cst_137 = arith.constant 1.000000e+00 : f32
    %544 = vector.broadcast %cst_137 : f32 to vector<4x1024xf32>
    %545 = arith.addf %544, %543 : vector<4x1024xf32>
    %546 = arith.mulf %540, %545 : vector<4x1024xf32>
    %c0_138 = arith.constant 0 : index
    %c0_139 = arith.constant 0 : index
    %547 = vector.load %arg38[%c0_138, %c0_139] : memref<4x4xbf16, #tpu.memory_space<vmem>>, vector<4x4xbf16>
    %548 = arith.truncf %546 : vector<4x1024xf32> to vector<4x1024xbf16>
    %cst_140 = arith.constant dense<0.000000e+00> : vector<4x1024xf32>
    %549 = tpu.matmul %547, %548, %cst_140 {dimension_numbers = #tpu.dot_dimension_numbers<[1], [0], [0], [1], [0, 0, 1, 1], [], []>} : vector<4x4xbf16>, vector<4x1024xbf16>, vector<4x1024xf32> -> vector<4x1024xf32>
    %c0_141 = arith.constant 0 : index
    %c0_142 = arith.constant 0 : index
    %550 = vector.load %arg39[%c0_141, %c0_142] : memref<4x1xf32, #tpu.memory_space<vmem>>, vector<4x1xf32>
    %551 = vector.broadcast %550 : vector<4x1xf32> to vector<4x1024xf32>
    %552 = arith.addf %549, %551 : vector<4x1024xf32>
    %553 = vector.shape_cast %552 : vector<4x1024xf32> to vector<1x4x1024xf32>
    %c0_143 = arith.constant 0 : index
    %c0_144 = arith.constant 0 : index
    %c0_145 = arith.constant 0 : index
    %554 = vector.load %arg40[%c0_143, %c0_144, %c0_145] : memref<1x4x1024xf32, #tpu.memory_space<vmem>>, vector<1x4x1024xf32>
    tpu.vector_store %arg40[%c0_143, %c0_144, %c0_145], %553 {strides = array<i32>} : memref<1x4x1024xf32, #tpu.memory_space<vmem>>, vector<1x4x1024xf32>,
    return
  }
  func.func @transform_0(%arg0: i32) -> (i32, i32, i32) {
    %c0_i32 = arith.constant 0 : i32
    %c0_i32_0 = arith.constant 0 : i32
    %c0_i32_1 = arith.constant 0 : i32
    %c0_i32_2 = arith.constant 0 : i32
    return %c0_i32, %c0_i32_0, %c0_i32_1 : i32, i32, i32
  }
  func.func @transform_1(%arg0: i32) -> (i32, i32, i32) {
    %c0_i32 = arith.constant 0 : i32
    %c0_i32_0 = arith.constant 0 : i32
    %c0_i32_1 = arith.constant 0 : i32
    return %arg0, %c0_i32, %c0_i32_0 : i32, i32, i32
  }
  func.func @transform_2(%arg0: i32) -> (i32, i32, i32) {
    %c0_i32 = arith.constant 0 : i32
    %c0_i32_0 = arith.constant 0 : i32
    %c0_i32_1 = arith.constant 0 : i32
    return %arg0, %c0_i32, %c0_i32_0 : i32, i32, i32
  }
  func.func @transform_3(%arg0: i32) -> (i32, i32) {
    %c0_i32 = arith.constant 0 : i32
    %c0_i32_0 = arith.constant 0 : i32
    %c0_i32_1 = arith.constant 0 : i32
    return %c0_i32, %c0_i32_0 : i32, i32
  }
  func.func @transform_4(%arg0: i32) -> (i32, i32) {
    %c0_i32 = arith.constant 0 : i32
    %c0_i32_0 = arith.constant 0 : i32
    %c0_i32_1 = arith.constant 0 : i32
    return %c0_i32, %c0_i32_0 : i32, i32
  }
  func.func @transform_5(%arg0: i32) -> (i32, i32) {
    %c0_i32 = arith.constant 0 : i32
    %c0_i32_0 = arith.constant 0 : i32
    %c0_i32_1 = arith.constant 0 : i32
    return %c0_i32, %c0_i32_0 : i32, i32
  }
  func.func @transform_6(%arg0: i32) -> (i32, i32) {
    %c0_i32 = arith.constant 0 : i32
    %c0_i32_0 = arith.constant 0 : i32
    %c0_i32_1 = arith.constant 0 : i32
    return %c0_i32, %c0_i32_0 : i32, i32
  }
  func.func @transform_7(%arg0: i32) -> (i32, i32) {
    %c0_i32 = arith.constant 0 : i32
    %c0_i32_0 = arith.constant 0 : i32
    %c0_i32_1 = arith.constant 0 : i32
    return %c0_i32, %c0_i32_0 : i32, i32
  }
  func.func @transform_8(%arg0: i32) -> (i32, i32) {
    %c0_i32 = arith.constant 0 : i32
    %c0_i32_0 = arith.constant 0 : i32
    %c0_i32_1 = arith.constant 0 : i32
    return %c0_i32, %c0_i32_0 : i32, i32
  }
  func.func @transform_9(%arg0: i32) -> (i32, i32) {
    %c0_i32 = arith.constant 0 : i32
    %c0_i32_0 = arith.constant 0 : i32
    %c0_i32_1 = arith.constant 0 : i32
    return %c0_i32, %c0_i32_0 : i32, i32
  }
  func.func @transform_10(%arg0: i32) -> (i32, i32) {
    %c0_i32 = arith.constant 0 : i32
    %c0_i32_0 = arith.constant 0 : i32
    %c0_i32_1 = arith.constant 0 : i32
    return %c0_i32, %c0_i32_0 : i32, i32
  }
  func.func @transform_11(%arg0: i32) -> (i32, i32) {
    %c0_i32 = arith.constant 0 : i32
    %c0_i32_0 = arith.constant 0 : i32
    %c0_i32_1 = arith.constant 0 : i32
    return %c0_i32, %c0_i32_0 : i32, i32
  }
  func.func @transform_12(%arg0: i32) -> (i32, i32) {
    %c0_i32 = arith.constant 0 : i32
    %c0_i32_0 = arith.constant 0 : i32
    %c0_i32_1 = arith.constant 0 : i32
    return %c0_i32, %c0_i32_0 : i32, i32
  }
  func.func @transform_13(%arg0: i32) -> (i32, i32) {
    %c0_i32 = arith.constant 0 : i32
    %c0_i32_0 = arith.constant 0 : i32
    %c0_i32_1 = arith.constant 0 : i32
    return %c0_i32, %c0_i32_0 : i32, i32
  }
  func.func @transform_14(%arg0: i32) -> (i32, i32) {
    %c0_i32 = arith.constant 0 : i32
    %c0_i32_0 = arith.constant 0 : i32
    %c0_i32_1 = arith.constant 0 : i32
    return %c0_i32, %c0_i32_0 : i32, i32
  }
  func.func @transform_15(%arg0: i32) -> (i32, i32) {
    %c0_i32 = arith.constant 0 : i32
    %c0_i32_0 = arith.constant 0 : i32
    %c0_i32_1 = arith.constant 0 : i32
    return %c0_i32, %c0_i32_0 : i32, i32
  }
  func.func @transform_16(%arg0: i32) -> (i32, i32) {
    %c0_i32 = arith.constant 0 : i32
    %c0_i32_0 = arith.constant 0 : i32
    %c0_i32_1 = arith.constant 0 : i32
    return %c0_i32, %c0_i32_0 : i32, i32
  }
  func.func @transform_17(%arg0: i32) -> (i32, i32, i32) {
    %c0_i32 = arith.constant 0 : i32
    %c0_i32_0 = arith.constant 0 : i32
    %c0_i32_1 = arith.constant 0 : i32
    return %arg0, %c0_i32, %c0_i32_0 : i32, i32, i32
  }
  func.func @transform_18(%arg0: i32) -> (i32, i32, i32) {
    %c0_i32 = arith.constant 0 : i32
    %c0_i32_0 = arith.constant 0 : i32
    %c0_i32_1 = arith.constant 0 : i32
    return %arg0, %c0_i32, %c0_i32_0 : i32, i32, i32
  }
  func.func @transform_19(%arg0: i32) -> (i32, i32) {
    %c0_i32 = arith.constant 0 : i32
    %c0_i32_0 = arith.constant 0 : i32
    %c0_i32_1 = arith.constant 0 : i32
    return %c0_i32, %c0_i32_0 : i32, i32
  }
  func.func @transform_20(%arg0: i32) -> (i32, i32) {
    %c0_i32 = arith.constant 0 : i32
    %c0_i32_0 = arith.constant 0 : i32
    %c0_i32_1 = arith.constant 0 : i32
    return %c0_i32, %c0_i32_0 : i32, i32
  }
  func.func @transform_21(%arg0: i32) -> (i32, i32) {
    %c0_i32 = arith.constant 0 : i32
    %c0_i32_0 = arith.constant 0 : i32
    %c0_i32_1 = arith.constant 0 : i32
    return %c0_i32, %c0_i32_0 : i32, i32
  }
  func.func @transform_22(%arg0: i32) -> (i32, i32) {
    %c0_i32 = arith.constant 0 : i32
    %c0_i32_0 = arith.constant 0 : i32
    %c0_i32_1 = arith.constant 0 : i32
    return %c0_i32, %c0_i32_0 : i32, i32
  }
  func.func @transform_23(%arg0: i32) -> (i32, i32) {
    %c0_i32 = arith.constant 0 : i32
    %c0_i32_0 = arith.constant 0 : i32
    %c0_i32_1 = arith.constant 0 : i32
    return %c0_i32, %c0_i32_0 : i32, i32
  }
  func.func @transform_24(%arg0: i32) -> (i32, i32) {
    %c0_i32 = arith.constant 0 : i32
    %c0_i32_0 = arith.constant 0 : i32
    %c0_i32_1 = arith.constant 0 : i32
    return %c0_i32, %c0_i32_0 : i32, i32
  }
  func.func @transform_25(%arg0: i32) -> (i32, i32) {
    %c0_i32 = arith.constant 0 : i32
    %c0_i32_0 = arith.constant 0 : i32
    %c0_i32_1 = arith.constant 0 : i32
    return %c0_i32, %c0_i32_0 : i32, i32
  }
  func.func @transform_26(%arg0: i32) -> (i32, i32) {
    %c0_i32 = arith.constant 0 : i32
    %c0_i32_0 = arith.constant 0 : i32
    %c0_i32_1 = arith.constant 0 : i32
    return %c0_i32, %c0_i32_0 : i32, i32
  }
  func.func @transform_27(%arg0: i32) -> (i32, i32) {
    %c0_i32 = arith.constant 0 : i32
    %c0_i32_0 = arith.constant 0 : i32
    %c0_i32_1 = arith.constant 0 : i32
    return %c0_i32, %c0_i32_0 : i32, i32
  }
  func.func @transform_28(%arg0: i32) -> (i32, i32) {
    %c0_i32 = arith.constant 0 : i32
    %c0_i32_0 = arith.constant 0 : i32
    %c0_i32_1 = arith.constant 0 : i32
    return %c0_i32, %c0_i32_0 : i32, i32
  }
  func.func @transform_29(%arg0: i32) -> (i32, i32) {
    %c0_i32 = arith.constant 0 : i32
    %c0_i32_0 = arith.constant 0 : i32
    %c0_i32_1 = arith.constant 0 : i32
    return %c0_i32, %c0_i32_0 : i32, i32
  }
  func.func @transform_30(%arg0: i32) -> (i32, i32) {
    %c0_i32 = arith.constant 0 : i32
    %c0_i32_0 = arith.constant 0 : i32
    %c0_i32_1 = arith.constant 0 : i32
    return %c0_i32, %c0_i32_0 : i32, i32
  }
  func.func @transform_31(%arg0: i32) -> (i32, i32) {
    %c0_i32 = arith.constant 0 : i32
    %c0_i32_0 = arith.constant 0 : i32
    %c0_i32_1 = arith.constant 0 : i32
    return %c0_i32, %c0_i32_0 : i32, i32
  }
  func.func @transform_32(%arg0: i32) -> (i32, i32) {
    %c0_i32 = arith.constant 0 : i32
    %c0_i32_0 = arith.constant 0 : i32
    %c0_i32_1 = arith.constant 0 : i32
    return %c0_i32, %c0_i32_0 : i32, i32
  }
  func.func @transform_33(%arg0: i32) -> (i32, i32) {
    %c0_i32 = arith.constant 0 : i32
    %c0_i32_0 = arith.constant 0 : i32
    %c0_i32_1 = arith.constant 0 : i32
    return %c0_i32, %c0_i32_0 : i32, i32
  }
  func.func @transform_34(%arg0: i32) -> (i32, i32) {
    %c0_i32 = arith.constant 0 : i32
    %c0_i32_0 = arith.constant 0 : i32
    %c0_i32_1 = arith.constant 0 : i32
    return %c0_i32, %c0_i32_0 : i32, i32
  }
  func.func @transform_35(%arg0: i32) -> (i32, i32) {
    %c0_i32 = arith.constant 0 : i32
    %c0_i32_0 = arith.constant 0 : i32
    %c0_i32_1 = arith.constant 0 : i32
    return %c0_i32, %c0_i32_0 : i32, i32
  }
  func.func @transform_36(%arg0: i32) -> (i32, i32) {
    %c0_i32 = arith.constant 0 : i32
    %c0_i32_0 = arith.constant 0 : i32
    %c0_i32_1 = arith.constant 0 : i32
    return %c0_i32, %c0_i32_0 : i32, i32
  }
  func.func @transform_37(%arg0: i32) -> (i32, i32) {
    %c0_i32 = arith.constant 0 : i32
    %c0_i32_0 = arith.constant 0 : i32
    %c0_i32_1 = arith.constant 0 : i32
    return %c0_i32, %c0_i32_0 : i32, i32
  }
  func.func @transform_38(%arg0: i32) -> (i32, i32) {
    %c0_i32 = arith.constant 0 : i32
    %c0_i32_0 = arith.constant 0 : i32
    %c0_i32_1 = arith.constant 0 : i32
    return %c0_i32, %c0_i32_0 : i32, i32
  }
  func.func @transform_39(%arg0: i32) -> (i32, i32, i32) {
    %c0_i32 = arith.constant 0 : i32
    %c0_i32_0 = arith.constant 0 : i32
    %c0_i32_1 = arith.constant 0 : i32
    return %arg0, %c0_i32, %c0_i32_0 : i32, i32, i32
  }
}

</mosaic_0001>

<llo_original>
// kernel: decoder_forward.1
$region0: #{decoder_forward.1}
  #allocation0 [shape = 'u32[]', space=smem, size = 0x4, offset = 0x4, fixed_abs, tag = 'smem constant byte address 0x4 - core index']
  #allocation1 [shape = 'u32[144,128]{1,0:T(1,128)}', space=vmem, size = 0x12000, scoped, tag = 'internal scratch']
  %s0 = inlined_call_operand.smem [shape: u32[40], index: -1, kind: input, shape index: {}]
  %s1 = sld [smem:[%s0]]
  %s2 = scalar_lea.smem %s0, 1
  %s3 = sld [smem:[%s2]]
  %s4 = scalar_lea.smem %s0, 2
  %s5 = sld [smem:[%s4]]
  %s6 = scalar_lea.smem %s0, 3
  %s7 = sld [smem:[%s6]]
  %s8 = scalar_lea.smem %s0, 4
  %s9 = sld [smem:[%s8]]
  %s10 = scalar_lea.smem %s0, 5
  %s11 = sld [smem:[%s10]]
  %s12 = scalar_lea.smem %s0, 6
  %s13 = sld [smem:[%s12]]
  %s14 = scalar_lea.smem %s0, 7
  %s15 = sld [smem:[%s14]]
  %s16 = scalar_lea.smem %s0, 8
  %s17 = sld [smem:[%s16]]
  %s18 = scalar_lea.smem %s0, 9
  %s19 = sld [smem:[%s18]]
  %s20 = scalar_lea.smem %s0, 10
  %s21 = sld [smem:[%s20]]
  %s22 = scalar_lea.smem %s0, 11
  %s23 = sld [smem:[%s22]]
  %s24 = scalar_lea.smem %s0, 12
  %s25 = sld [smem:[%s24]]
  %s26 = scalar_lea.smem %s0, 13
  %s27 = sld [smem:[%s26]]
  %s28 = scalar_lea.smem %s0, 14
  %s29 = sld [smem:[%s28]]
  %s30 = scalar_lea.smem %s0, 15
  %s31 = sld [smem:[%s30]]
  %s32 = scalar_lea.smem %s0, 16
  %s33 = sld [smem:[%s32]]
  %s34 = scalar_lea.smem %s0, 17
  %s35 = sld [smem:[%s34]]
  %s36 = scalar_lea.smem %s0, 18
  %s37 = sld [smem:[%s36]]
  %s38 = scalar_lea.smem %s0, 19
  %s39 = sld [smem:[%s38]]
  %s40 = scalar_lea.smem %s0, 20
  %s41 = sld [smem:[%s40]]
  %s42 = scalar_lea.smem %s0, 21
  %s43 = sld [smem:[%s42]]
  %s44 = scalar_lea.smem %s0, 22
  %s45 = sld [smem:[%s44]]
  %s46 = scalar_lea.smem %s0, 23
  %s47 = sld [smem:[%s46]]
  %s48 = scalar_lea.smem %s0, 24
  %s49 = sld [smem:[%s48]]
  %s50 = scalar_lea.smem %s0, 25
  %s51 = sld [smem:[%s50]]
  %s52 = scalar_lea.smem %s0, 26
  %s53 = sld [smem:[%s52]]
  %s54 = scalar_lea.smem %s0, 27
  %s55 = sld [smem:[%s54]]
  %s56 = scalar_lea.smem %s0, 28
  %s57 = sld [smem:[%s56]]
  %s58 = scalar_lea.smem %s0, 29
  %s59 = sld [smem:[%s58]]
  %s60 = scalar_lea.smem %s0, 30
  %s61 = sld [smem:[%s60]]
  %s62 = scalar_lea.smem %s0, 31
  %s63 = sld [smem:[%s62]]
  %s64 = scalar_lea.smem %s0, 32
  %s65 = sld [smem:[%s64]]
  %s66 = scalar_lea.smem %s0, 33
  %s67 = sld [smem:[%s66]]
  %s68 = scalar_lea.smem %s0, 34
  %s69 = sld [smem:[%s68]]
  %s70 = scalar_lea.smem %s0, 35
  %s71 = sld [smem:[%s70]]
  %s72 = scalar_lea.smem %s0, 36
  %s73 = sld [smem:[%s72]]
  %s74 = scalar_lea.smem %s0, 37
  %s75 = sld [smem:[%s74]]
  %s76 = scalar_lea.smem %s0, 38
  %s77 = sld [smem:[%s76]]
  %s78 = scalar_lea.smem %s0, 39
  %s79 = sld [smem:[%s78]]
  %s80 = sld [smem:[#allocation0]]
  $region193: #{decoder_forward.1} parent=0
    _
  %s82 = ssub.s32 1, %s80
  %s83 = scalar_select 0, %s82, %s80
  $region1: #{decoder_forward.1} parent=0
    #allocation2 [shape = 'u8[1048576]{0}', space=vmem, size = 0x100000, scoped, tag = 'input window, operand 32, single buffered']
    #allocation3 [shape = 's32[2]{0}', space=sflag, size = 0x8, scoped, tag = 'scoped memory for decoder_forward.1']
    %84 = vsyncpa [#allocation3], 0
    loop: start=0, step=1, limit=4
    $region2: #{decoder_forward.1} parent=1 // loop_pre_header
      _
    $region3: #{decoder_forward.1} parent=1 // loop_header
      %s86 = sphi 0, %s90
      %p87 = scmp.ge.s32.totalorder %s86, 4
      %s94 = sphi 0, %s94
      %s96 = sphi 0, %s94
      %s97 = sphi 0, %s96
      %s111 = sphi 0, %s97
      %s117 = sphi 0, %s119
      %s120 = sphi 0, %s117
      %s121 = sphi 0, %s120
      %s137 = sphi 0, %s121
      %s143 = sphi 0, %s145
      %s146 = sphi 0, %s143
      %s147 = sphi 0, %s146
      %s163 = sphi 0, %s147
      %s167 = sphi 0, %s167
      %s169 = sphi 0, %s167
      %s170 = sphi 0, %s169
      %s184 = sphi 0, %s170
      %s188 = sphi 0, %s188
      %s190 = sphi 0, %s188
      %s191 = sphi 0, %s190
      %s205 = sphi 0, %s191
      %s209 = sphi 0, %s209
      %s211 = sphi 0, %s209
      %s212 = sphi 0, %s211
      %s226 = sphi 0, %s212
      %s230 = sphi 0, %s230
      %s232 = sphi 0, %s230
      %s233 = sphi 0, %s232
      %s247 = sphi 0, %s233
      %s251 = sphi 0, %s251
      %s253 = sphi 0, %s251
      %s254 = sphi 0, %s253
      %s268 = sphi 0, %s254
      %s272 = sphi 0, %s272
      %s274 = sphi 0, %s272
      %s275 = sphi 0, %s274
      %s289 = sphi 0, %s275
      %s293 = sphi 0, %s293
      %s295 = sphi 0, %s293
      %s296 = sphi 0, %s295
      %s310 = sphi 0, %s296
      %s314 = sphi 0, %s314
      %s316 = sphi 0, %s314
      %s317 = sphi 0, %s316
      %s331 = sphi 0, %s317
      %s335 = sphi 0, %s335
      %s337 = sphi 0, %s335
      %s338 = sphi 0, %s337
      %s352 = sphi 0, %s338
      %s356 = sphi 0, %s356
      %s358 = sphi 0, %s356
      %s359 = sphi 0, %s358
      %s373 = sphi 0, %s359
      %s377 = sphi 0, %s377
      %s379 = sphi 0, %s377
      %s380 = sphi 0, %s379
      %s394 = sphi 0, %s380
      %s398 = sphi 0, %s398
      %s400 = sphi 0, %s398
      %s401 = sphi 0, %s400
      %s415 = sphi 0, %s401
      %s419 = sphi 0, %s419
      %s421 = sphi 0, %s419
      %s422 = sphi 0, %s421
      %s436 = sphi 0, %s422
      %s440 = sphi 0, %s440
      %s442 = sphi 0, %s440
      %s443 = sphi 0, %s442
      %s457 = sphi 0, %s443
      %s463 = sphi 0, %s465
      %s466 = sphi 0, %s463
      %s467 = sphi 0, %s466
      %s483 = sphi 0, %s467
      %s489 = sphi 0, %s491
      %s492 = sphi 0, %s489
      %s493 = sphi 0, %s492
      %s509 = sphi 0, %s493
      %s513 = sphi 0, %s513
      %s515 = sphi 0, %s513
      %s516 = sphi 0, %s515
      %s530 = sphi 0, %s516
      %s534 = sphi 0, %s534
      %s536 = sphi 0, %s534
      %s537 = sphi 0, %s536
      %s551 = sphi 0, %s537
      %s555 = sphi 0, %s555
      %s557 = sphi 0, %s555
      %s558 = sphi 0, %s557
      %s572 = sphi 0, %s558
      %s576 = sphi 0, %s576
      %s578 = sphi 0, %s576
      %s579 = sphi 0, %s578
      %s593 = sphi 0, %s579
      %s597 = sphi 0, %s597
      %s599 = sphi 0, %s597
      %s600 = sphi 0, %s599
      %s614 = sphi 0, %s600
      %s618 = sphi 0, %s618
      %s620 = sphi 0, %s618
      %s621 = sphi 0, %s620
      %s635 = sphi 0, %s621
      %s639 = sphi 0, %s639
      %s641 = sphi 0, %s639
      %s642 = sphi 0, %s641
      %s656 = sphi 0, %s642
      %s660 = sphi 0, %s660
      %s662 = sphi 0, %s660
      %s663 = sphi 0, %s662
      %s677 = sphi 0, %s663
      %s681 = sphi 0, %s681
      %s683 = sphi 0, %s681
      %s684 = sphi 0, %s683
      %s698 = sphi 0, %s684
      %s702 = sphi 0, %s702
      %s704 = sphi 0, %s702
      %s705 = sphi 0, %s704
      %s719 = sphi 0, %s705
      %s723 = sphi 0, %s723
      %s725 = sphi 0, %s723
      %s726 = sphi 0, %s725
      %s740 = sphi 0, %s726
      %s744 = sphi 0, %s744
      %s746 = sphi 0, %s744
      %s747 = sphi 0, %s746
      %s761 = sphi 0, %s747
      %s765 = sphi 0, %s765
      %s767 = sphi 0, %s765
      %s768 = sphi 0, %s767
      %s782 = sphi 0, %s768
      %s786 = sphi 0, %s786
      %s788 = sphi 0, %s786
      %s789 = sphi 0, %s788
      %s803 = sphi 0, %s789
      %s807 = sphi 0, %s807
      %s809 = sphi 0, %s807
      %s810 = sphi 0, %s809
      %s824 = sphi 0, %s810
      %s828 = sphi 0, %s828
      %s830 = sphi 0, %s828
      %s831 = sphi 0, %s830
      %s845 = sphi 0, %s831
      %s849 = sphi 0, %s849
      %s851 = sphi 0, %s849
      %s852 = sphi 0, %s851
      %s866 = sphi 0, %s852
      %s870 = sphi 0, %s870
      %s872 = sphi 0, %s870
      %s873 = sphi 0, %s872
      %s887 = sphi 0, %s873
      %s891 = sphi 0, %s891
      %s893 = sphi 0, %s891
      %s894 = sphi 0, %s893
      %s908 = sphi 0, %s894
      %s912 = sphi 0, %s912
      %s914 = sphi 0, %s912
      %s915 = sphi 0, %s914
      %s929 = sphi 0, %s915
      %s935 = sphi 0, %s937
      %s938 = sphi 0, %s935
      %s939 = sphi 0, %s938
      %s955 = sphi 0, %s939
    $region4: #{decoder_forward.1} parent=1 // loop_header_branch
      %89 = sbr.rel (%p87) target = $region8
    $region5: #{decoder_forward.1} parent=1 // loop_body
      %s91 = ssub.s32 %s86, 1
      %s92 = ssub.s32 %s86, 2
      %s93 = sadd.s32 %s86, 1
      %s95 = sadd.s32 %s94, 1
      %p98 = scmp.eq.s32.totalorder %s86, 1
      %p99 = scmp.ne.s32.totalorder %s94, %s96
      %p100 = scmp.eq.s32.totalorder %s86, 0
      %p101 = por %p99, %p100
      %p102 = scmp.ne.s32.totalorder %s94, %s96
      %p103 = scmp.eq.s32.totalorder %s91, 1
      %p104 = por %p102, %p103
      %p105 = scmp.ne.s32.totalorder %s96, %s97
      %p106 = scmp.eq.s32.totalorder %s91, 0
      %p107 = por %p105, %p106
      %p108 = scmp.ne.s32.totalorder %s96, %s97
      %p109 = scmp.eq.s32.totalorder %s92, 1
      %p110 = por %p108, %p109
      %p112 = scmp.ne.s32.totalorder %s97, %s111
      %p113 = scmp.eq.s32.totalorder %s92, 0
      %p114 = por %p112, %p113
      %s115 = ssub.s32 %s86, %s93
      %p116 = scmp.eq.s32.totalorder %s115, 0
      %s118 = sadd.s32 %s117, 1
      %s119 = scalar_select %p116, %s117, %s118
      %p122 = pneg %p116
      %p123 = scmp.eq.s32.totalorder %s86, 1
      %p124 = por %p122, %p123
      %p125 = scmp.ne.s32.totalorder %s117, %s120
      %p126 = scmp.eq.s32.totalorder %s86, 0
      %p127 = por %p125, %p126
      %p128 = scmp.ne.s32.totalorder %s117, %s120
      %p129 = scmp.eq.s32.totalorder %s91, 1
      %p130 = por %p128, %p129
      %p131 = scmp.ne.s32.totalorder %s120, %s121
      %p132 = scmp.eq.s32.totalorder %s91, 0
      %p133 = por %p131, %p132
      %p134 = scmp.ne.s32.totalorder %s120, %s121
      %p135 = scmp.eq.s32.totalorder %s92, 1
      %p136 = por %p134, %p135
      %p138 = scmp.ne.s32.totalorder %s121, %s137
      %p139 = scmp.eq.s32.totalorder %s92, 0
      %p140 = por %p138, %p139
      %s141 = ssub.s32 %s86, %s93
      %p142 = scmp.eq.s32.totalorder %s141, 0
      %s144 = sadd.s32 %s143, 1
      %s145 = scalar_select %p142, %s143, %s144
      %p148 = pneg %p142
      %p149 = scmp.eq.s32.totalorder %s86, 1
      %p150 = por %p148, %p149
      %p151 = scmp.ne.s32.totalorder %s143, %s146
      %p152 = scmp.eq.s32.totalorder %s86, 0
      %p153 = por %p151, %p152
      %p154 = scmp.ne.s32.totalorder %s143, %s146
      %p155 = scmp.eq.s32.totalorder %s91, 1
      %p156 = por %p154, %p155
      %p157 = scmp.ne.s32.totalorder %s146, %s147
      %p158 = scmp.eq.s32.totalorder %s91, 0
      %p159 = por %p157, %p158
      %p160 = scmp.ne.s32.totalorder %s146, %s147
      %p161 = scmp.eq.s32.totalorder %s92, 1
      %p162 = por %p160, %p161
      %p164 = scmp.ne.s32.totalorder %s147, %s163
      %p165 = scmp.eq.s32.totalorder %s92, 0
      %p166 = por %p164, %p165
      %s168 = sadd.s32 %s167, 1
      %p171 = scmp.eq.s32.totalorder %s86, 1
      %p172 = scmp.ne.s32.totalorder %s167, %s169
      %p173 = scmp.eq.s32.totalorder %s86, 0
      %p174 = por %p172, %p173
      %p175 = scmp.ne.s32.totalorder %s167, %s169
      %p176 = scmp.eq.s32.totalorder %s91, 1
      %p177 = por %p175, %p176
      %p178 = scmp.ne.s32.totalorder %s169, %s170
      %p179 = scmp.eq.s32.totalorder %s91, 0
      %p180 = por %p178, %p179
      %p181 = scmp.ne.s32.totalorder %s169, %s170
      %p182 = scmp.eq.s32.totalorder %s92, 1
      %p183 = por %p181, %p182
      %p185 = scmp.ne.s32.totalorder %s170, %s184
      %p186 = scmp.eq.s32.totalorder %s92, 0
      %p187 = por %p185, %p186
      %s189 = sadd.s32 %s188, 1
      %p192 = scmp.eq.s32.totalorder %s86, 1
      %p193 = scmp.ne.s32.totalorder %s188, %s190
      %p194 = scmp.eq.s32.totalorder %s86, 0
      %p195 = por %p193, %p194
      %p196 = scmp.ne.s32.totalorder %s188, %s190
      %p197 = scmp.eq.s32.totalorder %s91, 1
      %p198 = por %p196, %p197
      %p199 = scmp.ne.s32.totalorder %s190, %s191
      %p200 = scmp.eq.s32.totalorder %s91, 0
      %p201 = por %p199, %p200
      %p202 = scmp.ne.s32.totalorder %s190, %s191
      %p203 = scmp.eq.s32.totalorder %s92, 1
      %p204 = por %p202, %p203
      %p206 = scmp.ne.s32.totalorder %s191, %s205
      %p207 = scmp.eq.s32.totalorder %s92, 0
      %p208 = por %p206, %p207
      %s210 = sadd.s32 %s209, 1
      %p213 = scmp.eq.s32.totalorder %s86, 1
      %p214 = scmp.ne.s32.totalorder %s209, %s211
      %p215 = scmp.eq.s32.totalorder %s86, 0
      %p216 = por %p214, %p215
      %p217 = scmp.ne.s32.totalorder %s209, %s211
      %p218 = scmp.eq.s32.totalorder %s91, 1
      %p219 = por %p217, %p218
      %p220 = scmp.ne.s32.totalorder %s211, %s212
      %p221 = scmp.eq.s32.totalorder %s91, 0
      %p222 = por %p220, %p221
      %p223 = scmp.ne.s32.totalorder %s211, %s212
      %p224 = scmp.eq.s32.totalorder %s92, 1
      %p225 = por %p223, %p224
      %p227 = scmp.ne.s32.totalorder %s212, %s226
      %p228 = scmp.eq.s32.totalorder %s92, 0
      %p229 = por %p227, %p228
      %s231 = sadd.s32 %s230, 1
      %p234 = scmp.eq.s32.totalorder %s86, 1
      %p235 = scmp.ne.s32.totalorder %s230, %s232
      %p236 = scmp.eq.s32.totalorder %s86, 0
      %p237 = por %p235, %p236
      %p238 = scmp.ne.s32.totalorder %s230, %s232
      %p239 = scmp.eq.s32.totalorder %s91, 1
      %p240 = por %p238, %p239
      %p241 = scmp.ne.s32.totalorder %s232, %s233
      %p242 = scmp.eq.s32.totalorder %s91, 0
      %p243 = por %p241, %p242
      %p244 = scmp.ne.s32.totalorder %s232, %s233
      %p245 = scmp.eq.s32.totalorder %s92, 1
      %p246 = por %p244, %p245
      %p248 = scmp.ne.s32.totalorder %s233, %s247
      %p249 = scmp.eq.s32.totalorder %s92, 0
      %p250 = por %p248, %p249
      %s252 = sadd.s32 %s251, 1
      %p255 = scmp.eq.s32.totalorder %s86, 1
      %p256 = scmp.ne.s32.totalorder %s251, %s253
      %p257 = scmp.eq.s32.totalorder %s86, 0
      %p258 = por %p256, %p257
      %p259 = scmp.ne.s32.totalorder %s251, %s253
      %p260 = scmp.eq.s32.totalorder %s91, 1
      %p261 = por %p259, %p260
      %p262 = scmp.ne.s32.totalorder %s253, %s254
      %p263 = scmp.eq.s32.totalorder %s91, 0
      %p264 = por %p262, %p263
      %p265 = scmp.ne.s32.totalorder %s253, %s254
      %p266 = scmp.eq.s32.totalorder %s92, 1
      %p267 = por %p265, %p266
      %p269 = scmp.ne.s32.totalorder %s254, %s268
      %p270 = scmp.eq.s32.totalorder %s92, 0
      %p271 = por %p269, %p270
      %s273 = sadd.s32 %s272, 1
      %p276 = scmp.eq.s32.totalorder %s86, 1
      %p277 = scmp.ne.s32.totalorder %s272, %s274
      %p278 = scmp.eq.s32.totalorder %s86, 0
      %p279 = por %p277, %p278
      %p280 = scmp.ne.s32.totalorder %s272, %s274
      %p281 = scmp.eq.s32.totalorder %s91, 1
      %p282 = por %p280, %p281
      %p283 = scmp.ne.s32.totalorder %s274, %s275
      %p284 = scmp.eq.s32.totalorder %s91, 0
      %p285 = por %p283, %p284
      %p286 = scmp.ne.s32.totalorder %s274, %s275
      %p287 = scmp.eq.s32.totalorder %s92, 1
      %p288 = por %p286, %p287
      %p290 = scmp.ne.s32.totalorder %s275, %s289
      %p291 = scmp.eq.s32.totalorder %s92, 0
      %p292 = por %p290, %p291
      %s294 = sadd.s32 %s293, 1
      %p297 = scmp.eq.s32.totalorder %s86, 1
      %p298 = scmp.ne.s32.totalorder %s293, %s295
      %p299 = scmp.eq.s32.totalorder %s86, 0
      %p300 = por %p298, %p299
      %p301 = scmp.ne.s32.totalorder %s293, %s295
      %p302 = scmp.eq.s32.totalorder %s91, 1
      %p303 = por %p301, %p302
      %p304 = scmp.ne.s32.totalorder %s295, %s296
      %p305 = scmp.eq.s32.totalorder %s91, 0
      %p306 = por %p304, %p305
      %p307 = scmp.ne.s32.totalorder %s295, %s296
      %p308 = scmp.eq.s32.totalorder %s92, 1
      %p309 = por %p307, %p308
      %p311 = scmp.ne.s32.totalorder %s296, %s310
      %p312 = scmp.eq.s32.totalorder %s92, 0
      %p313 = por %p311, %p312
      %s315 = sadd.s32 %s314, 1
      %p318 = scmp.eq.s32.totalorder %s86, 1
      %p319 = scmp.ne.s32.totalorder %s314, %s316
      %p320 = scmp.eq.s32.totalorder %s86, 0
      %p321 = por %p319, %p320
      %p322 = scmp.ne.s32.totalorder %s314, %s316
      %p323 = scmp.eq.s32.totalorder %s91, 1
      %p324 = por %p322, %p323
      %p325 = scmp.ne.s32.totalorder %s316, %s317
      %p326 = scmp.eq.s32.totalorder %s91, 0
      %p327 = por %p325, %p326
      %p328 = scmp.ne.s32.totalorder %s316, %s317
      %p329 = scmp.eq.s32.totalorder %s92, 1
      %p330 = por %p328, %p329
      %p332 = scmp.ne.s32.totalorder %s317, %s331
      %p333 = scmp.eq.s32.totalorder %s92, 0
      %p334 = por %p332, %p333
      %s336 = sadd.s32 %s335, 1
      %p339 = scmp.eq.s32.totalorder %s86, 1
      %p340 = scmp.ne.s32.totalorder %s335, %s337
      %p341 = scmp.eq.s32.totalorder %s86, 0
      %p342 = por %p340, %p341
      %p343 = scmp.ne.s32.totalorder %s335, %s337
      %p344 = scmp.eq.s32.totalorder %s91, 1
      %p345 = por %p343, %p344
      %p346 = scmp.ne.s32.totalorder %s337, %s338
      %p347 = scmp.eq.s32.totalorder %s91, 0
      %p348 = por %p346, %p347
      %p349 = scmp.ne.s32.totalorder %s337, %s338
      %p350 = scmp.eq.s32.totalorder %s92, 1
      %p351 = por %p349, %p350
      %p353 = scmp.ne.s32.totalorder %s338, %s352
      %p354 = scmp.eq.s32.totalorder %s92, 0
      %p355 = por %p353, %p354
      %s357 = sadd.s32 %s356, 1
      %p360 = scmp.eq.s32.totalorder %s86, 1
      %p361 = scmp.ne.s32.totalorder %s356, %s358
      %p362 = scmp.eq.s32.totalorder %s86, 0
      %p363 = por %p361, %p362
      %p364 = scmp.ne.s32.totalorder %s356, %s358
      %p365 = scmp.eq.s32.totalorder %s91, 1
      %p366 = por %p364, %p365
      %p367 = scmp.ne.s32.totalorder %s358, %s359
      %p368 = scmp.eq.s32.totalorder %s91, 0
      %p369 = por %p367, %p368
      %p370 = scmp.ne.s32.totalorder %s358, %s359
      %p371 = scmp.eq.s32.totalorder %s92, 1
      %p372 = por %p370, %p371
      %p374 = scmp.ne.s32.totalorder %s359, %s373
      %p375 = scmp.eq.s32.totalorder %s92, 0
      %p376 = por %p374, %p375
      %s378 = sadd.s32 %s377, 1
      %p381 = scmp.eq.s32.totalorder %s86, 1
      %p382 = scmp.ne.s32.totalorder %s377, %s379
      %p383 = scmp.eq.s32.totalorder %s86, 0
      %p384 = por %p382, %p383
      %p385 = scmp.ne.s32.totalorder %s377, %s379
      %p386 = scmp.eq.s32.totalorder %s91, 1
      %p387 = por %p385, %p386
      %p388 = scmp.ne.s32.totalorder %s379, %s380
      %p389 = scmp.eq.s32.totalorder %s91, 0
      %p390 = por %p388, %p389
      %p391 = scmp.ne.s32.totalorder %s379, %s380
      %p392 = scmp.eq.s32.totalorder %s92, 1
      %p393 = por %p391, %p392
      %p395 = scmp.ne.s32.totalorder %s380, %s394
      %p396 = scmp.eq.s32.totalorder %s92, 0
      %p397 = por %p395, %p396
      %s399 = sadd.s32 %s398, 1
      %p402 = scmp.eq.s32.totalorder %s86, 1
      %p403 = scmp.ne.s32.totalorder %s398, %s400
      %p404 = scmp.eq.s32.totalorder %s86, 0
      %p405 = por %p403, %p404
      %p406 = scmp.ne.s32.totalorder %s398, %s400
      %p407 = scmp.eq.s32.totalorder %s91, 1
      %p408 = por %p406, %p407
      %p409 = scmp.ne.s32.totalorder %s400, %s401
      %p410 = scmp.eq.s32.totalorder %s91, 0
      %p411 = por %p409, %p410
      %p412 = scmp.ne.s32.totalorder %s400, %s401
      %p413 = scmp.eq.s32.totalorder %s92, 1
      %p414 = por %p412, %p413
      %p416 = scmp.ne.s32.totalorder %s401, %s415
      %p417 = scmp.eq.s32.totalorder %s92, 0
      %p418 = por %p416, %p417
      %s420 = sadd.s32 %s419, 1
      %p423 = scmp.eq.s32.totalorder %s86, 1
      %p424 = scmp.ne.s32.totalorder %s419, %s421
      %p425 = scmp.eq.s32.totalorder %s86, 0
      %p426 = por %p424, %p425
      %p427 = scmp.ne.s32.totalorder %s419, %s421
      %p428 = scmp.eq.s32.totalorder %s91, 1
      %p429 = por %p427, %p428
      %p430 = scmp.ne.s32.totalorder %s421, %s422
      %p431 = scmp.eq.s32.totalorder %s91, 0
      %p432 = por %p430, %p431
      %p433 = scmp.ne.s32.totalorder %s421, %s422
      %p434 = scmp.eq.s32.totalorder %s92, 1
      %p435 = por %p433, %p434
      %p437 = scmp.ne.s32.totalorder %s422, %s436
      %p438 = scmp.eq.s32.totalorder %s92, 0
      %p439 = por %p437, %p438
      %s441 = sadd.s32 %s440, 1
      %p444 = scmp.eq.s32.totalorder %s86, 1
      %p445 = scmp.ne.s32.totalorder %s440, %s442
      %p446 = scmp.eq.s32.totalorder %s86, 0
      %p447 = por %p445, %p446
      %p448 = scmp.ne.s32.totalorder %s440, %s442
      %p449 = scmp.eq.s32.totalorder %s91, 1
      %p450 = por %p448, %p449
      %p451 = scmp.ne.s32.totalorder %s442, %s443
      %p452 = scmp.eq.s32.totalorder %s91, 0
      %p453 = por %p451, %p452
      %p454 = scmp.ne.s32.totalorder %s442, %s443
      %p455 = scmp.eq.s32.totalorder %s92, 1
      %p456 = por %p454, %p455
      %p458 = scmp.ne.s32.totalorder %s443, %s457
      %p459 = scmp.eq.s32.totalorder %s92, 0
      %p460 = por %p458, %p459
      %s461 = ssub.s32 %s86, %s93
      %p462 = scmp.eq.s32.totalorder %s461, 0
      %s464 = sadd.s32 %s463, 1
      %s465 = scalar_select %p462, %s463, %s464
      %p468 = pneg %p462
      %p469 = scmp.eq.s32.totalorder %s86, 1
      %p470 = por %p468, %p469
      %p471 = scmp.ne.s32.totalorder %s463, %s466
      %p472 = scmp.eq.s32.totalorder %s86, 0
      %p473 = por %p471, %p472
      %p474 = scmp.ne.s32.totalorder %s463, %s466
      %p475 = scmp.eq.s32.totalorder %s91, 1
      %p476 = por %p474, %p475
      %p477 = scmp.ne.s32.totalorder %s466, %s467
      %p478 = scmp.eq.s32.totalorder %s91, 0
      %p479 = por %p477, %p478
      %p480 = scmp.ne.s32.totalorder %s466, %s467
      %p481 = scmp.eq.s32.totalorder %s92, 1
      %p482 = por %p480, %p481
      %p484 = scmp.ne.s32.totalorder %s467, %s483
      %p485 = scmp.eq.s32.totalorder %s92, 0
      %p486 = por %p484, %p485
      %s487 = ssub.s32 %s86, %s93
      %p488 = scmp.eq.s32.totalorder %s487, 0
      %s490 = sadd.s32 %s489, 1
      %s491 = scalar_select %p488, %s489, %s490
      %p494 = pneg %p488
      %p495 = scmp.eq.s32.totalorder %s86, 1
      %p496 = por %p494, %p495
      %p497 = scmp.ne.s32.totalorder %s489, %s492
      %p498 = scmp.eq.s32.totalorder %s86, 0
      %p499 = por %p497, %p498
      %p500 = scmp.ne.s32.totalorder %s489, %s492
      %p501 = scmp.eq.s32.totalorder %s91, 1
      %p502 = por %p500, %p501
      %p503 = scmp.ne.s32.totalorder %s492, %s493
      %p504 = scmp.eq.s32.totalorder %s91, 0
      %p505 = por %p503, %p504
      %p506 = scmp.ne.s32.totalorder %s492, %s493
      %p507 = scmp.eq.s32.totalorder %s92, 1
      %p508 = por %p506, %p507
      %p510 = scmp.ne.s32.totalorder %s493, %s509
      %p511 = scmp.eq.s32.totalorder %s92, 0
      %p512 = por %p510, %p511
      %s514 = sadd.s32 %s513, 1
      %p517 = scmp.eq.s32.totalorder %s86, 1
      %p518 = scmp.ne.s32.totalorder %s513, %s515
      %p519 = scmp.eq.s32.totalorder %s86, 0
      %p520 = por %p518, %p519
      %p521 = scmp.ne.s32.totalorder %s513, %s515
      %p522 = scmp.eq.s32.totalorder %s91, 1
      %p523 = por %p521, %p522
      %p524 = scmp.ne.s32.totalorder %s515, %s516
      %p525 = scmp.eq.s32.totalorder %s91, 0
      %p526 = por %p524, %p525
      %p527 = scmp.ne.s32.totalorder %s515, %s516
      %p528 = scmp.eq.s32.totalorder %s92, 1
      %p529 = por %p527, %p528
      %p531 = scmp.ne.s32.totalorder %s516, %s530
      %p532 = scmp.eq.s32.totalorder %s92, 0
      %p533 = por %p531, %p532
      %s535 = sadd.s32 %s534, 1
      %p538 = scmp.eq.s32.totalorder %s86, 1
      %p539 = scmp.ne.s32.totalorder %s534, %s536
      %p540 = scmp.eq.s32.totalorder %s86, 0
      %p541 = por %p539, %p540
      %p542 = scmp.ne.s32.totalorder %s534, %s536
      %p543 = scmp.eq.s32.totalorder %s91, 1
      %p544 = por %p542, %p543
      %p545 = scmp.ne.s32.totalorder %s536, %s537
      %p546 = scmp.eq.s32.totalorder %s91, 0
      %p547 = por %p545, %p546
      %p548 = scmp.ne.s32.totalorder %s536, %s537
      %p549 = scmp.eq.s32.totalorder %s92, 1
      %p550 = por %p548, %p549
      %p552 = scmp.ne.s32.totalorder %s537, %s551
      %p553 = scmp.eq.s32.totalorder %s92, 0
      %p554 = por %p552, %p553
      %s556 = sadd.s32 %s555, 1
      %p559 = scmp.eq.s32.totalorder %s86, 1
      %p560 = scmp.ne.s32.totalorder %s555, %s557
      %p561 = scmp.eq.s32.totalorder %s86, 0
      %p562 = por %p560, %p561
      %p563 = scmp.ne.s32.totalorder %s555, %s557
      %p564 = scmp.eq.s32.totalorder %s91, 1
      %p565 = por %p563, %p564
      %p566 = scmp.ne.s32.totalorder %s557, %s558
      %p567 = scmp.eq.s32.totalorder %s91, 0
      %p568 = por %p566, %p567
      %p569 = scmp.ne.s32.totalorder %s557, %s558
      %p570 = scmp.eq.s32.totalorder %s92, 1
      %p571 = por %p569, %p570
      %p573 = scmp.ne.s32.totalorder %s558, %s572
      %p574 = scmp.eq.s32.totalorder %s92, 0
      %p575 = por %p573, %p574
      %s577 = sadd.s32 %s576, 1
      %p580 = scmp.eq.s32.totalorder %s86, 1
      %p581 = scmp.ne.s32.totalorder %s576, %s578
      %p582 = scmp.eq.s32.totalorder %s86, 0
      %p583 = por %p581, %p582
      %p584 = scmp.ne.s32.totalorder %s576, %s578
      %p585 = scmp.eq.s32.totalorder %s91, 1
      %p586 = por %p584, %p585
      %p587 = scmp.ne.s32.totalorder %s578, %s579
      %p588 = scmp.eq.s32.totalorder %s91, 0
      %p589 = por %p587, %p588
      %p590 = scmp.ne.s32.totalorder %s578, %s579
      %p591 = scmp.eq.s32.totalorder %s92, 1
      %p592 = por %p590, %p591
      %p594 = scmp.ne.s32.totalorder %s579, %s593
      %p595 = scmp.eq.s32.totalorder %s92, 0
      %p596 = por %p594, %p595
      %s598 = sadd.s32 %s597, 1
      %p601 = scmp.eq.s32.totalorder %s86, 1
      %p602 = scmp.ne.s32.totalorder %s597, %s599
      %p603 = scmp.eq.s32.totalorder %s86, 0
      %p604 = por %p602, %p603
      %p605 = scmp.ne.s32.totalorder %s597, %s599
      %p606 = scmp.eq.s32.totalorder %s91, 1
      %p607 = por %p605, %p606
      %p608 = scmp.ne.s32.totalorder %s599, %s600
      %p609 = scmp.eq.s32.totalorder %s91, 0
      %p610 = por %p608, %p609
      %p611 = scmp.ne.s32.totalorder %s599, %s600
      %p612 = scmp.eq.s32.totalorder %s92, 1
      %p613 = por %p611, %p612
      %p615 = scmp.ne.s32.totalorder %s600, %s614
      %p616 = scmp.eq.s32.totalorder %s92, 0
      %p617 = por %p615, %p616
      %s619 = sadd.s32 %s618, 1
      %p622 = scmp.eq.s32.totalorder %s86, 1
      %p623 = scmp.ne.s32.totalorder %s618, %s620
      %p624 = scmp.eq.s32.totalorder %s86, 0
      %p625 = por %p623, %p624
      %p626 = scmp.ne.s32.totalorder %s618, %s620
      %p627 = scmp.eq.s32.totalorder %s91, 1
      %p628 = por %p626, %p627
      %p629 = scmp.ne.s32.totalorder %s620, %s621
      %p630 = scmp.eq.s32.totalorder %s91, 0
      %p631 = por %p629, %p630
      %p632 = scmp.ne.s32.totalorder %s620, %s621
      %p633 = scmp.eq.s32.totalorder %s92, 1
      %p634 = por %p632, %p633
      %p636 = scmp.ne.s32.totalorder %s621, %s635
      %p637 = scmp.eq.s32.totalorder %s92, 0
      %p638 = por %p636, %p637
      %s640 = sadd.s32 %s639, 1
      %p643 = scmp.eq.s32.totalorder %s86, 1
      %p644 = scmp.ne.s32.totalorder %s639, %s641
      %p645 = scmp.eq.s32.totalorder %s86, 0
      %p646 = por %p644, %p645
      %p647 = scmp.ne.s32.totalorder %s639, %s641
      %p648 = scmp.eq.s32.totalorder %s91, 1
      %p649 = por %p647, %p648
      %p650 = scmp.ne.s32.totalorder %s641, %s642
      %p651 = scmp.eq.s32.totalorder %s91, 0
      %p652 = por %p650, %p651
      %p653 = scmp.ne.s32.totalorder %s641, %s642
      %p654 = scmp.eq.s32.totalorder %s92, 1
      %p655 = por %p653, %p654
      %p657 = scmp.ne.s32.totalorder %s642, %s656
      %p658 = scmp.eq.s32.totalorder %s92, 0
      %p659 = por %p657, %p658
      %s661 = sadd.s32 %s660, 1
      %p664 = scmp.eq.s32.totalorder %s86, 1
      %p665 = scmp.ne.s32.totalorder %s660, %s662
      %p666 = scmp.eq.s32.totalorder %s86, 0
      %p667 = por %p665, %p666
      %p668 = scmp.ne.s32.totalorder %s660, %s662
      %p669 = scmp.eq.s32.totalorder %s91, 1
      %p670 = por %p668, %p669
      %p671 = scmp.ne.s32.totalorder %s662, %s663
      %p672 = scmp.eq.s32.totalorder %s91, 0
      %p673 = por %p671, %p672
      %p674 = scmp.ne.s32.totalorder %s662, %s663
      %p675 = scmp.eq.s32.totalorder %s92, 1
      %p676 = por %p674, %p675
      %p678 = scmp.ne.s32.totalorder %s663, %s677
      %p679 = scmp.eq.s32.totalorder %s92, 0
      %p680 = por %p678, %p679
      %s682 = sadd.s32 %s681, 1
      %p685 = scmp.eq.s32.totalorder %s86, 1
      %p686 = scmp.ne.s32.totalorder %s681, %s683
      %p687 = scmp.eq.s32.totalorder %s86, 0
      %p688 = por %p686, %p687
      %p689 = scmp.ne.s32.totalorder %s681, %s683
      %p690 = scmp.eq.s32.totalorder %s91, 1
      %p691 = por %p689, %p690
      %p692 = scmp.ne.s32.totalorder %s683, %s684
      %p693 = scmp.eq.s32.totalorder %s91, 0
      %p694 = por %p692, %p693
      %p695 = scmp.ne.s32.totalorder %s683, %s684
      %p696 = scmp.eq.s32.totalorder %s92, 1
      %p697 = por %p695, %p696
      %p699 = scmp.ne.s32.totalorder %s684, %s698
      %p700 = scmp.eq.s32.totalorder %s92, 0
      %p701 = por %p699, %p700
      %s703 = sadd.s32 %s702, 1
      %p706 = scmp.eq.s32.totalorder %s86, 1
      %p707 = scmp.ne.s32.totalorder %s702, %s704
      %p708 = scmp.eq.s32.totalorder %s86, 0
      %p709 = por %p707, %p708
      %p710 = scmp.ne.s32.totalorder %s702, %s704
      %p711 = scmp.eq.s32.totalorder %s91, 1
      %p712 = por %p710, %p711
      %p713 = scmp.ne.s32.totalorder %s704, %s705
      %p714 = scmp.eq.s32.totalorder %s91, 0
      %p715 = por %p713, %p714
      %p716 = scmp.ne.s32.totalorder %s704, %s705
      %p717 = scmp.eq.s32.totalorder %s92, 1
      %p718 = por %p716, %p717
      %p720 = scmp.ne.s32.totalorder %s705, %s719
      %p721 = scmp.eq.s32.totalorder %s92, 0
      %p722 = por %p720, %p721
      %s724 = sadd.s32 %s723, 1
      %p727 = scmp.eq.s32.totalorder %s86, 1
      %p728 = scmp.ne.s32.totalorder %s723, %s725
      %p729 = scmp.eq.s32.totalorder %s86, 0
      %p730 = por %p728, %p729
      %p731 = scmp.ne.s32.totalorder %s723, %s725
      %p732 = scmp.eq.s32.totalorder %s91, 1
      %p733 = por %p731, %p732
      %p734 = scmp.ne.s32.totalorder %s725, %s726
      %p735 = scmp.eq.s32.totalorder %s91, 0
      %p736 = por %p734, %p735
      %p737 = scmp.ne.s32.totalorder %s725, %s726
      %p738 = scmp.eq.s32.totalorder %s92, 1
      %p739 = por %p737, %p738
      %p741 = scmp.ne.s32.totalorder %s726, %s740
      %p742 = scmp.eq.s32.totalorder %s92, 0
      %p743 = por %p741, %p742
      %s745 = sadd.s32 %s744, 1
      %p748 = scmp.eq.s32.totalorder %s86, 1
      %p749 = scmp.ne.s32.totalorder %s744, %s746
      %p750 = scmp.eq.s32.totalorder %s86, 0
      %p751 = por %p749, %p750
      %p752 = scmp.ne.s32.totalorder %s744, %s746
      %p753 = scmp.eq.s32.totalorder %s91, 1
      %p754 = por %p752, %p753
      %p755 = scmp.ne.s32.totalorder %s746, %s747
      %p756 = scmp.eq.s32.totalorder %s91, 0
      %p757 = por %p755, %p756
      %p758 = scmp.ne.s32.totalorder %s746, %s747
      %p759 = scmp.eq.s32.totalorder %s92, 1
      %p760 = por %p758, %p759
      %p762 = scmp.ne.s32.totalorder %s747, %s761
      %p763 = scmp.eq.s32.totalorder %s92, 0
      %p764 = por %p762, %p763
      %s766 = sadd.s32 %s765, 1
      %p769 = scmp.eq.s32.totalorder %s86, 1
      %p770 = scmp.ne.s32.totalorder %s765, %s767
      %p771 = scmp.eq.s32.totalorder %s86, 0
      %p772 = por %p770, %p771
      %p773 = scmp.ne.s32.totalorder %s765, %s767
      %p774 = scmp.eq.s32.totalorder %s91, 1
      %p775 = por %p773, %p774
      %p776 = scmp.ne.s32.totalorder %s767, %s768
      %p777 = scmp.eq.s32.totalorder %s91, 0
      %p778 = por %p776, %p777
      %p779 = scmp.ne.s32.totalorder %s767, %s768
      %p780 = scmp.eq.s32.totalorder %s92, 1
      %p781 = por %p779, %p780
      %p783 = scmp.ne.s32.totalorder %s768, %s782
      %p784 = scmp.eq.s32.totalorder %s92, 0
      %p785 = por %p783, %p784
      %s787 = sadd.s32 %s786, 1
      %p790 = scmp.eq.s32.totalorder %s86, 1
      %p791 = scmp.ne.s32.totalorder %s786, %s788
      %p792 = scmp.eq.s32.totalorder %s86, 0
      %p793 = por %p791, %p792
      %p794 = scmp.ne.s32.totalorder %s786, %s788
      %p795 = scmp.eq.s32.totalorder %s91, 1
      %p796 = por %p794, %p795
      %p797 = scmp.ne.s32.totalorder %s788, %s789
      %p798 = scmp.eq.s32.totalorder %s91, 0
      %p799 = por %p797, %p798
      %p800 = scmp.ne.s32.totalorder %s788, %s789
      %p801 = scmp.eq.s32.totalorder %s92, 1
      %p802 = por %p800, %p801
      %p804 = scmp.ne.s32.totalorder %s789, %s803
      %p805 = scmp.eq.s32.totalorder %s92, 0
      %p806 = por %p804, %p805
      %s808 = sadd.s32 %s807, 1
      %p811 = scmp.eq.s32.totalorder %s86, 1
      %p812 = scmp.ne.s32.totalorder %s807, %s809
      %p813 = scmp.eq.s32.totalorder %s86, 0
      %p814 = por %p812, %p813
      %p815 = scmp.ne.s32.totalorder %s807, %s809
      %p816 = scmp.eq.s32.totalorder %s91, 1
      %p817 = por %p815, %p816
      %p818 = scmp.ne.s32.totalorder %s809, %s810
      %p819 = scmp.eq.s32.totalorder %s91, 0
      %p820 = por %p818, %p819
      %p821 = scmp.ne.s32.totalorder %s809, %s810
      %p822 = scmp.eq.s32.totalorder %s92, 1
      %p823 = por %p821, %p822
      %p825 = scmp.ne.s32.totalorder %s810, %s824
      %p826 = scmp.eq.s32.totalorder %s92, 0
      %p827 = por %p825, %p826
      %s829 = sadd.s32 %s828, 1
      %p832 = scmp.eq.s32.totalorder %s86, 1
      %p833 = scmp.ne.s32.totalorder %s828, %s830
      %p834 = scmp.eq.s32.totalorder %s86, 0
      %p835 = por %p833, %p834
      %p836 = scmp.ne.s32.totalorder %s828, %s830
      %p837 = scmp.eq.s32.totalorder %s91, 1
      %p838 = por %p836, %p837
      %p839 = scmp.ne.s32.totalorder %s830, %s831
      %p840 = scmp.eq.s32.totalorder %s91, 0
      %p841 = por %p839, %p840
      %p842 = scmp.ne.s32.totalorder %s830, %s831
      %p843 = scmp.eq.s32.totalorder %s92, 1
      %p844 = por %p842, %p843
      %p846 = scmp.ne.s32.totalorder %s831, %s845
      %p847 = scmp.eq.s32.totalorder %s92, 0
      %p848 = por %p846, %p847
      %s850 = sadd.s32 %s849, 1
      %p853 = scmp.eq.s32.totalorder %s86, 1
      %p854 = scmp.ne.s32.totalorder %s849, %s851
      %p855 = scmp.eq.s32.totalorder %s86, 0
      %p856 = por %p854, %p855
      %p857 = scmp.ne.s32.totalorder %s849, %s851
      %p858 = scmp.eq.s32.totalorder %s91, 1
      %p859 = por %p857, %p858
      %p860 = scmp.ne.s32.totalorder %s851, %s852
      %p861 = scmp.eq.s32.totalorder %s91, 0
      %p862 = por %p860, %p861
      %p863 = scmp.ne.s32.totalorder %s851, %s852
      %p864 = scmp.eq.s32.totalorder %s92, 1
      %p865 = por %p863, %p864
      %p867 = scmp.ne.s32.totalorder %s852, %s866
      %p868 = scmp.eq.s32.totalorder %s92, 0
      %p869 = por %p867, %p868
      %s871 = sadd.s32 %s870, 1
      %p874 = scmp.eq.s32.totalorder %s86, 1
      %p875 = scmp.ne.s32.totalorder %s870, %s872
      %p876 = scmp.eq.s32.totalorder %s86, 0
      %p877 = por %p875, %p876
      %p878 = scmp.ne.s32.totalorder %s870, %s872
      %p879 = scmp.eq.s32.totalorder %s91, 1
      %p880 = por %p878, %p879
      %p881 = scmp.ne.s32.totalorder %s872, %s873
      %p882 = scmp.eq.s32.totalorder %s91, 0
      %p883 = por %p881, %p882
      %p884 = scmp.ne.s32.totalorder %s872, %s873
      %p885 = scmp.eq.s32.totalorder %s92, 1
      %p886 = por %p884, %p885
      %p888 = scmp.ne.s32.totalorder %s873, %s887
      %p889 = scmp.eq.s32.totalorder %s92, 0
      %p890 = por %p888, %p889
      %s892 = sadd.s32 %s891, 1
      %p895 = scmp.eq.s32.totalorder %s86, 1
      %p896 = scmp.ne.s32.totalorder %s891, %s893
      %p897 = scmp.eq.s32.totalorder %s86, 0
      %p898 = por %p896, %p897
      %p899 = scmp.ne.s32.totalorder %s891, %s893
      %p900 = scmp.eq.s32.totalorder %s91, 1
      %p901 = por %p899, %p900
      %p902 = scmp.ne.s32.totalorder %s893, %s894
      %p903 = scmp.eq.s32.totalorder %s91, 0
      %p904 = por %p902, %p903
      %p905 = scmp.ne.s32.totalorder %s893, %s894
      %p906 = scmp.eq.s32.totalorder %s92, 1
      %p907 = por %p905, %p906
      %p909 = scmp.ne.s32.totalorder %s894, %s908
      %p910 = scmp.eq.s32.totalorder %s92, 0
      %p911 = por %p909, %p910
      %s913 = sadd.s32 %s912, 1
      %p916 = scmp.eq.s32.totalorder %s86, 1
      %p917 = scmp.ne.s32.totalorder %s912, %s914
      %p918 = scmp.eq.s32.totalorder %s86, 0
      %p919 = por %p917, %p918
      %p920 = scmp.ne.s32.totalorder %s912, %s914
      %p921 = scmp.eq.s32.totalorder %s91, 1
      %p922 = por %p920, %p921
      %p923 = scmp.ne.s32.totalorder %s914, %s915
      %p924 = scmp.eq.s32.totalorder %s91, 0
      %p925 = por %p923, %p924
      %p926 = scmp.ne.s32.totalorder %s914, %s915
      %p927 = scmp.eq.s32.totalorder %s92, 1
      %p928 = por %p926, %p927
      %p930 = scmp.ne.s32.totalorder %s915, %s929
      %p931 = scmp.eq.s32.totalorder %s92, 0
      %p932 = por %p930, %p931
      %s933 = ssub.s32 %s86, %s93
      %p934 = scmp.eq.s32.totalorder %s933, 0
      %s936 = sadd.s32 %s935, 1
      %s937 = scalar_select %p934, %s935, %s936
      %p940 = pneg %p934
      %p941 = scmp.eq.s32.totalorder %s86, 1
      %p942 = por %p940, %p941
      %p943 = scmp.ne.s32.totalorder %s935, %s938
      %p944 = scmp.eq.s32.totalorder %s86, 0
      %p945 = por %p943, %p944
      %p946 = scmp.ne.s32.totalorder %s935, %s938
      %p947 = scmp.eq.s32.totalorder %s91, 1
      %p948 = por %p946, %p947
      %p949 = scmp.ne.s32.totalorder %s938, %s939
      %p950 = scmp.eq.s32.totalorder %s91, 0
      %p951 = por %p949, %p950
      %p952 = scmp.ne.s32.totalorder %s938, %s939
      %p953 = scmp.eq.s32.totalorder %s92, 1
      %p954 = por %p952, %p953
      %p956 = scmp.ne.s32.totalorder %s939, %s955
      %p957 = scmp.eq.s32.totalorder %s92, 0
      %p958 = por %p956, %p957
      %p959 = scmp.le.s32.totalorder 1, %s86
      %p960 = scmp.lt.s32.totalorder %s86, 3
      %p961 = pnand %p959, %p960
      %p962 = pneg %p961
      // Predicated region
      $region9: #{decoder_forward.1} parent=5 // pred_check
        _
      $region10: #{decoder_forward.1} parent=5 // pred_check_branch
        %964 = sbr.rel (%p961) target = $region12
      $region11: #{decoder_forward.1} parent=5 // pred_region
        %s965 = ssub.s32 %s86, 1
        // Predicated region
        $region13: #{decoder_forward.1} parent=11 // pred_check
          %p966 = pneg %p107
        $region14: #{decoder_forward.1} parent=11 // pred_check_branch
          %968 = sbr.rel (%p966) target = $region16
        $region15: #{decoder_forward.1} parent=11 // pred_region
          _
        $region16: #{decoder_forward.1} parent=11 // pred_fallthru
          _
        // Predicated region
        $region17: #{decoder_forward.1} parent=11 // pred_check
          %p969 = pneg %p180
        $region18: #{decoder_forward.1} parent=11 // pred_check_branch
          %971 = sbr.rel (%p969) target = $region20
        $region19: #{decoder_forward.1} parent=11 // pred_region
          _
        $region20: #{decoder_forward.1} parent=11 // pred_fallthru
          _
        // Predicated region
        $region21: #{decoder_forward.1} parent=11 // pred_check
          %p972 = pneg %p201
        $region22: #{decoder_forward.1} parent=11 // pred_check_branch
          %974 = sbr.rel (%p972) target = $region24
        $region23: #{decoder_forward.1} parent=11 // pred_region
          _
        $region24: #{decoder_forward.1} parent=11 // pred_fallthru
          _
        // Predicated region
        $region25: #{decoder_forward.1} parent=11 // pred_check
          %p975 = pneg %p222
        $region26: #{decoder_forward.1} parent=11 // pred_check_branch
          %977 = sbr.rel (%p975) target = $region28
        $region27: #{decoder_forward.1} parent=11 // pred_region
          _
        $region28: #{decoder_forward.1} parent=11 // pred_fallthru
          _
        // Predicated region
        $region29: #{decoder_forward.1} parent=11 // pred_check
          %p978 = pneg %p243
        $region30: #{decoder_forward.1} parent=11 // pred_check_branch
          %980 = sbr.rel (%p978) target = $region32
        $region31: #{decoder_forward.1} parent=11 // pred_region
          _
        $region32: #{decoder_forward.1} parent=11 // pred_fallthru
          _
        // Predicated region
        $region33: #{decoder_forward.1} parent=11 // pred_check
          %p981 = pneg %p264
        $region34: #{decoder_forward.1} parent=11 // pred_check_branch
          %983 = sbr.rel (%p981) target = $region36
        $region35: #{decoder_forward.1} parent=11 // pred_region
          _
        $region36: #{decoder_forward.1} parent=11 // pred_fallthru
          _
        // Predicated region
        $region37: #{decoder_forward.1} parent=11 // pred_check
          %p984 = pneg %p285
        $region38: #{decoder_forward.1} parent=11 // pred_check_branch
          %986 = sbr.rel (%p984) target = $region40
        $region39: #{decoder_forward.1} parent=11 // pred_region
          _
        $region40: #{decoder_forward.1} parent=11 // pred_fallthru
          _
        // Predicated region
        $region41: #{decoder_forward.1} parent=11 // pred_check
          %p987 = pneg %p306
        $region42: #{decoder_forward.1} parent=11 // pred_check_branch
          %989 = sbr.rel (%p987) target = $region44
        $region43: #{decoder_forward.1} parent=11 // pred_region
          _
        $region44: #{decoder_forward.1} parent=11 // pred_fallthru
          _
        // Predicated region
        $region45: #{decoder_forward.1} parent=11 // pred_check
          %p990 = pneg %p327
        $region46: #{decoder_forward.1} parent=11 // pred_check_branch
          %992 = sbr.rel (%p990) target = $region48
        $region47: #{decoder_forward.1} parent=11 // pred_region
          _
        $region48: #{decoder_forward.1} parent=11 // pred_fallthru
          _
        // Predicated region
        $region49: #{decoder_forward.1} parent=11 // pred_check
          %p993 = pneg %p348
        $region50: #{decoder_forward.1} parent=11 // pred_check_branch
          %995 = sbr.rel (%p993) target = $region52
        $region51: #{decoder_forward.1} parent=11 // pred_region
          _
        $region52: #{decoder_forward.1} parent=11 // pred_fallthru
          _
        // Predicated region
        $region53: #{decoder_forward.1} parent=11 // pred_check
          %p996 = pneg %p369
        $region54: #{decoder_forward.1} parent=11 // pred_check_branch
          %998 = sbr.rel (%p996) target = $region56
        $region55: #{decoder_forward.1} parent=11 // pred_region
          _
        $region56: #{decoder_forward.1} parent=11 // pred_fallthru
          _
        // Predicated region
        $region57: #{decoder_forward.1} parent=11 // pred_check
          %p999 = pneg %p390
        $region58: #{decoder_forward.1} parent=11 // pred_check_branch
          %1001 = sbr.rel (%p999) target = $region60
        $region59: #{decoder_forward.1} parent=11 // pred_region
          _
        $region60: #{decoder_forward.1} parent=11 // pred_fallthru
          _
        // Predicated region
        $region61: #{decoder_forward.1} parent=11 // pred_check
          %p1002 = pneg %p411
        $region62: #{decoder_forward.1} parent=11 // pred_check_branch
          %1004 = sbr.rel (%p1002) target = $region64
        $region63: #{decoder_forward.1} parent=11 // pred_region
          _
        $region64: #{decoder_forward.1} parent=11 // pred_fallthru
          _
        // Predicated region
        $region65: #{decoder_forward.1} parent=11 // pred_check
          %p1005 = pneg %p432
        $region66: #{decoder_forward.1} parent=11 // pred_check_branch
          %1007 = sbr.rel (%p1005) target = $region68
        $region67: #{decoder_forward.1} parent=11 // pred_region
          _
        $region68: #{decoder_forward.1} parent=11 // pred_fallthru
          _
        // Predicated region
        $region69: #{decoder_forward.1} parent=11 // pred_check
          %p1008 = pneg %p453
        $region70: #{decoder_forward.1} parent=11 // pred_check_branch
          %1010 = sbr.rel (%p1008) target = $region72
        $region71: #{decoder_forward.1} parent=11 // pred_region
          _
        $region72: #{decoder_forward.1} parent=11 // pred_fallthru
          _
        // Predicated region
        $region73: #{decoder_forward.1} parent=11 // pred_check
          %p1011 = pneg %p526
        $region74: #{decoder_forward.1} parent=11 // pred_check_branch
          %1013 = sbr.rel (%p1011) target = $region76
        $region75: #{decoder_forward.1} parent=11 // pred_region
          _
        $region76: #{decoder_forward.1} parent=11 // pred_fallthru
          _
        // Predicated region
        $region77: #{decoder_forward.1} parent=11 // pred_check
          %p1014 = pneg %p547
        $region78: #{decoder_forward.1} parent=11 // pred_check_branch
          %1016 = sbr.rel (%p1014) target = $region80
        $region79: #{decoder_forward.1} parent=11 // pred_region
          _
        $region80: #{decoder_forward.1} parent=11 // pred_fallthru
          _
        // Predicated region
        $region81: #{decoder_forward.1} parent=11 // pred_check
          %p1017 = pneg %p568
        $region82: #{decoder_forward.1} parent=11 // pred_check_branch
          %1019 = sbr.rel (%p1017) target = $region84
        $region83: #{decoder_forward.1} parent=11 // pred_region
          _
        $region84: #{decoder_forward.1} parent=11 // pred_fallthru
          _
        // Predicated region
        $region85: #{decoder_forward.1} parent=11 // pred_check
          %p1020 = pneg %p589
        $region86: #{decoder_forward.1} parent=11 // pred_check_branch
          %1022 = sbr.rel (%p1020) target = $region88
        $region87: #{decoder_forward.1} parent=11 // pred_region
          _
        $region88: #{decoder_forward.1} parent=11 // pred_fallthru
          _
        // Predicated region
        $region89: #{decoder_forward.1} parent=11 // pred_check
          %p1023 = pneg %p610
        $region90: #{decoder_forward.1} parent=11 // pred_check_branch
          %1025 = sbr.rel (%p1023) target = $region92
        $region91: #{decoder_forward.1} parent=11 // pred_region
          _
        $region92: #{decoder_forward.1} parent=11 // pred_fallthru
          _
        // Predicated region
        $region93: #{decoder_forward.1} parent=11 // pred_check
          %p1026 = pneg %p631
        $region94: #{decoder_forward.1} parent=11 // pred_check_branch
          %1028 = sbr.rel (%p1026) target = $region96
        $region95: #{decoder_forward.1} parent=11 // pred_region
          _
        $region96: #{decoder_forward.1} parent=11 // pred_fallthru
          _
        // Predicated region
        $region97: #{decoder_forward.1} parent=11 // pred_check
          %p1029 = pneg %p652
        $region98: #{decoder_forward.1} parent=11 // pred_check_branch
          %1031 = sbr.rel (%p1029) target = $region100
        $region99: #{decoder_forward.1} parent=11 // pred_region
          _
        $region100: #{decoder_forward.1} parent=11 // pred_fallthru
          _
        // Predicated region
        $region101: #{decoder_forward.1} parent=11 // pred_check
          %p1032 = pneg %p673
        $region102: #{decoder_forward.1} parent=11 // pred_check_branch
          %1034 = sbr.rel (%p1032) target = $region104
        $region103: #{decoder_forward.1} parent=11 // pred_region
          _
        $region104: #{decoder_forward.1} parent=11 // pred_fallthru
          _
        // Predicated region
        $region105: #{decoder_forward.1} parent=11 // pred_check
          %p1035 = pneg %p694
        $region106: #{decoder_forward.1} parent=11 // pred_check_branch
          %1037 = sbr.rel (%p1035) target = $region108
        $region107: #{decoder_forward.1} parent=11 // pred_region
          _
        $region108: #{decoder_forward.1} parent=11 // pred_fallthru
          _
        // Predicated region
        $region109: #{decoder_forward.1} parent=11 // pred_check
          %p1038 = pneg %p715
        $region110: #{decoder_forward.1} parent=11 // pred_check_branch
          %1040 = sbr.rel (%p1038) target = $region112
        $region111: #{decoder_forward.1} parent=11 // pred_region
          _
        $region112: #{decoder_forward.1} parent=11 // pred_fallthru
          _
        // Predicated region
        $region113: #{decoder_forward.1} parent=11 // pred_check
          %p1041 = pneg %p736
        $region114: #{decoder_forward.1} parent=11 // pred_check_branch
          %1043 = sbr.rel (%p1041) target = $region116
        $region115: #{decoder_forward.1} parent=11 // pred_region
          _
        $region116: #{decoder_forward.1} parent=11 // pred_fallthru
          _
        // Predicated region
        $region117: #{decoder_forward.1} parent=11 // pred_check
          %p1044 = pneg %p757
        $region118: #{decoder_forward.1} parent=11 // pred_check_branch
          %1046 = sbr.rel (%p1044) target = $region120
        $region119: #{decoder_forward.1} parent=11 // pred_region
          _
        $region120: #{decoder_forward.1} parent=11 // pred_fallthru
          _
        // Predicated region
        $region121: #{decoder_forward.1} parent=11 // pred_check
          %p1047 = pneg %p778
        $region122: #{decoder_forward.1} parent=11 // pred_check_branch
          %1049 = sbr.rel (%p1047) target = $region124
        $region123: #{decoder_forward.1} parent=11 // pred_region
          _
        $region124: #{decoder_forward.1} parent=11 // pred_fallthru
          _
        // Predicated region
        $region125: #{decoder_forward.1} parent=11 // pred_check
          %p1050 = pneg %p799
        $region126: #{decoder_forward.1} parent=11 // pred_check_branch
          %1052 = sbr.rel (%p1050) target = $region128
        $region127: #{decoder_forward.1} parent=11 // pred_region
          %s1054 = ssub.s32 32768, 32768
          %1055 = vsyncadd [#allocation3], %s1054
          %s1056 = sshll.u32 [#allocation2], 4
          %s1057 = int_to_ptr.vmem [resolvable:$true] %s1056
          %1062 = dma.hbm_to_vmem [thread:$0]  %s65, 32768, %s1057, [#allocation3], 1024, 1024, 64
        $region128: #{decoder_forward.1} parent=11 // pred_fallthru
          _
        // Predicated region
        $region129: #{decoder_forward.1} parent=11 // pred_check
          %p1063 = pneg %p820
        $region130: #{decoder_forward.1} parent=11 // pred_check_branch
          %1065 = sbr.rel (%p1063) target = $region132
        $region131: #{decoder_forward.1} parent=11 // pred_region
          _
        $region132: #{decoder_forward.1} parent=11 // pred_fallthru
          _
        // Predicated region
        $region133: #{decoder_forward.1} parent=11 // pred_check
          %p1066 = pneg %p841
        $region134: #{decoder_forward.1} parent=11 // pred_check_branch
          %1068 = sbr.rel (%p1066) target = $region136
        $region135: #{decoder_forward.1} parent=11 // pred_region
          _
        $region136: #{decoder_forward.1} parent=11 // pred_fallthru
          _
        // Predicated region
        $region137: #{decoder_forward.1} parent=11 // pred_check
          %p1069 = pneg %p862
        $region138: #{decoder_forward.1} parent=11 // pred_check_branch
          %1071 = sbr.rel (%p1069) target = $region140
        $region139: #{decoder_forward.1} parent=11 // pred_region
          _
        $region140: #{decoder_forward.1} parent=11 // pred_fallthru
          _
        // Predicated region
        $region141: #{decoder_forward.1} parent=11 // pred_check
          %p1072 = pneg %p883
        $region142: #{decoder_forward.1} parent=11 // pred_check_branch
          %1074 = sbr.rel (%p1072) target = $region144
        $region143: #{decoder_forward.1} parent=11 // pred_region
          _
        $region144: #{decoder_forward.1} parent=11 // pred_fallthru
          _
        // Predicated region
        $region145: #{decoder_forward.1} parent=11 // pred_check
          %p1075 = pneg %p904
        $region146: #{decoder_forward.1} parent=11 // pred_check_branch
          %1077 = sbr.rel (%p1075) target = $region148
        $region147: #{decoder_forward.1} parent=11 // pred_region
          _
        $region148: #{decoder_forward.1} parent=11 // pred_fallthru
          _
        // Predicated region
        $region149: #{decoder_forward.1} parent=11 // pred_check
          %p1078 = pneg %p925
        $region150: #{decoder_forward.1} parent=11 // pred_check_branch
          %1080 = sbr.rel (%p1078) target = $region152
        $region151: #{decoder_forward.1} parent=11 // pred_region
          _
        $region152: #{decoder_forward.1} parent=11 // pred_fallthru
          _
      $region12: #{decoder_forward.1} parent=5 // pred_fallthru
        _
      %p1081 = scmp.lt.s32.totalorder %s86, 2
      // Predicated region
      $region153: #{decoder_forward.1} parent=5 // pred_check
        %p1082 = pneg %p1081
      $region154: #{decoder_forward.1} parent=5 // pred_check_branch
        %1084 = sbr.rel (%p1082) target = $region156
      $region155: #{decoder_forward.1} parent=5 // pred_region
        // Predicated region
        $region157: #{decoder_forward.1} parent=155 // pred_check
          %p1085 = pneg %p127
        $region158: #{decoder_forward.1} parent=155 // pred_check_branch
          %1087 = sbr.rel (%p1085) target = $region160
        $region159: #{decoder_forward.1} parent=155 // pred_region
          %p1088 = scmp.lt.s32.totalorder %s86, 1
          %s1089 = scalar_select %p1088, %s86, 1
          %s1090 = smul.addr %s1089, 2
          %s1091 = smul.addr %s1090, 8
          %s1092 = scalar_lea.vmem %s3, %s1091
        $region160: #{decoder_forward.1} parent=155 // pred_fallthru
          _
        // Predicated region
        $region161: #{decoder_forward.1} parent=155 // pred_check
          %p1093 = pneg %p153
        $region162: #{decoder_forward.1} parent=155 // pred_check_branch
          %1095 = sbr.rel (%p1093) target = $region164
        $region163: #{decoder_forward.1} parent=155 // pred_region
          %p1096 = scmp.lt.s32.totalorder %s86, 1
          %s1097 = scalar_select %p1096, %s86, 1
          %s1098 = smul.addr %s1097, 2
          %s1099 = smul.addr %s1098, 8
          %s1100 = scalar_lea.vmem %s5, %s1099
        $region164: #{decoder_forward.1} parent=155 // pred_fallthru
          _
        // Predicated region
        $region165: #{decoder_forward.1} parent=155 // pred_check
          %p1101 = pneg %p473
        $region166: #{decoder_forward.1} parent=155 // pred_check_branch
          %1103 = sbr.rel (%p1101) target = $region168
        $region167: #{decoder_forward.1} parent=155 // pred_region
          %p1104 = scmp.lt.s32.totalorder %s86, 1
          %s1105 = scalar_select %p1104, %s86, 1
          %s1106 = smul.addr %s1105, 8
          %s1107 = scalar_lea.vmem %s35, %s1106
        $region168: #{decoder_forward.1} parent=155 // pred_fallthru
          _
        // Predicated region
        $region169: #{decoder_forward.1} parent=155 // pred_check
          %p1108 = pneg %p499
        $region170: #{decoder_forward.1} parent=155 // pred_check_branch
          %1110 = sbr.rel (%p1108) target = $region172
        $region171: #{decoder_forward.1} parent=155 // pred_region
          %p1111 = scmp.lt.s32.totalorder %s86, 1
          %s1112 = scalar_select %p1111, %s86, 1
          %s1113 = smul.addr %s1112, 8
          %s1114 = scalar_lea.vmem %s37, %s1113
        $region172: #{decoder_forward.1} parent=155 // pred_fallthru
          _
      $region156: #{decoder_forward.1} parent=5 // pred_fallthru
        _
      %p1115 = scmp.le.s32.totalorder 1, %s86
      %p1116 = scmp.lt.s32.totalorder %s86, 3
      %p1117 = pnand %p1115, %p1116
      %p1118 = pneg %p1117
      // Predicated region
      $region173: #{decoder_forward.1} parent=5 // pred_check
        _
      $region174: #{decoder_forward.1} parent=5 // pred_check_branch
        %1120 = sbr.rel (%p1117) target = $region176
      $region175: #{decoder_forward.1} parent=5 // pred_region
        %s1121 = ssub.s32 %s86, 1
        // Predicated region
        $region177: #{decoder_forward.1} parent=175 // pred_check
          %p1122 = pneg %p799
        $region178: #{decoder_forward.1} parent=175 // pred_check_branch
          %1124 = sbr.rel (%p1122) target = $region180
        $region179: #{decoder_forward.1} parent=175 // pred_region
          %1125 = dma.done [#allocation3], 32768
        $region180: #{decoder_forward.1} parent=175 // pred_fallthru
          _
        %p1126 = pneg %p107
        %p1127 = pneg %p104
        %p1128 = scmp.lt.s32.totalorder %s91, 1
        %s1129 = scalar_select %p1128, %s91, 1
        %s1130 = smul.addr %s1129, 2
        %s1131 = smul.addr %s1130, 8
        %s1132 = scalar_lea.vmem %s3, %s1131
        %p1133 = pneg %p133
        %p1134 = pneg %p130
        %p1135 = scmp.lt.s32.totalorder %s91, 1
        %s1136 = scalar_select %p1135, %s91, 1
        %s1137 = smul.addr %s1136, 2
        %s1138 = smul.addr %s1137, 8
        %s1139 = scalar_lea.vmem %s5, %s1138
        %p1140 = pneg %p159
        %p1141 = pneg %p156
        %p1142 = pneg %p180
        %p1143 = pneg %p177
        %p1144 = pneg %p201
        %p1145 = pneg %p198
        %p1146 = pneg %p222
        %p1147 = pneg %p219
        %p1148 = pneg %p243
        %p1149 = pneg %p240
        %p1150 = pneg %p264
        %p1151 = pneg %p261
        %p1152 = pneg %p285
        %p1153 = pneg %p282
        %p1154 = pneg %p306
        %p1155 = pneg %p303
        %p1156 = pneg %p327
        %p1157 = pneg %p324
        %p1158 = pneg %p348
        %p1159 = pneg %p345
        %p1160 = pneg %p369
        %p1161 = pneg %p366
        %p1162 = pneg %p390
        %p1163 = pneg %p387
        %p1164 = pneg %p411
        %p1165 = pneg %p408
        %p1166 = pneg %p432
        %p1167 = pneg %p429
        %p1168 = pneg %p453
        %p1169 = pneg %p450
        %p1170 = scmp.lt.s32.totalorder %s91, 1
        %s1171 = scalar_select %p1170, %s91, 1
        %s1172 = smul.addr %s1171, 8
        %s1173 = scalar_lea.vmem %s35, %s1172
        %p1174 = pneg %p479
        %p1175 = pneg %p476
        %p1176 = scmp.lt.s32.totalorder %s91, 1
        %s1177 = scalar_select %p1176, %s91, 1
        %s1178 = smul.addr %s1177, 8
        %s1179 = scalar_lea.vmem %s37, %s1178
        %p1180 = pneg %p505
        %p1181 = pneg %p502
        %p1182 = pneg %p526
        %p1183 = pneg %p523
        %p1184 = pneg %p547
        %p1185 = pneg %p544
        %p1186 = pneg %p568
        %p1187 = pneg %p565
        %p1188 = pneg %p589
        %p1189 = pneg %p586
        %p1190 = pneg %p610
        %p1191 = pneg %p607
        %p1192 = pneg %p631
        %p1193 = pneg %p628
        %p1194 = pneg %p652
        %p1195 = pneg %p649
        %p1196 = pneg %p673
        %p1197 = pneg %p670
        %p1198 = pneg %p694
        %p1199 = pneg %p691
        %p1200 = pneg %p715
        %p1201 = pneg %p712
        %p1202 = pneg %p736
        %p1203 = pneg %p733
        %p1204 = pneg %p757
        %p1205 = pneg %p754
        %p1206 = pneg %p778
        %p1207 = pneg %p775
        %p1208 = pneg %p799
        %p1209 = pneg %p796
        %p1210 = pneg %p820
        %p1211 = pneg %p817
        %p1212 = pneg %p841
        %p1213 = pneg %p838
        %p1214 = pneg %p862
        %p1215 = pneg %p859
        %p1216 = pneg %p883
        %p1217 = pneg %p880
        %p1218 = pneg %p904
        %p1219 = pneg %p901
        %p1220 = pneg %p925
        %p1221 = pneg %p922
        %p1222 = pneg %p951
        %p1223 = pneg %p948
        %p1224 = scmp.lt.s32.totalorder %s91, 1
        %s1225 = scalar_select %p1224, %s91, 1
        %s1226 = smul.addr %s1225, 8
        %s1227 = smul.addr %s1226, 4
        %s1228 = scalar_lea.vmem %s79, %s1227
        %p1229 = scmp.lt.s32.totalorder %s91, 1
        %s1230 = scalar_select %p1229, %s91, 1
        %s1231 = smul.addr %s1230, 2
        %s1232 = smul.addr %s1231, 8
        %s1233 = scalar_lea.vmem %s3, %s1232
        %p1234 = scmp.lt.s32.totalorder %s91, 1
        %s1235 = scalar_select %p1234, %s91, 1
        %s1236 = smul.addr %s1235, 2
        %s1237 = smul.addr %s1236, 8
        %s1238 = scalar_lea.vmem %s5, %s1237
        %p1239 = scmp.lt.s32.totalorder %s91, 1
        %s1240 = scalar_select %p1239, %s91, 1
        %s1241 = smul.addr %s1240, 8
        %s1242 = scalar_lea.vmem %s35, %s1241
        %p1243 = scmp.lt.s32.totalorder %s91, 1
        %s1244 = scalar_select %p1243, %s91, 1
        %s1245 = smul.addr %s1244, 8
        %s1246 = scalar_lea.vmem %s37, %s1245
        %p1247 = scmp.lt.s32.totalorder %s91, 1
        %s1248 = scalar_select %p1247, %s91, 1
        %s1249 = smul.addr %s1248, 8
        %s1250 = smul.addr %s1249, 4
        %s1251 = scalar_lea.vmem %s79, %s1250
        %v1253 = vld [vmem:[%s1] sm:$0xff]
        %v1254 = vld [vmem:[%s1 + $0x8] sm:$0xff]
        %v1255 = vld [vmem:[%s27] sm:$0xff]
        %v1256 = vld [vmem:[%s27 + $0x8] sm:$0x1]
        %v1257 = vld [vmem:[%s1233] sm:$0xff]
        %v1258 = vld [vmem:[%s1233 + $0x8] sm:$0xff]
        %v1259 = vadd.f32 %v1257, 1.0
        %v1260 = vadd.f32 %v1258, 1.0
        %v1261 = vld [vmem:[%s7] sm:$0xff]
        %v1262 = vld [vmem:[%s7 + $0x8] sm:$0xff]
        %v1263 = vld [vmem:[%s9] sm:$0xff]
        %v1264 = vld [vmem:[%s9 + $0x8] sm:$0xff]
        %vm1265 = vcmask 523264
        %v1266 = vsel %vm1265, %v1253, 0.0
        %v1267 = vsel %vm1265, %v1254, 0.0
        %v1268 = vadd.f32 %v1266, %v1267
        %1269 = vadd.xlane.f32.xlu0 %v1268
        %v1270 = vpop.xlane.xlu0 %1269
        %v1271 = vrot.slane %v1270, 4
        %v1272 = vadd.f32 %v1270, %v1271
        %v1273 = vrot.slane %v1272, 2
        %v1274 = vadd.f32 %v1272, %v1273
        %v1275 = vrot.slane %v1274, 1
        %v1276 = vadd.f32 %v1274, %v1275
        %s1277 = vtos %v1276
        %v1278 = vrcp.pop 1024.0
        %s1279 = vtos %v1278
        %s1280 = smul.f32 %s1277, %s1279
        %v1281 = vstv %s1280
        %v1282 = vsub.f32 %v1253, %v1281
        %v1283 = vsub.f32 %v1254, %v1281
        %v1284 = vmul.f32 %v1282, %v1282
        %v1285 = vmul.f32 %v1283, %v1283
        %v1286 = vsel %vm1265, %v1284, 0.0
        %v1287 = vsel %vm1265, %v1285, 0.0
        %v1288 = vadd.f32 %v1286, %v1287
        %1289 = vadd.xlane.f32.xlu0 %v1288
        %v1290 = vpop.xlane.xlu0 %1289
        %v1291 = vrot.slane %v1290, 4
        %v1292 = vadd.f32 %v1290, %v1291
        %v1293 = vrot.slane %v1292, 2
        %v1294 = vadd.f32 %v1292, %v1293
        %v1295 = vrot.slane %v1294, 1
        %v1296 = vadd.f32 %v1294, %v1295
        %s1297 = vtos %v1296
        %v1298 = vrcp.pop 1024.0
        %s1299 = vtos %v1298
        %s1300 = smul.f32 %s1297, %s1299
        %s1301 = sadd.f32 %s1300, 1e-05
        %v1302 = vstv %s1301
        %v1303 = vrsqrt.pop %v1302
        %s1304 = vtos %v1303
        %v1305 = vstv %s1304
        %v1306 = vmul.f32 %v1282, %v1305
        %v1307 = vmul.f32 %v1283, %v1305
        %1309 = vset.pattern.permute.xlu0 0
        %1310 = vperm.xlu0 %1309, %v1261
        %v1311 = vpop.permute.xlu0 %1310
        %1314 = vset.pattern.permute.xlu0 0
        %1315 = vperm.xlu0 %1314, %v1262
        %v1316 = vpop.permute.xlu0 %1315
        %v1318 = vmul.f32 %v1306, %v1311
        %v1319 = vmul.f32 %v1307, %v1316
        %1321 = vset.pattern.permute.xlu0 0
        %1322 = vperm.xlu0 %1321, %v1263
        %v1323 = vpop.permute.xlu0 %1322
        %1326 = vset.pattern.permute.xlu0 0
        %1327 = vperm.xlu0 %1326, %v1264
        %v1328 = vpop.permute.xlu0 %1327
        %v1330 = vadd.f32 %v1318, %v1323
        %v1331 = vadd.f32 %v1319, %v1328
        %1333 = vset.pattern.permute.xlu0 0
        %1334 = vperm.xlu0 %1333, %v1259
        %v1335 = vpop.permute.xlu0 %1334
        %1338 = vset.pattern.permute.xlu0 0
        %1339 = vperm.xlu0 %1338, %v1260
        %v1340 = vpop.permute.xlu0 %1339
        %v1342 = vmul.f32 %v1335, %v1330
        %v1343 = vmul.f32 %v1340, %v1331
        %v1344 = vld [vmem:[%s1238] sm:$0xff]
        %v1345 = vld [vmem:[%s1238 + $0x8] sm:$0xff]
        %1347 = vset.pattern.permute.xlu0 0
        %1348 = vperm.xlu0 %1347, %v1344
        %v1349 = vpop.permute.xlu0 %1348
        %1352 = vset.pattern.permute.xlu0 0
        %1353 = vperm.xlu0 %1352, %v1345
        %v1354 = vpop.permute.xlu0 %1353
        %v1356 = vadd.f32 %v1342, %v1349
        %v1357 = vadd.f32 %v1343, %v1354
        %v1358 = vld [vmem:[%s11] sm:$0xff]
        %v1359 = vld [vmem:[%s11 + $0x8] sm:$0xff]
        %v1360 = vld [vmem:[%s13] sm:$0xff]
        %v1361 = vld [vmem:[%s13 + $0x8] sm:$0xff]
        %1364 = vrot.lane.b32.xlu0 %v1356, 73
        %v1365 = vpop.permute.xlu0 %1364
        %1366 = vrot.lane.b32.xlu0 %v1357, 73
        %v1367 = vpop.permute.xlu0 %1366
        %1370 = vrot.lane.b32.xlu0 %v1356, 9
        %v1371 = vpop.permute.xlu0 %1370
        %1372 = vrot.lane.b32.xlu0 %v1357, 9
        %v1373 = vpop.permute.xlu0 %1372
        %vm1376 = vcmask 72704
        %v1377 = vsel %vm1376, %v1365, %v1371
        %v1378 = vsel %vm1376, %v1367, %v1373
        %v1379 = vlaneseq
        %v1380 = vshrl.u32 %v1379, 7
        %v1381 = vsub.s32 0, %v1380
        %v1382 = vrot.slane %v1255, %v1381
        %v1383 = vmul.f32 %v1377, %v1382
        %v1384 = vmul.f32 %v1378, %v1382
        %1385 = vrot.lane.b32.xlu0 %v1356, 72
        %v1386 = vpop.permute.xlu0 %1385
        %1387 = vrot.lane.b32.xlu0 %v1357, 72
        %v1388 = vpop.permute.xlu0 %1387
        %1391 = vrot.lane.b32.xlu0 %v1356, 8
        %v1392 = vpop.permute.xlu0 %1391
        %1393 = vrot.lane.b32.xlu0 %v1357, 8
        %v1394 = vpop.permute.xlu0 %1393
        %vm1397 = vcmask 64512
        %v1398 = vsel %vm1397, %v1386, %v1392
        %v1399 = vsel %vm1397, %v1388, %v1394
        %v1400 = vlaneseq
        %v1401 = vshrl.u32 %v1400, 7
        %v1402 = vsub.s32 1, %v1401
        %v1403 = vrot.slane %v1255, %v1402
        %v1404 = vmul.f32 %v1398, %v1403
        %v1405 = vmul.f32 %v1399, %v1403
        %1406 = vrot.lane.b32.xlu0 %v1356, 71
        %v1407 = vpop.permute.xlu0 %1406
        %1408 = vrot.lane.b32.xlu0 %v1357, 71
        %v1409 = vpop.permute.xlu0 %1408
        %1412 = vrot.lane.b32.xlu0 %v1356, 7
        %v1413 = vpop.permute.xlu0 %1412
        %1414 = vrot.lane.b32.xlu0 %v1357, 7
        %v1415 = vpop.permute.xlu0 %1414
        %vm1418 = vcmask 56320
        %v1419 = vsel %vm1418, %v1407, %v1413
        %v1420 = vsel %vm1418, %v1409, %v1415
        %v1421 = vlaneseq
        %v1422 = vshrl.u32 %v1421, 7
        %v1423 = vsub.s32 2, %v1422
        %v1424 = vrot.slane %v1255, %v1423
        %v1425 = vmul.f32 %v1419, %v1424
        %v1426 = vmul.f32 %v1420, %v1424
        %1427 = vrot.lane.b32.xlu0 %v1356, 65
        %v1428 = vpop.permute.xlu0 %1427
        %1429 = vrot.lane.b32.xlu0 %v1357, 65
        %v1430 = vpop.permute.xlu0 %1429
        %1433 = vrot.lane.b32.xlu0 %v1356, 1
        %v1434 = vpop.permute.xlu0 %1433
        %1435 = vrot.lane.b32.xlu0 %v1357, 1
        %v1436 = vpop.permute.xlu0 %1435
        %vm1439 = vcmask 7168
        %v1440 = vsel %vm1439, %v1428, %v1434
        %v1441 = vsel %vm1439, %v1430, %v1436
        %v1442 = vlaneseq
        %v1443 = vshrl.u32 %v1442, 7
        %v1444 = vsub.s32 3, %v1443
        %v1445 = vrot.slane %v1255, %v1444
        %v1446 = vmul.f32 %v1440, %v1445
        %v1447 = vmul.f32 %v1441, %v1445
        %1448 = vrot.lane.b32.xlu0 %v1356, 127
        %v1449 = vpop.permute.xlu0 %1448
        %1450 = vrot.lane.b32.xlu0 %v1357, 127
        %v1451 = vpop.permute.xlu0 %1450
        %1454 = vrot.lane.b32.xlu0 %v1356, 63
        %v1455 = vpop.permute.xlu0 %1454
        %1456 = vrot.lane.b32.xlu0 %v1357, 63
        %v1457 = vpop.permute.xlu0 %1456
        %vm1460 = vcmask 515072
        %v1461 = vsel %vm1460, %v1449, %v1455
        %v1462 = vsel %vm1460, %v1451, %v1457
        %v1463 = vlaneseq
        %v1464 = vshrl.u32 %v1463, 7
        %v1465 = vsub.s32 5, %v1464
        %v1466 = vrot.slane %v1255, %v1465
        %v1467 = vmul.f32 %v1461, %v1466
        %v1468 = vmul.f32 %v1462, %v1466
        %1469 = vrot.lane.b32.xlu0 %v1356, 121
        %v1470 = vpop.permute.xlu0 %1469
        %1471 = vrot.lane.b32.xlu0 %v1357, 121
        %v1472 = vpop.permute.xlu0 %1471
        %1475 = vrot.lane.b32.xlu0 %v1356, 57
        %v1476 = vpop.permute.xlu0 %1475
        %1477 = vrot.lane.b32.xlu0 %v1357, 57
        %v1478 = vpop.permute.xlu0 %1477
        %vm1481 = vcmask 465920
        %v1482 = vsel %vm1481, %v1470, %v1476
        %v1483 = vsel %vm1481, %v1472, %v1478
        %v1484 = vlaneseq
        %v1485 = vshrl.u32 %v1484, 7
        %v1486 = vsub.s32 6, %v1485
        %v1487 = vrot.slane %v1255, %v1486
        %v1488 = vmul.f32 %v1482, %v1487
        %v1489 = vmul.f32 %v1483, %v1487
        %1490 = vrot.lane.b32.xlu0 %v1356, 120
        %v1491 = vpop.permute.xlu0 %1490
        %1492 = vrot.lane.b32.xlu0 %v1357, 120
        %v1493 = vpop.permute.xlu0 %1492
        %1496 = vrot.lane.b32.xlu0 %v1356, 56
        %v1497 = vpop.permute.xlu0 %1496
        %1498 = vrot.lane.b32.xlu0 %v1357, 56
        %v1499 = vpop.permute.xlu0 %1498
        %vm1502 = vcmask 457728
        %v1503 = vsel %vm1502, %v1491, %v1497
        %v1504 = vsel %vm1502, %v1493, %v1499
        %v1505 = vlaneseq
        %v1506 = vshrl.u32 %v1505, 7
        %v1507 = vsub.s32 7, %v1506
        %v1508 = vrot.slane %v1255, %v1507
        %v1509 = vmul.f32 %v1503, %v1508
        %v1510 = vmul.f32 %v1504, %v1508
        %1511 = vrot.lane.b32.xlu0 %v1356, 119
        %v1512 = vpop.permute.xlu0 %1511
        %1513 = vrot.lane.b32.xlu0 %v1357, 119
        %v1514 = vpop.permute.xlu0 %1513
        %1517 = vrot.lane.b32.xlu0 %v1356, 55
        %v1518 = vpop.permute.xlu0 %1517
        %1519 = vrot.lane.b32.xlu0 %v1357, 55
        %v1520 = vpop.permute.xlu0 %1519
        %vm1523 = vcmask 449536
        %v1524 = vsel %vm1523, %v1512, %v1518
        %v1525 = vsel %vm1523, %v1514, %v1520
        %v1526 = vlaneseq
        %v1527 = vshrl.u32 %v1526, 7
        %v1528 = vsub.s32 0, %v1527
        %v1529 = vrot.slane %v1256, %v1528
        %v1530 = vmul.f32 %v1524, %v1529
        %v1531 = vmul.f32 %v1525, %v1529
        %v1532 = vpack.c.bf16 %v1384, %v1383
        %v1533 = vpack.c.bf16 %v1405, %v1404
        %v1534 = vpack.c.bf16 %v1426, %v1425
        %v1535 = vpack.c.bf16 %v1447, %v1446
        %v1536 = vpack.c.bf16 %v1357, %v1356
        %v1537 = vpack.c.bf16 %v1468, %v1467
        %v1538 = vpack.c.bf16 %v1489, %v1488
        %v1539 = vpack.c.bf16 %v1510, %v1509
        %v1540 = vpack.c.bf16 %v1531, %v1530
        %1542 = vset.pattern.permute.xlu0 0
        %1543 = vperm.xlu0 %1542, %v1360
        %v1544 = vpop.permute.xlu0 %1543
        %1547 = vset.pattern.permute.xlu0 0
        %1548 = vperm.xlu0 %1547, %v1361
        %v1549 = vpop.permute.xlu0 %1548
        %v1553 = vunpack.c.l.b16 %v1358
        %v1554 = vunpack.c.h.b16 %v1358
        %v1555 = vunpack.c.l.b16 %v1359
        %v1556 = vunpack.c.h.b16 %v1359
        %v1557 = vpack.c.b16 %v1555, %v1553
        %v1558 = vpack.c.b16 %v1556, %v1554
        %vm1560 = vcmask 130048
        %v1562 = vsel %vm1560, %v1558, 0
        %1564 = vmatprep.subr.bf16.mxu0 0
        %1565 = vmatpush1.bf16.msra.mxu0 %v1539
        %1566 = vmatprep.subr.bf16.mxu0 0
        %1567 = vmatpush1.bf16.msra.mxu0 %v1538
        %1568 = vmatprep.subr.bf16.mxu0 0
        %1569 = vmatpush1.bf16.msra.mxu0 %v1537
        %1570 = vmatprep.subr.bf16.mxu0 0
        %1571 = vmatpush1.bf16.msra.mxu0 %v1536
        %1572 = vmatprep.subr.bf16.mxu0 0
        %1573 = vmatpush1.bf16.msra.mxu0 %v1535
        %1574 = vmatprep.subr.bf16.mxu0 0
        %1575 = vmatpush1.bf16.msra.mxu0 %v1534
        %1576 = vmatprep.subr.bf16.mxu0 0
        %1577 = vmatpush1.bf16.msra.mxu0 %v1533
        %1578 = vmatprep.subr.bf16.mxu0 0
        %1579 = vmatpush1.bf16.msra.mxu0 %v1532
        %1580 = vmatprep.subr.bf16.mxu0 0
        %1581 = vmatpush2.bf16.msra.mxu0 0
        %1582 = vmatprep.subr.bf16.mxu0 0
        %1583 = vmatpush2.bf16.msra.mxu0 0
        %1584 = vmatprep.subr.bf16.mxu0 0
        %1585 = vmatpush2.bf16.msra.mxu0 0
        %1586 = vmatprep.subr.bf16.mxu0 0
        %1587 = vmatpush2.bf16.msra.mxu0 0
        %1588 = vmatprep.subr.bf16.mxu0 0
        %1589 = vmatpush2.bf16.msra.mxu0 0
        %1590 = vmatprep.subr.bf16.mxu0 0
        %1591 = vmatpush2.bf16.msra.mxu0 0
        %1592 = vmatprep.subr.bf16.mxu0 0
        %1593 = vmatpush2.bf16.msra.mxu0 0
        %1594 = vmatprep.subr.bf16.mxu0 0
        %1595 = vmatpush2.bf16.msra.mxu0 %v1540
        %1596 = vmatprep.mubr.bf16.mxu0 %v1562
        %1597 = vmatmul.mubr.bf16.gmra.mxu0 %v1557
        %v1598 = vpop.f32.mrf.mxu0
        %v1599 = vadd.f32 %v1544, %v1598
        %v1600 = vpop.f32.mrf.mxu0
        %v1601 = vpop.f32.mrf.mxu0
        %v1602 = vadd.f32 %v1549, %v1601
        %v1603 = vpop.f32.mrf.mxu0
        %1604 = vdwg.mxu0
        %v1605 = vld [vmem:[%s15] sm:$0xff]
        %v1606 = vld [vmem:[%s15 + $0x8] sm:$0xff]
        %v1607 = vld [vmem:[%s17] sm:$0xff]
        %v1608 = vld [vmem:[%s17 + $0x8] sm:$0xff]
        %v1609 = vsel %vm1265, %v1599, 0.0
        %v1610 = vsel %vm1265, %v1602, 0.0
        %v1611 = vadd.f32 %v1609, %v1610
        %1612 = vadd.xlane.f32.xlu0 %v1611
        %v1613 = vpop.xlane.xlu0 %1612
        %v1614 = vrot.slane %v1613, 4
        %v1615 = vadd.f32 %v1613, %v1614
        %v1616 = vrot.slane %v1615, 2
        %v1617 = vadd.f32 %v1615, %v1616
        %v1618 = vrot.slane %v1617, 1
        %v1619 = vadd.f32 %v1617, %v1618
        %s1620 = vtos %v1619
        %v1621 = vrcp.pop 1024.0
        %s1622 = vtos %v1621
        %s1623 = smul.f32 %s1620, %s1622
        %v1624 = vstv %s1623
        %v1625 = vsub.f32 %v1599, %v1624
        %v1626 = vsub.f32 %v1602, %v1624
        %v1627 = vmul.f32 %v1625, %v1625
        %v1628 = vmul.f32 %v1626, %v1626
        %v1629 = vsel %vm1265, %v1627, 0.0
        %v1630 = vsel %vm1265, %v1628, 0.0
        %v1631 = vadd.f32 %v1629, %v1630
        %1632 = vadd.xlane.f32.xlu0 %v1631
        %v1633 = vpop.xlane.xlu0 %1632
        %v1634 = vrot.slane %v1633, 4
        %v1635 = vadd.f32 %v1633, %v1634
        %v1636 = vrot.slane %v1635, 2
        %v1637 = vadd.f32 %v1635, %v1636
        %v1638 = vrot.slane %v1637, 1
        %v1639 = vadd.f32 %v1637, %v1638
        %s1640 = vtos %v1639
        %v1641 = vrcp.pop 1024.0
        %s1642 = vtos %v1641
        %s1643 = smul.f32 %s1640, %s1642
        %s1644 = sadd.f32 %s1643, 1e-05
        %v1645 = vstv %s1644
        %v1646 = vrsqrt.pop %v1645
        %s1647 = vtos %v1646
        %v1648 = vstv %s1647
        %v1649 = vmul.f32 %v1625, %v1648
        %v1650 = vmul.f32 %v1626, %v1648
        %1652 = vset.pattern.permute.xlu0 0
        %1653 = vperm.xlu0 %1652, %v1605
        %v1654 = vpop.permute.xlu0 %1653
        %1657 = vset.pattern.permute.xlu0 0
        %1658 = vperm.xlu0 %1657, %v1606
        %v1659 = vpop.permute.xlu0 %1658
        %v1661 = vmul.f32 %v1649, %v1654
        %v1662 = vmul.f32 %v1650, %v1659
        %1664 = vset.pattern.permute.xlu0 0
        %1665 = vperm.xlu0 %1664, %v1607
        %v1666 = vpop.permute.xlu0 %1665
        %1669 = vset.pattern.permute.xlu0 0
        %1670 = vperm.xlu0 %1669, %v1608
        %v1671 = vpop.permute.xlu0 %1670
        %v1673 = vadd.f32 %v1661, %v1666
        %v1674 = vadd.f32 %v1662, %v1671
        %v1675 = vmul.f32 %v1673, 0.5
        %v1676 = vmul.f32 %v1674, 0.5
        %v1677 = vrcp.pop 1.4142135
        %v1678 = vmul.f32 %v1673, %v1677
        %v1679 = vmul.f32 %v1674, %v1677
        %v1680 = verf.f32.pop %v1678
        %v1681 = verf.f32.pop %v1679
        %v1682 = vadd.f32 %v1680, 1.0
        %v1683 = vadd.f32 %v1681, 1.0
        %v1684 = vmul.f32 %v1675, %v1682
        %v1685 = vmul.f32 %v1676, %v1683
        %v1686 = vld [vmem:[%s19] sm:$0xff]
        %v1687 = vld [vmem:[%s19 + $0x8] sm:$0xff]
        %v1688 = vld [vmem:[%s21] sm:$0xff]
        %v1689 = vld [vmem:[%s21 + $0x8] sm:$0xff]
        %1692 = vrot.lane.b32.xlu0 %v1684, 73
        %v1693 = vpop.permute.xlu0 %1692
        %1694 = vrot.lane.b32.xlu0 %v1685, 73
        %v1695 = vpop.permute.xlu0 %1694
        %1698 = vrot.lane.b32.xlu0 %v1684, 9
        %v1699 = vpop.permute.xlu0 %1698
        %1700 = vrot.lane.b32.xlu0 %v1685, 9
        %v1701 = vpop.permute.xlu0 %1700
        %v1704 = vsel %vm1376, %v1693, %v1699
        %v1705 = vsel %vm1376, %v1695, %v1701
        %v1706 = vmul.f32 %v1704, %v1382
        %v1707 = vmul.f32 %v1705, %v1382
        %1708 = vrot.lane.b32.xlu0 %v1684, 72
        %v1709 = vpop.permute.xlu0 %1708
        %1710 = vrot.lane.b32.xlu0 %v1685, 72
        %v1711 = vpop.permute.xlu0 %1710
        %1714 = vrot.lane.b32.xlu0 %v1684, 8
        %v1715 = vpop.permute.xlu0 %1714
        %1716 = vrot.lane.b32.xlu0 %v1685, 8
        %v1717 = vpop.permute.xlu0 %1716
        %v1720 = vsel %vm1397, %v1709, %v1715
        %v1721 = vsel %vm1397, %v1711, %v1717
        %v1722 = vmul.f32 %v1720, %v1403
        %v1723 = vmul.f32 %v1721, %v1403
        %1724 = vrot.lane.b32.xlu0 %v1684, 71
        %v1725 = vpop.permute.xlu0 %1724
        %1726 = vrot.lane.b32.xlu0 %v1685, 71
        %v1727 = vpop.permute.xlu0 %1726
        %1730 = vrot.lane.b32.xlu0 %v1684, 7
        %v1731 = vpop.permute.xlu0 %1730
        %1732 = vrot.lane.b32.xlu0 %v1685, 7
        %v1733 = vpop.permute.xlu0 %1732
        %v1736 = vsel %vm1418, %v1725, %v1731
        %v1737 = vsel %vm1418, %v1727, %v1733
        %v1738 = vmul.f32 %v1736, %v1424
        %v1739 = vmul.f32 %v1737, %v1424
        %1740 = vrot.lane.b32.xlu0 %v1684, 65
        %v1741 = vpop.permute.xlu0 %1740
        %1742 = vrot.lane.b32.xlu0 %v1685, 65
        %v1743 = vpop.permute.xlu0 %1742
        %1746 = vrot.lane.b32.xlu0 %v1684, 1
        %v1747 = vpop.permute.xlu0 %1746
        %1748 = vrot.lane.b32.xlu0 %v1685, 1
        %v1749 = vpop.permute.xlu0 %1748
        %v1752 = vsel %vm1439, %v1741, %v1747
        %v1753 = vsel %vm1439, %v1743, %v1749
        %v1754 = vmul.f32 %v1752, %v1445
        %v1755 = vmul.f32 %v1753, %v1445
        %1756 = vrot.lane.b32.xlu0 %v1684, 127
        %v1757 = vpop.permute.xlu0 %1756
        %1758 = vrot.lane.b32.xlu0 %v1685, 127
        %v1759 = vpop.permute.xlu0 %1758
        %1762 = vrot.lane.b32.xlu0 %v1684, 63
        %v1763 = vpop.permute.xlu0 %1762
        %1764 = vrot.lane.b32.xlu0 %v1685, 63
        %v1765 = vpop.permute.xlu0 %1764
        %v1768 = vsel %vm1460, %v1757, %v1763
        %v1769 = vsel %vm1460, %v1759, %v1765
        %v1770 = vmul.f32 %v1768, %v1466
        %v1771 = vmul.f32 %v1769, %v1466
        %1772 = vrot.lane.b32.xlu0 %v1684, 121
        %v1773 = vpop.permute.xlu0 %1772
        %1774 = vrot.lane.b32.xlu0 %v1685, 121
        %v1775 = vpop.permute.xlu0 %1774
        %1778 = vrot.lane.b32.xlu0 %v1684, 57
        %v1779 = vpop.permute.xlu0 %1778
        %1780 = vrot.lane.b32.xlu0 %v1685, 57
        %v1781 = vpop.permute.xlu0 %1780
        %v1784 = vsel %vm1481, %v1773, %v1779
        %v1785 = vsel %vm1481, %v1775, %v1781
        %v1786 = vmul.f32 %v1784, %v1487
        %v1787 = vmul.f32 %v1785, %v1487
        %1788 = vrot.lane.b32.xlu0 %v1684, 120
        %v1789 = vpop.permute.xlu0 %1788
        %1790 = vrot.lane.b32.xlu0 %v1685, 120
        %v1791 = vpop.permute.xlu0 %1790
        %1794 = vrot.lane.b32.xlu0 %v1684, 56
        %v1795 = vpop.permute.xlu0 %1794
        %1796 = vrot.lane.b32.xlu0 %v1685, 56
        %v1797 = vpop.permute.xlu0 %1796
        %v1800 = vsel %vm1502, %v1789, %v1795
        %v1801 = vsel %vm1502, %v1791, %v1797
        %v1802 = vmul.f32 %v1800, %v1508
        %v1803 = vmul.f32 %v1801, %v1508
        %1804 = vrot.lane.b32.xlu0 %v1684, 119
        %v1805 = vpop.permute.xlu0 %1804
        %1806 = vrot.lane.b32.xlu0 %v1685, 119
        %v1807 = vpop.permute.xlu0 %1806
        %1810 = vrot.lane.b32.xlu0 %v1684, 55
        %v1811 = vpop.permute.xlu0 %1810
        %1812 = vrot.lane.b32.xlu0 %v1685, 55
        %v1813 = vpop.permute.xlu0 %1812
        %v1816 = vsel %vm1523, %v1805, %v1811
        %v1817 = vsel %vm1523, %v1807, %v1813
        %v1818 = vmul.f32 %v1816, %v1529
        %v1819 = vmul.f32 %v1817, %v1529
        %v1820 = vpack.c.bf16 %v1707, %v1706
        %v1821 = vpack.c.bf16 %v1723, %v1722
        %v1822 = vpack.c.bf16 %v1739, %v1738
        %v1823 = vpack.c.bf16 %v1755, %v1754
        %v1824 = vpack.c.bf16 %v1685, %v1684
        %v1825 = vpack.c.bf16 %v1771, %v1770
        %v1826 = vpack.c.bf16 %v1787, %v1786
        %v1827 = vpack.c.bf16 %v1803, %v1802
        %v1828 = vpack.c.bf16 %v1819, %v1818
        %1830 = vset.pattern.permute.xlu0 0
        %1831 = vperm.xlu0 %1830, %v1688
        %v1832 = vpop.permute.xlu0 %1831
        %1835 = vset.pattern.permute.xlu0 0
        %1836 = vperm.xlu0 %1835, %v1689
        %v1837 = vpop.permute.xlu0 %1836
        %v1841 = vunpack.c.l.b16 %v1686
        %v1842 = vunpack.c.h.b16 %v1686
        %v1843 = vunpack.c.l.b16 %v1687
        %v1844 = vunpack.c.h.b16 %v1687
        %v1845 = vpack.c.b16 %v1843, %v1841
        %v1846 = vpack.c.b16 %v1844, %v1842
        %v1849 = vsel %vm1560, %v1846, 0
        %1851 = vmatprep.subr.bf16.mxu0 0
        %1852 = vmatpush1.bf16.msra.mxu0 %v1827
        %1853 = vmatprep.subr.bf16.mxu0 0
        %1854 = vmatpush1.bf16.msra.mxu0 %v1826
        %1855 = vmatprep.subr.bf16.mxu0 0
        %1856 = vmatpush1.bf16.msra.mxu0 %v1825
        %1857 = vmatprep.subr.bf16.mxu0 0
        %1858 = vmatpush1.bf16.msra.mxu0 %v1824
        %1859 = vmatprep.subr.bf16.mxu0 0
        %1860 = vmatpush1.bf16.msra.mxu0 %v1823
        %1861 = vmatprep.subr.bf16.mxu0 0
        %1862 = vmatpush1.bf16.msra.mxu0 %v1822
        %1863 = vmatprep.subr.bf16.mxu0 0
        %1864 = vmatpush1.bf16.msra.mxu0 %v1821
        %1865 = vmatprep.subr.bf16.mxu0 0
        %1866 = vmatpush1.bf16.msra.mxu0 %v1820
        %1867 = vmatprep.subr.bf16.mxu0 0
        %1868 = vmatpush2.bf16.msra.mxu0 0
        %1869 = vmatprep.subr.bf16.mxu0 0
        %1870 = vmatpush2.bf16.msra.mxu0 0
        %1871 = vmatprep.subr.bf16.mxu0 0
        %1872 = vmatpush2.bf16.msra.mxu0 0
        %1873 = vmatprep.subr.bf16.mxu0 0
        %1874 = vmatpush2.bf16.msra.mxu0 0
        %1875 = vmatprep.subr.bf16.mxu0 0
        %1876 = vmatpush2.bf16.msra.mxu0 0
        %1877 = vmatprep.subr.bf16.mxu0 0
        %1878 = vmatpush2.bf16.msra.mxu0 0
        %1879 = vmatprep.subr.bf16.mxu0 0
        %1880 = vmatpush2.bf16.msra.mxu0 0
        %1881 = vmatprep.subr.bf16.mxu0 0
        %1882 = vmatpush2.bf16.msra.mxu0 %v1828
        %1883 = vmatprep.mubr.bf16.mxu0 %v1849
        %1884 = vmatmul.mubr.bf16.gmra.mxu0 %v1845
        %v1885 = vpop.f32.mrf.mxu0
        %v1886 = vadd.f32 %v1832, %v1885
        %v1887 = vpop.f32.mrf.mxu0
        %v1888 = vpop.f32.mrf.mxu0
        %v1889 = vadd.f32 %v1837, %v1888
        %v1890 = vpop.f32.mrf.mxu0
        %1891 = vdwg.mxu0
        %v1892 = vld [vmem:[%s23] sm:$0xff]
        %v1893 = vld [vmem:[%s23 + $0x8] sm:$0xff]
        %v1894 = vld [vmem:[%s25] sm:$0xff]
        %v1895 = vld [vmem:[%s25 + $0x8] sm:$0xff]
        %v1896 = vsel %vm1265, %v1886, 0.0
        %v1897 = vsel %vm1265, %v1889, 0.0
        %v1898 = vadd.f32 %v1896, %v1897
        %1899 = vadd.xlane.f32.xlu0 %v1898
        %v1900 = vpop.xlane.xlu0 %1899
        %v1901 = vrot.slane %v1900, 4
        %v1902 = vadd.f32 %v1900, %v1901
        %v1903 = vrot.slane %v1902, 2
        %v1904 = vadd.f32 %v1902, %v1903
        %v1905 = vrot.slane %v1904, 1
        %v1906 = vadd.f32 %v1904, %v1905
        %s1907 = vtos %v1906
        %v1908 = vrcp.pop 1024.0
        %s1909 = vtos %v1908
        %s1910 = smul.f32 %s1907, %s1909
        %v1911 = vstv %s1910
        %v1912 = vsub.f32 %v1886, %v1911
        %v1913 = vsub.f32 %v1889, %v1911
        %v1914 = vmul.f32 %v1912, %v1912
        %v1915 = vmul.f32 %v1913, %v1913
        %v1916 = vsel %vm1265, %v1914, 0.0
        %v1917 = vsel %vm1265, %v1915, 0.0
        %v1918 = vadd.f32 %v1916, %v1917
        %1919 = vadd.xlane.f32.xlu0 %v1918
        %v1920 = vpop.xlane.xlu0 %1919
        %v1921 = vrot.slane %v1920, 4
        %v1922 = vadd.f32 %v1920, %v1921
        %v1923 = vrot.slane %v1922, 2
        %v1924 = vadd.f32 %v1922, %v1923
        %v1925 = vrot.slane %v1924, 1
        %v1926 = vadd.f32 %v1924, %v1925
        %s1927 = vtos %v1926
        %v1928 = vrcp.pop 1024.0
        %s1929 = vtos %v1928
        %s1930 = smul.f32 %s1927, %s1929
        %s1931 = sadd.f32 %s1930, 1e-05
        %v1932 = vstv %s1931
        %v1933 = vrsqrt.pop %v1932
        %s1934 = vtos %v1933
        %v1935 = vstv %s1934
        %v1936 = vmul.f32 %v1912, %v1935
        %v1937 = vmul.f32 %v1913, %v1935
        %1939 = vset.pattern.permute.xlu0 0
        %1940 = vperm.xlu0 %1939, %v1892
        %v1941 = vpop.permute.xlu0 %1940
        %1944 = vset.pattern.permute.xlu0 0
        %1945 = vperm.xlu0 %1944, %v1893
        %v1946 = vpop.permute.xlu0 %1945
        %v1948 = vmul.f32 %v1936, %v1941
        %v1949 = vmul.f32 %v1937, %v1946
        %1951 = vset.pattern.permute.xlu0 0
        %1952 = vperm.xlu0 %1951, %v1894
        %v1953 = vpop.permute.xlu0 %1952
        %1956 = vset.pattern.permute.xlu0 0
        %1957 = vperm.xlu0 %1956, %v1895
        %v1958 = vpop.permute.xlu0 %1957
        %v1960 = vadd.f32 %v1948, %v1953
        %v1961 = vadd.f32 %v1949, %v1958
        %v1962 = vadd.f32 %v1960, %v1356
        %v1963 = vadd.f32 %v1961, %v1357
        %v1964 = vld [vmem:[%s29] sm:$0xf]
        %v1965 = vpack.c.bf16 %v1963, %v1962
        %v1966 = vld [vmem:[%s31] sm:$0xff]
        %1968 = vset.pattern.permute.xlu0 0
        %1969 = vperm.xlu0 %1968, %v1966
        %v1970 = vpop.permute.xlu0 %1969
        %v1973 = vsel %vm1560, %v1964, 0
        %1975 = vmatprep.subr.bf16.mxu0 0
        %1976 = vmatpush1.bf16.msra.mxu0 0
        %1977 = vmatprep.subr.bf16.mxu0 0
        %1978 = vmatpush1.bf16.msra.mxu0 0
        %1979 = vmatprep.subr.bf16.mxu0 0
        %1980 = vmatpush1.bf16.msra.mxu0 0
        %1981 = vmatprep.subr.bf16.mxu0 0
        %1982 = vmatpush1.bf16.msra.mxu0 0
        %1983 = vmatprep.subr.bf16.mxu0 0
        %1984 = vmatpush1.bf16.msra.mxu0 0
        %1985 = vmatprep.subr.bf16.mxu0 0
        %1986 = vmatpush1.bf16.msra.mxu0 0
        %1987 = vmatprep.subr.bf16.mxu0 0
        %1988 = vmatpush1.bf16.msra.mxu0 0
        %1989 = vmatprep.subr.bf16.mxu0 0
        %1990 = vmatpush1.bf16.msra.mxu0 %v1965
        %1991 = vmatprep.subr.bf16.mxu0 0
        %1992 = vmatpush2.bf16.msra.mxu0 0
        %1993 = vmatprep.subr.bf16.mxu0 0
        %1994 = vmatpush2.bf16.msra.mxu0 0
        %1995 = vmatprep.subr.bf16.mxu0 0
        %1996 = vmatpush2.bf16.msra.mxu0 0
        %1997 = vmatprep.subr.bf16.mxu0 0
        %1998 = vmatpush2.bf16.msra.mxu0 0
        %1999 = vmatprep.subr.bf16.mxu0 0
        %2000 = vmatpush2.bf16.msra.mxu0 0
        %2001 = vmatprep.subr.bf16.mxu0 0
        %2002 = vmatpush2.bf16.msra.mxu0 0
        %2003 = vmatprep.subr.bf16.mxu0 0
        %2004 = vmatpush2.bf16.msra.mxu0 0
        %2005 = vmatprep.subr.bf16.mxu0 0
        %2006 = vmatpush2.bf16.msra.mxu0 0
        %2007 = vmatprep.mubr.bf16.mxu0 0
        %2008 = vmatmul.mubr.bf16.gmra.mxu0 %v1973
        %v2009 = vpop.f32.mrf.mxu0
        %v2010 = vadd.f32 %v1970, %v2009
        %v2011 = vpop.f32.mrf.mxu0
        %v2012 = vpop.f32.mrf.mxu0
        %v2013 = vpop.f32.mrf.mxu0
        %2014 = vdwg.mxu0
        %v2015 = vld [vmem:[%s33] sm:$0xff]
        %v2016 = vld [vmem:[%s33 + $0x8] sm:$0xff]
        %v2017 = vld [vmem:[%s33 + $0x10] sm:$0xff]
        %v2018 = vld [vmem:[%s33 + $0x18] sm:$0xff]
        %v2019 = vld [vmem:[%s33 + $0x20] sm:$0xff]
        %v2020 = vld [vmem:[%s33 + $0x28] sm:$0xff]
        %v2021 = vld [vmem:[%s33 + $0x30] sm:$0xff]
        %v2022 = vld [vmem:[%s33 + $0x38] sm:$0xff]
        %v2023 = vld [vmem:[%s33 + $0x40] sm:$0xff]
        %v2024 = vld [vmem:[%s33 + $0x48] sm:$0xff]
        %v2025 = vld [vmem:[%s33 + $0x50] sm:$0xff]
        %v2026 = vld [vmem:[%s33 + $0x58] sm:$0xff]
        %v2027 = vld [vmem:[%s33 + $0x60] sm:$0xff]
        %v2028 = vld [vmem:[%s33 + $0x68] sm:$0xff]
        %v2029 = vld [vmem:[%s33 + $0x70] sm:$0xff]
        %v2030 = vld [vmem:[%s33 + $0x78] sm:$0xff]
        %v2032 = vsel %vm1265, %v2010, 0
        %2034 = vmatprep.subr.mxu0 0.0
        %2035 = vmatpush1.msra.mxu0 0.0
        %2036 = vmatprep.subr.mxu0 0.0
        %2037 = vmatpush1.msra.mxu0 0.0
        %2038 = vmatprep.subr.mxu0 0.0
        %2039 = vmatpush1.msra.mxu0 0.0
        %2040 = vmatprep.subr.mxu0 0.0
        %2041 = vmatpush1.msra.mxu0 0.0
        %2042 = vmatprep.subr.mxu0 0.0
        %2043 = vmatpush1.msra.mxu0 0.0
        %2044 = vmatprep.subr.mxu0 0.0
        %2045 = vmatpush1.msra.mxu0 0.0
        %2046 = vmatprep.subr.mxu0 0.0
        %2047 = vmatpush1.msra.mxu0 0.0
        %2048 = vmatprep.subr.mxu0 0.0
        %2049 = vmatpush1.msra.mxu0 0.0
        %2050 = vmatprep.subr.mxu0 %v2030
        %2051 = vmatpush1.msra.mxu0 %v2029
        %2052 = vmatprep.subr.mxu0 %v2028
        %2053 = vmatpush1.msra.mxu0 %v2027
        %2054 = vmatprep.subr.mxu0 %v2026
        %2055 = vmatpush1.msra.mxu0 %v2025
        %2056 = vmatprep.subr.mxu0 %v2024
        %2057 = vmatpush1.msra.mxu0 %v2023
        %2058 = vmatprep.subr.mxu0 %v2022
        %2059 = vmatpush1.msra.mxu0 %v2021
        %2060 = vmatprep.subr.mxu0 %v2020
        %2061 = vmatpush1.msra.mxu0 %v2019
        %2062 = vmatprep.subr.mxu0 %v2018
        %2063 = vmatpush1.msra.mxu0 %v2017
        %2064 = vmatprep.subr.mxu0 %v2016
        %2065 = vmatpush1.msra.mxu0 %v2015
        %2066 = vmatprep.subr.mxu0 0.0
        %2067 = vmatpush2.msra.mxu0 0.0
        %2068 = vmatprep.subr.mxu0 0.0
        %2069 = vmatpush2.msra.mxu0 0.0
        %2070 = vmatprep.subr.mxu0 0.0
        %2071 = vmatpush2.msra.mxu0 0.0
        %2072 = vmatprep.subr.mxu0 0.0
        %2073 = vmatpush2.msra.mxu0 0.0
        %2074 = vmatprep.subr.mxu0 0.0
        %2075 = vmatpush2.msra.mxu0 0.0
        %2076 = vmatprep.subr.mxu0 0.0
        %2077 = vmatpush2.msra.mxu0 0.0
        %2078 = vmatprep.subr.mxu0 0.0
        %2079 = vmatpush2.msra.mxu0 0.0
        %2080 = vmatprep.subr.mxu0 0.0
        %2081 = vmatpush2.msra.mxu0 0.0
        %2082 = vmatprep.subr.mxu0 0.0
        %2083 = vmatpush2.msra.mxu0 0.0
        %2084 = vmatprep.subr.mxu0 0.0
        %2085 = vmatpush2.msra.mxu0 0.0
        %2086 = vmatprep.subr.mxu0 0.0
        %2087 = vmatpush2.msra.mxu0 0.0
        %2088 = vmatprep.subr.mxu0 0.0
        %2089 = vmatpush2.msra.mxu0 0.0
        %2090 = vmatprep.subr.mxu0 0.0
        %2091 = vmatpush2.msra.mxu0 0.0
        %2092 = vmatprep.subr.mxu0 0.0
        %2093 = vmatpush2.msra.mxu0 0.0
        %2094 = vmatprep.subr.mxu0 0.0
        %2095 = vmatpush2.msra.mxu0 0.0
        %2096 = vmatprep.subr.mxu0 0.0
        %2097 = vmatpush2.msra.mxu0 0.0
        %2098 = vmatprep.mubr.f32.mxu0 0.0
        %2099 = vmatmul.mubr.f32.gmra.mxu0 %v2032
        %v2100 = vpop.f32.mrf.mxu0
        %v2101 = vadd.f32 0.0, %v2100
        %v2102 = vpop.f32.mrf.mxu0
        %v2103 = vadd.f32 0.0, %v2102
        %2104 = vdwg.mxu0
        %v2105 = vmul.f32 %v2101, 0.5
        %v2106 = vmul.f32 %v2103, 0.5
        %v2107 = vmul.f32 %v2101, %v1677
        %v2108 = vmul.f32 %v2103, %v1677
        %v2109 = verf.f32.pop %v2107
        %v2110 = verf.f32.pop %v2108
        %v2111 = vadd.f32 %v2109, 1.0
        %v2112 = vadd.f32 %v2110, 1.0
        %v2113 = vmul.f32 %v2105, %v2111
        %v2114 = vmul.f32 %v2106, %v2112
        %v2115 = vld [vmem:[%s59] sm:$0xff]
        %v2116 = vld [vmem:[%s59 + $0x8] sm:$0xff]
        %v2117 = vld [vmem:[%s59 + $0x10] sm:$0x1]
        %v2118 = vld [vmem:[%s59 + $0x18] sm:$0x1]
        %v2119 = vld [vmem:[%s1242] sm:$0xff]
        %v2120 = vadd.f32 %v2119, 1.0
        %v2121 = vld [vmem:[%s39] sm:$0xff]
        %v2122 = vld [vmem:[%s41] sm:$0xff]
        %v2123 = vadd.f32 %v2113, %v2114
        %2124 = vadd.xlane.f32.xlu0 %v2123
        %v2125 = vpop.xlane.xlu0 %2124
        %v2126 = vrot.slane %v2125, 4
        %v2127 = vadd.f32 %v2125, %v2126
        %v2128 = vrot.slane %v2127, 2
        %v2129 = vadd.f32 %v2127, %v2128
        %v2130 = vrot.slane %v2129, 1
        %v2131 = vadd.f32 %v2129, %v2130
        %s2132 = vtos %v2131
        %v2133 = vrcp.pop 2048.0
        %s2134 = vtos %v2133
        %s2135 = smul.f32 %s2132, %s2134
        %v2136 = vstv %s2135
        %v2137 = vsub.f32 %v2113, %v2136
        %v2138 = vsub.f32 %v2114, %v2136
        %v2139 = vmul.f32 %v2137, %v2137
        %v2140 = vmul.f32 %v2138, %v2138
        %v2141 = vadd.f32 %v2139, %v2140
        %2142 = vadd.xlane.f32.xlu0 %v2141
        %v2143 = vpop.xlane.xlu0 %2142
        %v2144 = vrot.slane %v2143, 4
        %v2145 = vadd.f32 %v2143, %v2144
        %v2146 = vrot.slane %v2145, 2
        %v2147 = vadd.f32 %v2145, %v2146
        %v2148 = vrot.slane %v2147, 1
        %v2149 = vadd.f32 %v2147, %v2148
        %s2150 = vtos %v2149
        %v2151 = vrcp.pop 2048.0
        %s2152 = vtos %v2151
        %s2153 = smul.f32 %s2150, %s2152
        %s2154 = sadd.f32 %s2153, 1e-05
        %v2155 = vstv %s2154
        %v2156 = vrsqrt.pop %v2155
        %s2157 = vtos %v2156
        %v2158 = vstv %s2157
        %v2159 = vmul.f32 %v2137, %v2158
        %v2160 = vmul.f32 %v2138, %v2158
        %2162 = vset.pattern.permute.xlu0 0
        %2163 = vperm.xlu0 %2162, %v2121
        %v2164 = vpop.permute.xlu0 %2163
        %v2166 = vmul.f32 %v2159, %v2164
        %v2167 = vmul.f32 %v2160, %v2164
        %2169 = vset.pattern.permute.xlu0 0
        %2170 = vperm.xlu0 %2169, %v2122
        %v2171 = vpop.permute.xlu0 %2170
        %v2173 = vadd.f32 %v2166, %v2171
        %v2174 = vadd.f32 %v2167, %v2171
        %2176 = vset.pattern.permute.xlu0 0
        %2177 = vperm.xlu0 %2176, %v2120
        %v2178 = vpop.permute.xlu0 %2177
        %v2180 = vmul.f32 %v2178, %v2173
        %v2181 = vmul.f32 %v2178, %v2174
        %v2182 = vld [vmem:[%s1246] sm:$0xff]
        %2184 = vset.pattern.permute.xlu0 0
        %2185 = vperm.xlu0 %2184, %v2182
        %v2186 = vpop.permute.xlu0 %2185
        %v2188 = vadd.f32 %v2180, %v2186
        %v2189 = vadd.f32 %v2181, %v2186
        %v2190 = vld [vmem:[%s43] sm:$0xf]
        %v2191 = vld [vmem:[%s45] sm:$0xff]
        %2193 = vrot.lane.b32.xlu0 %v2189, 17
        %v2194 = vpop.permute.xlu0 %2193
        %2197 = vrot.lane.b32.xlu0 %v2188, 17
        %v2198 = vpop.permute.xlu0 %2197
        %vm2199 = vcmask 138240
        %v2200 = vsel %vm2199, %v2198, %v2194
        %v2203 = vsel %vm2199, %v2194, %v2198
        %v2204 = vlaneseq
        %v2205 = vshrl.u32 %v2204, 7
        %v2206 = vsub.s32 0, %v2205
        %v2207 = vrot.slane %v2115, %v2206
        %v2208 = vlaneseq
        %v2209 = vshrl.u32 %v2208, 7
        %v2210 = vsub.s32 0, %v2209
        %v2211 = vrot.slane %v2116, %v2210
        %v2212 = vmul.f32 %v2203, %v2207
        %v2213 = vmul.f32 %v2200, %v2211
        %2214 = vrot.lane.b32.xlu0 %v2189, 16
        %v2215 = vpop.permute.xlu0 %2214
        %2217 = vrot.lane.b32.xlu0 %v2188, 16
        %v2218 = vpop.permute.xlu0 %2217
        %v2219 = vsel %vm1560, %v2218, %v2215
        %v2222 = vsel %vm1560, %v2215, %v2218
        %v2223 = vlaneseq
        %v2224 = vshrl.u32 %v2223, 7
        %v2225 = vsub.s32 1, %v2224
        %v2226 = vrot.slane %v2115, %v2225
        %v2227 = vlaneseq
        %v2228 = vshrl.u32 %v2227, 7
        %v2229 = vsub.s32 1, %v2228
        %v2230 = vrot.slane %v2116, %v2229
        %v2231 = vmul.f32 %v2222, %v2226
        %v2232 = vmul.f32 %v2219, %v2230
        %2233 = vrot.lane.b32.xlu0 %v2189, 15
        %v2234 = vpop.permute.xlu0 %2233
        %2236 = vrot.lane.b32.xlu0 %v2188, 15
        %v2237 = vpop.permute.xlu0 %2236
        %vm2238 = vcmask 121856
        %v2239 = vsel %vm2238, %v2237, %v2234
        %v2242 = vsel %vm2238, %v2234, %v2237
        %v2243 = vlaneseq
        %v2244 = vshrl.u32 %v2243, 7
        %v2245 = vsub.s32 2, %v2244
        %v2246 = vrot.slane %v2115, %v2245
        %v2247 = vlaneseq
        %v2248 = vshrl.u32 %v2247, 7
        %v2249 = vsub.s32 2, %v2248
        %v2250 = vrot.slane %v2116, %v2249
        %v2251 = vmul.f32 %v2242, %v2246
        %v2252 = vmul.f32 %v2239, %v2250
        %2253 = vrot.lane.b32.xlu0 %v2189, 1
        %v2254 = vpop.permute.xlu0 %2253
        %2256 = vrot.lane.b32.xlu0 %v2188, 1
        %v2257 = vpop.permute.xlu0 %2256
        %v2258 = vsel %vm1439, %v2257, %v2254
        %v2261 = vsel %vm1439, %v2254, %v2257
        %v2262 = vlaneseq
        %v2263 = vshrl.u32 %v2262, 7
        %v2264 = vsub.s32 3, %v2263
        %v2265 = vrot.slane %v2115, %v2264
        %v2266 = vlaneseq
        %v2267 = vshrl.u32 %v2266, 7
        %v2268 = vsub.s32 3, %v2267
        %v2269 = vrot.slane %v2116, %v2268
        %v2270 = vmul.f32 %v2261, %v2265
        %v2271 = vmul.f32 %v2258, %v2269
        %2272 = vrot.lane.b32.xlu0 %v2188, 127
        %v2273 = vpop.permute.xlu0 %2272
        %2274 = vrot.lane.b32.xlu0 %v2189, 127
        %v2275 = vpop.permute.xlu0 %2274
        %vm2276 = vcmask 1039360
        %v2277 = vsel %vm2276, %v2273, %v2275
        %v2281 = vsel %vm2276, %v2275, %v2273
        %v2282 = vlaneseq
        %v2283 = vshrl.u32 %v2282, 7
        %v2284 = vsub.s32 5, %v2283
        %v2285 = vrot.slane %v2115, %v2284
        %v2286 = vlaneseq
        %v2287 = vshrl.u32 %v2286, 7
        %v2288 = vsub.s32 5, %v2287
        %v2289 = vrot.slane %v2116, %v2288
        %v2290 = vmul.f32 %v2277, %v2285
        %v2291 = vmul.f32 %v2281, %v2289
        %2292 = vrot.lane.b32.xlu0 %v2188, 113
        %v2293 = vpop.permute.xlu0 %2292
        %2294 = vrot.lane.b32.xlu0 %v2189, 113
        %v2295 = vpop.permute.xlu0 %2294
        %vm2296 = vcmask 924672
        %v2297 = vsel %vm2296, %v2293, %v2295
        %v2301 = vsel %vm2296, %v2295, %v2293
        %v2302 = vlaneseq
        %v2303 = vshrl.u32 %v2302, 7
        %v2304 = vsub.s32 6, %v2303
        %v2305 = vrot.slane %v2115, %v2304
        %v2306 = vlaneseq
        %v2307 = vshrl.u32 %v2306, 7
        %v2308 = vsub.s32 6, %v2307
        %v2309 = vrot.slane %v2116, %v2308
        %v2310 = vmul.f32 %v2297, %v2305
        %v2311 = vmul.f32 %v2301, %v2309
        %2312 = vrot.lane.b32.xlu0 %v2188, 112
        %v2313 = vpop.permute.xlu0 %2312
        %2314 = vrot.lane.b32.xlu0 %v2189, 112
        %v2315 = vpop.permute.xlu0 %2314
        %vm2316 = vcmask 916480
        %v2317 = vsel %vm2316, %v2313, %v2315
        %v2321 = vsel %vm2316, %v2315, %v2313
        %v2322 = vlaneseq
        %v2323 = vshrl.u32 %v2322, 7
        %v2324 = vsub.s32 7, %v2323
        %v2325 = vrot.slane %v2115, %v2324
        %v2326 = vlaneseq
        %v2327 = vshrl.u32 %v2326, 7
        %v2328 = vsub.s32 7, %v2327
        %v2329 = vrot.slane %v2116, %v2328
        %v2330 = vmul.f32 %v2317, %v2325
        %v2331 = vmul.f32 %v2321, %v2329
        %2332 = vrot.lane.b32.xlu0 %v2188, 111
        %v2333 = vpop.permute.xlu0 %2332
        %2334 = vrot.lane.b32.xlu0 %v2189, 111
        %v2335 = vpop.permute.xlu0 %2334
        %vm2336 = vcmask 908288
        %v2337 = vsel %vm2336, %v2333, %v2335
        %v2341 = vsel %vm2336, %v2335, %v2333
        %v2342 = vlaneseq
        %v2343 = vshrl.u32 %v2342, 7
        %v2344 = vsub.s32 0, %v2343
        %v2345 = vrot.slane %v2117, %v2344
        %v2346 = vlaneseq
        %v2347 = vshrl.u32 %v2346, 7
        %v2348 = vsub.s32 0, %v2347
        %v2349 = vrot.slane %v2118, %v2348
        %v2350 = vmul.f32 %v2337, %v2345
        %v2351 = vmul.f32 %v2341, %v2349
        %v2352 = vpack.c.bf16 %v2231, %v2212
        %v2353 = vpack.c.bf16 %v2232, %v2213
        %v2354 = vpack.c.bf16 %v2270, %v2251
        %v2355 = vpack.c.bf16 %v2271, %v2252
        %v2356 = vpack.c.bf16 %v2290, %v2188
        %v2357 = vpack.c.bf16 %v2291, %v2189
        %v2358 = vpack.c.bf16 %v2330, %v2310
        %v2359 = vpack.c.bf16 %v2331, %v2311
        %v2360 = vpack.c.bf16 %v2350, %v2350
        %v2361 = vpack.c.bf16 %v2351, %v2351
        %2363 = vset.pattern.permute.xlu0 0
        %2364 = vperm.xlu0 %2363, %v2191
        %v2365 = vpop.permute.xlu0 %2364
        %vm2367 = vcmask 588800
        %v2369 = vsel %vm2367, %v2190, 0
        %vm2371 = vcmask 1043456
        %v2373 = vsel %vm2371, %v2360, 0
        %v2376 = vsel %vm2371, %v2361, 0
        %2378 = vmatprep.subr.bf16.mxu0 0
        %2379 = vmatpush1.bf16.msra.mxu0 0
        %2380 = vmatprep.subr.bf16.mxu0 0
        %2381 = vmatpush1.bf16.msra.mxu0 0
        %2382 = vmatprep.subr.bf16.mxu0 0
        %2383 = vmatpush1.bf16.msra.mxu0 0
        %2384 = vmatprep.subr.bf16.mxu0 %v2376
        %2385 = vmatpush1.bf16.msra.mxu0 %v2373
        %2386 = vmatprep.subr.bf16.mxu0 %v2359
        %2387 = vmatpush1.bf16.msra.mxu0 %v2358
        %2388 = vmatprep.subr.bf16.mxu0 %v2357
        %2389 = vmatpush1.bf16.msra.mxu0 %v2356
        %2390 = vmatprep.subr.bf16.mxu0 %v2355
        %2391 = vmatpush1.bf16.msra.mxu0 %v2354
        %2392 = vmatprep.subr.bf16.mxu0 %v2353
        %2393 = vmatpush1.bf16.msra.mxu0 %v2352
        %2394 = vmatprep.subr.bf16.mxu0 0
        %2395 = vmatpush2.bf16.msra.mxu0 0
        %2396 = vmatprep.subr.bf16.mxu0 0
        %2397 = vmatpush2.bf16.msra.mxu0 0
        %2398 = vmatprep.subr.bf16.mxu0 0
        %2399 = vmatpush2.bf16.msra.mxu0 0
        %2400 = vmatprep.subr.bf16.mxu0 0
        %2401 = vmatpush2.bf16.msra.mxu0 0
        %2402 = vmatprep.subr.bf16.mxu0 0
        %2403 = vmatpush2.bf16.msra.mxu0 0
        %2404 = vmatprep.subr.bf16.mxu0 0
        %2405 = vmatpush2.bf16.msra.mxu0 0
        %2406 = vmatprep.subr.bf16.mxu0 0
        %2407 = vmatpush2.bf16.msra.mxu0 0
        %2408 = vmatprep.subr.bf16.mxu0 0
        %2409 = vmatpush2.bf16.msra.mxu0 0
        %2410 = vmatprep.mubr.bf16.mxu0 0
        %2411 = vmatmul.mubr.bf16.gmra.mxu0 %v2369
        %v2412 = vpop.f32.mrf.mxu0
        %v2413 = vadd.f32 %v2365, %v2412
        %v2414 = vpop.f32.mrf.mxu0
        %v2415 = vadd.f32 %v2365, %v2414
        %v2416 = vpop.f32.mrf.mxu0
        %v2417 = vpop.f32.mrf.mxu0
        %2418 = vdwg.mxu0
        %v2419 = vld [vmem:[%s47] sm:$0xff]
        %v2420 = vld [vmem:[%s49] sm:$0xff]
        %v2421 = vadd.f32 %v2413, %v2415
        %2422 = vadd.xlane.f32.xlu0 %v2421
        %v2423 = vpop.xlane.xlu0 %2422
        %v2424 = vrot.slane %v2423, 4
        %v2425 = vadd.f32 %v2423, %v2424
        %v2426 = vrot.slane %v2425, 2
        %v2427 = vadd.f32 %v2425, %v2426
        %v2428 = vrot.slane %v2427, 1
        %v2429 = vadd.f32 %v2427, %v2428
        %s2430 = vtos %v2429
        %v2431 = vrcp.pop 2048.0
        %s2432 = vtos %v2431
        %s2433 = smul.f32 %s2430, %s2432
        %v2434 = vstv %s2433
        %v2435 = vsub.f32 %v2413, %v2434
        %v2436 = vsub.f32 %v2415, %v2434
        %v2437 = vmul.f32 %v2435, %v2435
        %v2438 = vmul.f32 %v2436, %v2436
        %v2439 = vadd.f32 %v2437, %v2438
        %2440 = vadd.xlane.f32.xlu0 %v2439
        %v2441 = vpop.xlane.xlu0 %2440
        %v2442 = vrot.slane %v2441, 4
        %v2443 = vadd.f32 %v2441, %v2442
        %v2444 = vrot.slane %v2443, 2
        %v2445 = vadd.f32 %v2443, %v2444
        %v2446 = vrot.slane %v2445, 1
        %v2447 = vadd.f32 %v2445, %v2446
        %s2448 = vtos %v2447
        %v2449 = vrcp.pop 2048.0
        %s2450 = vtos %v2449
        %s2451 = smul.f32 %s2448, %s2450
        %s2452 = sadd.f32 %s2451, 1e-05
        %v2453 = vstv %s2452
        %v2454 = vrsqrt.pop %v2453
        %s2455 = vtos %v2454
        %v2456 = vstv %s2455
        %v2457 = vmul.f32 %v2435, %v2456
        %v2458 = vmul.f32 %v2436, %v2456
        %2460 = vset.pattern.permute.xlu0 0
        %2461 = vperm.xlu0 %2460, %v2419
        %v2462 = vpop.permute.xlu0 %2461
        %v2464 = vmul.f32 %v2457, %v2462
        %v2465 = vmul.f32 %v2458, %v2462
        %2467 = vset.pattern.permute.xlu0 0
        %2468 = vperm.xlu0 %2467, %v2420
        %v2469 = vpop.permute.xlu0 %2468
        %v2471 = vadd.f32 %v2464, %v2469
        %v2472 = vadd.f32 %v2465, %v2469
        %v2473 = vmul.f32 %v2471, 0.5
        %v2474 = vmul.f32 %v2472, 0.5
        %v2475 = vmul.f32 %v2471, %v1677
        %v2476 = vmul.f32 %v2472, %v1677
        %v2477 = verf.f32.pop %v2475
        %v2478 = verf.f32.pop %v2476
        %v2479 = vadd.f32 %v2477, 1.0
        %v2480 = vadd.f32 %v2478, 1.0
        %v2481 = vmul.f32 %v2473, %v2479
        %v2482 = vmul.f32 %v2474, %v2480
        %v2483 = vld [vmem:[%s51] sm:$0xf]
        %v2484 = vld [vmem:[%s53] sm:$0xff]
        %2486 = vrot.lane.b32.xlu0 %v2482, 17
        %v2487 = vpop.permute.xlu0 %2486
        %2490 = vrot.lane.b32.xlu0 %v2481, 17
        %v2491 = vpop.permute.xlu0 %2490
        %v2492 = vsel %vm2199, %v2491, %v2487
        %v2495 = vsel %vm2199, %v2487, %v2491
        %v2496 = vmul.f32 %v2495, %v2207
        %v2497 = vmul.f32 %v2492, %v2211
        %2498 = vrot.lane.b32.xlu0 %v2482, 16
        %v2499 = vpop.permute.xlu0 %2498
        %2501 = vrot.lane.b32.xlu0 %v2481, 16
        %v2502 = vpop.permute.xlu0 %2501
        %v2503 = vsel %vm1560, %v2502, %v2499
        %v2506 = vsel %vm1560, %v2499, %v2502
        %v2507 = vmul.f32 %v2506, %v2226
        %v2508 = vmul.f32 %v2503, %v2230
        %2509 = vrot.lane.b32.xlu0 %v2482, 15
        %v2510 = vpop.permute.xlu0 %2509
        %2512 = vrot.lane.b32.xlu0 %v2481, 15
        %v2513 = vpop.permute.xlu0 %2512
        %v2514 = vsel %vm2238, %v2513, %v2510
        %v2517 = vsel %vm2238, %v2510, %v2513
        %v2518 = vmul.f32 %v2517, %v2246
        %v2519 = vmul.f32 %v2514, %v2250
        %2520 = vrot.lane.b32.xlu0 %v2482, 1
        %v2521 = vpop.permute.xlu0 %2520
        %2523 = vrot.lane.b32.xlu0 %v2481, 1
        %v2524 = vpop.permute.xlu0 %2523
        %v2525 = vsel %vm1439, %v2524, %v2521
        %v2528 = vsel %vm1439, %v2521, %v2524
        %v2529 = vmul.f32 %v2528, %v2265
        %v2530 = vmul.f32 %v2525, %v2269
        %2531 = vrot.lane.b32.xlu0 %v2481, 127
        %v2532 = vpop.permute.xlu0 %2531
        %2533 = vrot.lane.b32.xlu0 %v2482, 127
        %v2534 = vpop.permute.xlu0 %2533
        %v2535 = vsel %vm2276, %v2532, %v2534
        %v2539 = vsel %vm2276, %v2534, %v2532
        %v2540 = vmul.f32 %v2535, %v2285
        %v2541 = vmul.f32 %v2539, %v2289
        %2542 = vrot.lane.b32.xlu0 %v2481, 113
        %v2543 = vpop.permute.xlu0 %2542
        %2544 = vrot.lane.b32.xlu0 %v2482, 113
        %v2545 = vpop.permute.xlu0 %2544
        %v2546 = vsel %vm2296, %v2543, %v2545
        %v2550 = vsel %vm2296, %v2545, %v2543
        %v2551 = vmul.f32 %v2546, %v2305
        %v2552 = vmul.f32 %v2550, %v2309
        %2553 = vrot.lane.b32.xlu0 %v2481, 112
        %v2554 = vpop.permute.xlu0 %2553
        %2555 = vrot.lane.b32.xlu0 %v2482, 112
        %v2556 = vpop.permute.xlu0 %2555
        %v2557 = vsel %vm2316, %v2554, %v2556
        %v2561 = vsel %vm2316, %v2556, %v2554
        %v2562 = vmul.f32 %v2557, %v2325
        %v2563 = vmul.f32 %v2561, %v2329
        %2564 = vrot.lane.b32.xlu0 %v2481, 111
        %v2565 = vpop.permute.xlu0 %2564
        %2566 = vrot.lane.b32.xlu0 %v2482, 111
        %v2567 = vpop.permute.xlu0 %2566
        %v2568 = vsel %vm2336, %v2565, %v2567
        %v2572 = vsel %vm2336, %v2567, %v2565
        %v2573 = vmul.f32 %v2568, %v2345
        %v2574 = vmul.f32 %v2572, %v2349
        %v2575 = vpack.c.bf16 %v2507, %v2496
        %v2576 = vpack.c.bf16 %v2508, %v2497
        %v2577 = vpack.c.bf16 %v2529, %v2518
        %v2578 = vpack.c.bf16 %v2530, %v2519
        %v2579 = vpack.c.bf16 %v2540, %v2481
        %v2580 = vpack.c.bf16 %v2541, %v2482
        %v2581 = vpack.c.bf16 %v2562, %v2551
        %v2582 = vpack.c.bf16 %v2563, %v2552
        %v2583 = vpack.c.bf16 %v2573, %v2573
        %v2584 = vpack.c.bf16 %v2574, %v2574
        %2586 = vset.pattern.permute.xlu0 0
        %2587 = vperm.xlu0 %2586, %v2484
        %v2588 = vpop.permute.xlu0 %2587
        %v2591 = vsel %vm2367, %v2483, 0
        %v2594 = vsel %vm2371, %v2583, 0
        %v2597 = vsel %vm2371, %v2584, 0
        %2599 = vmatprep.subr.bf16.mxu0 0
        %2600 = vmatpush1.bf16.msra.mxu0 0
        %2601 = vmatprep.subr.bf16.mxu0 0
        %2602 = vmatpush1.bf16.msra.mxu0 0
        %2603 = vmatprep.subr.bf16.mxu0 0
        %2604 = vmatpush1.bf16.msra.mxu0 0
        %2605 = vmatprep.subr.bf16.mxu0 %v2597
        %2606 = vmatpush1.bf16.msra.mxu0 %v2594
        %2607 = vmatprep.subr.bf16.mxu0 %v2582
        %2608 = vmatpush1.bf16.msra.mxu0 %v2581
        %2609 = vmatprep.subr.bf16.mxu0 %v2580
        %2610 = vmatpush1.bf16.msra.mxu0 %v2579
        %2611 = vmatprep.subr.bf16.mxu0 %v2578
        %2612 = vmatpush1.bf16.msra.mxu0 %v2577
        %2613 = vmatprep.subr.bf16.mxu0 %v2576
        %2614 = vmatpush1.bf16.msra.mxu0 %v2575
        %2615 = vmatprep.subr.bf16.mxu0 0
        %2616 = vmatpush2.bf16.msra.mxu0 0
        %2617 = vmatprep.subr.bf16.mxu0 0
        %2618 = vmatpush2.bf16.msra.mxu0 0
        %2619 = vmatprep.subr.bf16.mxu0 0
        %2620 = vmatpush2.bf16.msra.mxu0 0
        %2621 = vmatprep.subr.bf16.mxu0 0
        %2622 = vmatpush2.bf16.msra.mxu0 0
        %2623 = vmatprep.subr.bf16.mxu0 0
        %2624 = vmatpush2.bf16.msra.mxu0 0
        %2625 = vmatprep.subr.bf16.mxu0 0
        %2626 = vmatpush2.bf16.msra.mxu0 0
        %2627 = vmatprep.subr.bf16.mxu0 0
        %2628 = vmatpush2.bf16.msra.mxu0 0
        %2629 = vmatprep.subr.bf16.mxu0 0
        %2630 = vmatpush2.bf16.msra.mxu0 0
        %2631 = vmatprep.mubr.bf16.mxu0 0
        %2632 = vmatmul.mubr.bf16.gmra.mxu0 %v2591
        %v2633 = vpop.f32.mrf.mxu0
        %v2634 = vadd.f32 %v2588, %v2633
        %v2635 = vpop.f32.mrf.mxu0
        %v2636 = vadd.f32 %v2588, %v2635
        %v2637 = vpop.f32.mrf.mxu0
        %v2638 = vpop.f32.mrf.mxu0
        %2639 = vdwg.mxu0
        %v2640 = vld [vmem:[%s55] sm:$0xff]
        %v2641 = vld [vmem:[%s57] sm:$0xff]
        %v2642 = vadd.f32 %v2634, %v2636
        %2643 = vadd.xlane.f32.xlu0 %v2642
        %v2644 = vpop.xlane.xlu0 %2643
        %v2645 = vrot.slane %v2644, 4
        %v2646 = vadd.f32 %v2644, %v2645
        %v2647 = vrot.slane %v2646, 2
        %v2648 = vadd.f32 %v2646, %v2647
        %v2649 = vrot.slane %v2648, 1
        %v2650 = vadd.f32 %v2648, %v2649
        %s2651 = vtos %v2650
        %v2652 = vrcp.pop 2048.0
        %s2653 = vtos %v2652
        %s2654 = smul.f32 %s2651, %s2653
        %v2655 = vstv %s2654
        %v2656 = vsub.f32 %v2634, %v2655
        %v2657 = vsub.f32 %v2636, %v2655
        %v2658 = vmul.f32 %v2656, %v2656
        %v2659 = vmul.f32 %v2657, %v2657
        %v2660 = vadd.f32 %v2658, %v2659
        %2661 = vadd.xlane.f32.xlu0 %v2660
        %v2662 = vpop.xlane.xlu0 %2661
        %v2663 = vrot.slane %v2662, 4
        %v2664 = vadd.f32 %v2662, %v2663
        %v2665 = vrot.slane %v2664, 2
        %v2666 = vadd.f32 %v2664, %v2665
        %v2667 = vrot.slane %v2666, 1
        %v2668 = vadd.f32 %v2666, %v2667
        %s2669 = vtos %v2668
        %v2670 = vrcp.pop 2048.0
        %s2671 = vtos %v2670
        %s2672 = smul.f32 %s2669, %s2671
        %s2673 = sadd.f32 %s2672, 1e-05
        %v2674 = vstv %s2673
        %v2675 = vrsqrt.pop %v2674
        %s2676 = vtos %v2675
        %v2677 = vstv %s2676
        %v2678 = vmul.f32 %v2656, %v2677
        %v2679 = vmul.f32 %v2657, %v2677
        %2681 = vset.pattern.permute.xlu0 0
        %2682 = vperm.xlu0 %2681, %v2640
        %v2683 = vpop.permute.xlu0 %2682
        %v2685 = vmul.f32 %v2678, %v2683
        %v2686 = vmul.f32 %v2679, %v2683
        %2688 = vset.pattern.permute.xlu0 0
        %2689 = vperm.xlu0 %2688, %v2641
        %v2690 = vpop.permute.xlu0 %2689
        %v2692 = vadd.f32 %v2685, %v2690
        %v2693 = vadd.f32 %v2686, %v2690
        %v2694 = vadd.f32 %v2692, %v2188
        %v2695 = vadd.f32 %v2693, %v2189
        %v2696 = vld [vmem:[%s61] sm:$0x3]
        %v2697 = vpack.c.bf16 %v2694, %v2694
        %v2698 = vpack.c.bf16 %v2695, %v2695
        %v2699 = vld [vmem:[%s63] sm:$0xf]
        %2701 = vset.pattern.permute.xlu0 0
        %2702 = vperm.xlu0 %2701, %v2699
        %v2703 = vpop.permute.xlu0 %2702
        %v2706 = vsel %vm1397, %v2696, 0
        %v2709 = vsel %vm2371, %v2697, 0
        %v2712 = vsel %vm2371, %v2698, 0
        %2714 = vmatprep.subr.bf16.mxu0 0
        %2715 = vmatpush1.bf16.msra.mxu0 0
        %2716 = vmatprep.subr.bf16.mxu0 0
        %2717 = vmatpush1.bf16.msra.mxu0 0
        %2718 = vmatprep.subr.bf16.mxu0 0
        %2719 = vmatpush1.bf16.msra.mxu0 0
        %2720 = vmatprep.subr.bf16.mxu0 0
        %2721 = vmatpush1.bf16.msra.mxu0 0
        %2722 = vmatprep.subr.bf16.mxu0 0
        %2723 = vmatpush1.bf16.msra.mxu0 0
        %2724 = vmatprep.subr.bf16.mxu0 0
        %2725 = vmatpush1.bf16.msra.mxu0 0
        %2726 = vmatprep.subr.bf16.mxu0 0
        %2727 = vmatpush1.bf16.msra.mxu0 0
        %2728 = vmatprep.subr.bf16.mxu0 %v2712
        %2729 = vmatpush1.bf16.msra.mxu0 %v2709
        %2730 = vmatprep.subr.bf16.mxu0 0
        %2731 = vmatpush2.bf16.msra.mxu0 0
        %2732 = vmatprep.subr.bf16.mxu0 0
        %2733 = vmatpush2.bf16.msra.mxu0 0
        %2734 = vmatprep.subr.bf16.mxu0 0
        %2735 = vmatpush2.bf16.msra.mxu0 0
        %2736 = vmatprep.subr.bf16.mxu0 0
        %2737 = vmatpush2.bf16.msra.mxu0 0
        %2738 = vmatprep.subr.bf16.mxu0 0
        %2739 = vmatpush2.bf16.msra.mxu0 0
        %2740 = vmatprep.subr.bf16.mxu0 0
        %2741 = vmatpush2.bf16.msra.mxu0 0
        %2742 = vmatprep.subr.bf16.mxu0 0
        %2743 = vmatpush2.bf16.msra.mxu0 0
        %2744 = vmatprep.subr.bf16.mxu0 0
        %2745 = vmatpush2.bf16.msra.mxu0 0
        %2746 = vmatprep.mubr.bf16.mxu0 0
        %2747 = vmatmul.mubr.bf16.gmra.mxu0 %v2706
        %v2748 = vpop.f32.mrf.mxu0
        %v2749 = vadd.f32 %v2703, %v2748
        %v2750 = vpop.f32.mrf.mxu0
        %v2751 = vadd.f32 %v2703, %v2750
        %v2752 = vpop.f32.mrf.mxu0
        %v2753 = vpop.f32.mrf.mxu0
        %2754 = vdwg.mxu0
        %v2755 = vld [vmem:[#allocation2] sm:$0xff]
        %v2756 = vld [vmem:[#allocation2 + $0x8] sm:$0xff]
        %v2757 = vld [vmem:[#allocation2 + $0x10] sm:$0xff]
        %v2758 = vld [vmem:[#allocation2 + $0x18] sm:$0xff]
        %v2759 = vld [vmem:[#allocation2 + $0x20] sm:$0xff]
        %v2760 = vld [vmem:[#allocation2 + $0x28] sm:$0xff]
        %v2761 = vld [vmem:[#allocation2 + $0x30] sm:$0xff]
        %v2762 = vld [vmem:[#allocation2 + $0x38] sm:$0xff]
        %v2763 = vld [vmem:[#allocation2 + $0x40] sm:$0xff]
        %v2764 = vld [vmem:[#allocation2 + $0x48] sm:$0xff]
        %v2765 = vld [vmem:[#allocation2 + $0x50] sm:$0xff]
        %v2766 = vld [vmem:[#allocation2 + $0x58] sm:$0xff]
        %v2767 = vld [vmem:[#allocation2 + $0x60] sm:$0xff]
        %v2768 = vld [vmem:[#allocation2 + $0x68] sm:$0xff]
        %v2769 = vld [vmem:[#allocation2 + $0x70] sm:$0xff]
        %v2770 = vld [vmem:[#allocation2 + $0x78] sm:$0xff]
        %v2771 = vld [vmem:[#allocation2 + $0x80] sm:$0xff]
        %v2772 = vld [vmem:[#allocation2 + $0x88] sm:$0xff]
        %v2773 = vld [vmem:[#allocation2 + $0x90] sm:$0xff]
        %v2774 = vld [vmem:[#allocation2 + $0x98] sm:$0xff]
        %v2775 = vld [vmem:[#allocation2 + $0xa0] sm:$0xff]
        %v2776 = vld [vmem:[#allocation2 + $0xa8] sm:$0xff]
        %v2777 = vld [vmem:[#allocation2 + $0xb0] sm:$0xff]
        %v2778 = vld [vmem:[#allocation2 + $0xb8] sm:$0xff]
        %v2779 = vld [vmem:[#allocation2 + $0xc0] sm:$0xff]
        %v2780 = vld [vmem:[#allocation2 + $0xc8] sm:$0xff]
        %v2781 = vld [vmem:[#allocation2 + $0xd0] sm:$0xff]
        %v2782 = vld [vmem:[#allocation2 + $0xd8] sm:$0xff]
        %v2783 = vld [vmem:[#allocation2 + $0xe0] sm:$0xff]
        %v2784 = vld [vmem:[#allocation2 + $0xe8] sm:$0xff]
        %v2785 = vld [vmem:[#allocation2 + $0xf0] sm:$0xff]
        %v2786 = vld [vmem:[#allocation2 + $0xf8] sm:$0xff]
        %v2787 = vld [vmem:[#allocation2 + $0x100] sm:$0xff]
        %v2788 = vld [vmem:[#allocation2 + $0x108] sm:$0xff]
        %v2789 = vld [vmem:[#allocation2 + $0x110] sm:$0xff]
        %v2790 = vld [vmem:[#allocation2 + $0x118] sm:$0xff]
        %v2791 = vld [vmem:[#allocation2 + $0x120] sm:$0xff]
        %v2792 = vld [vmem:[#allocation2 + $0x128] sm:$0xff]
        %v2793 = vld [vmem:[#allocation2 + $0x130] sm:$0xff]
        %v2794 = vld [vmem:[#allocation2 + $0x138] sm:$0xff]
        %v2795 = vld [vmem:[#allocation2 + $0x140] sm:$0xff]
        %v2796 = vld [vmem:[#allocation2 + $0x148] sm:$0xff]
        %v2797 = vld [vmem:[#allocation2 + $0x150] sm:$0xff]
        %v2798 = vld [vmem:[#allocation2 + $0x158] sm:$0xff]
        %v2799 = vld [vmem:[#allocation2 + $0x160] sm:$0xff]
        %v2800 = vld [vmem:[#allocation2 + $0x168] sm:$0xff]
        %v2801 = vld [vmem:[#allocation2 + $0x170] sm:$0xff]
        %v2802 = vld [vmem:[#allocation2 + $0x178] sm:$0xff]
        %v2803 = vld [vmem:[#allocation2 + $0x180] sm:$0xff]
        %v2804 = vld [vmem:[#allocation2 + $0x188] sm:$0xff]
        %v2805 = vld [vmem:[#allocation2 + $0x190] sm:$0xff]
        %v2806 = vld [vmem:[#allocation2 + $0x198] sm:$0xff]
        %v2807 = vld [vmem:[#allocation2 + $0x1a0] sm:$0xff]
        %v2808 = vld [vmem:[#allocation2 + $0x1a8] sm:$0xff]
        %v2809 = vld [vmem:[#allocation2 + $0x1b0] sm:$0xff]
        %v2810 = vld [vmem:[#allocation2 + $0x1b8] sm:$0xff]
        %v2811 = vld [vmem:[#allocation2 + $0x1c0] sm:$0xff]
        %v2812 = vld [vmem:[#allocation2 + $0x1c8] sm:$0xff]
        %v2813 = vld [vmem:[#allocation2 + $0x1d0] sm:$0xff]
        %v2814 = vld [vmem:[#allocation2 + $0x1d8] sm:$0xff]
        %v2815 = vld [vmem:[#allocation2 + $0x1e0] sm:$0xff]
        %v2816 = vld [vmem:[#allocation2 + $0x1e8] sm:$0xff]
        %v2817 = vld [vmem:[#allocation2 + $0x1f0] sm:$0xff]
        %v2818 = vld [vmem:[#allocation2 + $0x1f8] sm:$0xff]
        %v2819 = vld [vmem:[#allocation2 + $0x200] sm:$0xff]
        %v2820 = vld [vmem:[#allocation2 + $0x208] sm:$0xff]
        %v2821 = vld [vmem:[#allocation2 + $0x210] sm:$0xff]
        %v2822 = vld [vmem:[#allocation2 + $0x218] sm:$0xff]
        %v2823 = vld [vmem:[#allocation2 + $0x220] sm:$0xff]
        %v2824 = vld [vmem:[#allocation2 + $0x228] sm:$0xff]
        %v2825 = vld [vmem:[#allocation2 + $0x230] sm:$0xff]
        %v2826 = vld [vmem:[#allocation2 + $0x238] sm:$0xff]
        %v2827 = vld [vmem:[#allocation2 + $0x240] sm:$0xff]
        %v2828 = vld [vmem:[#allocation2 + $0x248] sm:$0xff]
        %v2829 = vld [vmem:[#allocation2 + $0x250] sm:$0xff]
        %v2830 = vld [vmem:[#allocation2 + $0x258] sm:$0xff]
        %v2831 = vld [vmem:[#allocation2 + $0x260] sm:$0xff]
        %v2832 = vld [vmem:[#allocation2 + $0x268] sm:$0xff]
        %v2833 = vld [vmem:[#allocation2 + $0x270] sm:$0xff]
        %v2834 = vld [vmem:[#allocation2 + $0x278] sm:$0xff]
        %v2835 = vld [vmem:[#allocation2 + $0x280] sm:$0xff]
        %v2836 = vld [vmem:[#allocation2 + $0x288] sm:$0xff]
        %v2837 = vld [vmem:[#allocation2 + $0x290] sm:$0xff]
        %v2838 = vld [vmem:[#allocation2 + $0x298] sm:$0xff]
        %v2839 = vld [vmem:[#allocation2 + $0x2a0] sm:$0xff]
        %v2840 = vld [vmem:[#allocation2 + $0x2a8] sm:$0xff]
        %v2841 = vld [vmem:[#allocation2 + $0x2b0] sm:$0xff]
        %v2842 = vld [vmem:[#allocation2 + $0x2b8] sm:$0xff]
        %v2843 = vld [vmem:[#allocation2 + $0x2c0] sm:$0xff]
        %v2844 = vld [vmem:[#allocation2 + $0x2c8] sm:$0xff]
        %v2845 = vld [vmem:[#allocation2 + $0x2d0] sm:$0xff]
        %v2846 = vld [vmem:[#allocation2 + $0x2d8] sm:$0xff]
        %v2847 = vld [vmem:[#allocation2 + $0x2e0] sm:$0xff]
        %v2848 = vld [vmem:[#allocation2 + $0x2e8] sm:$0xff]
        %v2849 = vld [vmem:[#allocation2 + $0x2f0] sm:$0xff]
        %v2850 = vld [vmem:[#allocation2 + $0x2f8] sm:$0xff]
        %v2851 = vld [vmem:[#allocation2 + $0x300] sm:$0xff]
        %v2852 = vld [vmem:[#allocation2 + $0x308] sm:$0xff]
        %v2853 = vld [vmem:[#allocation2 + $0x310] sm:$0xff]
        %v2854 = vld [vmem:[#allocation2 + $0x318] sm:$0xff]
        %v2855 = vld [vmem:[#allocation2 + $0x320] sm:$0xff]
        %v2856 = vld [vmem:[#allocation2 + $0x328] sm:$0xff]
        %v2857 = vld [vmem:[#allocation2 + $0x330] sm:$0xff]
        %v2858 = vld [vmem:[#allocation2 + $0x338] sm:$0xff]
        %v2859 = vld [vmem:[#allocation2 + $0x340] sm:$0xff]
        %v2860 = vld [vmem:[#allocation2 + $0x348] sm:$0xff]
        %v2861 = vld [vmem:[#allocation2 + $0x350] sm:$0xff]
        %v2862 = vld [vmem:[#allocation2 + $0x358] sm:$0xff]
        %v2863 = vld [vmem:[#allocation2 + $0x360] sm:$0xff]
        %v2864 = vld [vmem:[#allocation2 + $0x368] sm:$0xff]
        %v2865 = vld [vmem:[#allocation2 + $0x370] sm:$0xff]
        %v2866 = vld [vmem:[#allocation2 + $0x378] sm:$0xff]
        %v2867 = vld [vmem:[#allocation2 + $0x380] sm:$0xff]
        %v2868 = vld [vmem:[#allocation2 + $0x388] sm:$0xff]
        %v2869 = vld [vmem:[#allocation2 + $0x390] sm:$0xff]
        %v2870 = vld [vmem:[#allocation2 + $0x398] sm:$0xff]
        %v2871 = vld [vmem:[#allocation2 + $0x3a0] sm:$0xff]
        %v2872 = vld [vmem:[#allocation2 + $0x3a8] sm:$0xff]
        %v2873 = vld [vmem:[#allocation2 + $0x3b0] sm:$0xff]
        %v2874 = vld [vmem:[#allocation2 + $0x3b8] sm:$0xff]
        %v2875 = vld [vmem:[#allocation2 + $0x3c0] sm:$0xff]
        %v2876 = vld [vmem:[#allocation2 + $0x3c8] sm:$0xff]
        %v2877 = vld [vmem:[#allocation2 + $0x3d0] sm:$0xff]
        %v2878 = vld [vmem:[#allocation2 + $0x3d8] sm:$0xff]
        %v2879 = vld [vmem:[#allocation2 + $0x3e0] sm:$0xff]
        %v2880 = vld [vmem:[#allocation2 + $0x3e8] sm:$0xff]
        %v2881 = vld [vmem:[#allocation2 + $0x3f0] sm:$0xff]
        %v2882 = vld [vmem:[#allocation2 + $0x3f8] sm:$0xff]
        %v2883 = vld [vmem:[#allocation2 + $0x400] sm:$0xff]
        %v2884 = vld [vmem:[#allocation2 + $0x408] sm:$0xff]
        %v2885 = vld [vmem:[#allocation2 + $0x410] sm:$0xff]
        %v2886 = vld [vmem:[#allocation2 + $0x418] sm:$0xff]
        %v2887 = vld [vmem:[#allocation2 + $0x420] sm:$0xff]
        %v2888 = vld [vmem:[#allocation2 + $0x428] sm:$0xff]
        %v2889 = vld [vmem:[#allocation2 + $0x430] sm:$0xff]
        %v2890 = vld [vmem:[#allocation2 + $0x438] sm:$0xff]
        %v2891 = vld [vmem:[#allocation2 + $0x440] sm:$0xff]
        %v2892 = vld [vmem:[#allocation2 + $0x448] sm:$0xff]
        %v2893 = vld [vmem:[#allocation2 + $0x450] sm:$0xff]
        %v2894 = vld [vmem:[#allocation2 + $0x458] sm:$0xff]
        %v2895 = vld [vmem:[#allocation2 + $0x460] sm:$0xff]
        %v2896 = vld [vmem:[#allocation2 + $0x468] sm:$0xff]
        %v2897 = vld [vmem:[#allocation2 + $0x470] sm:$0xff]
        %v2898 = vld [vmem:[#allocation2 + $0x478] sm:$0xff]
        %v2899 = vld [vmem:[#allocation2 + $0x480] sm:$0xff]
        %v2900 = vld [vmem:[#allocation2 + $0x488] sm:$0xff]
        %v2901 = vld [vmem:[#allocation2 + $0x490] sm:$0xff]
        %v2902 = vld [vmem:[#allocation2 + $0x498] sm:$0xff]
        %v2903 = vld [vmem:[#allocation2 + $0x4a0] sm:$0xff]
        %v2904 = vld [vmem:[#allocation2 + $0x4a8] sm:$0xff]
        %v2905 = vld [vmem:[#allocation2 + $0x4b0] sm:$0xff]
        %v2906 = vld [vmem:[#allocation2 + $0x4b8] sm:$0xff]
        %v2907 = vld [vmem:[#allocation2 + $0x4c0] sm:$0xff]
        %v2908 = vld [vmem:[#allocation2 + $0x4c8] sm:$0xff]
        %v2909 = vld [vmem:[#allocation2 + $0x4d0] sm:$0xff]
        %v2910 = vld [vmem:[#allocation2 + $0x4d8] sm:$0xff]
        %v2911 = vld [vmem:[#allocation2 + $0x4e0] sm:$0xff]
        %v2912 = vld [vmem:[#allocation2 + $0x4e8] sm:$0xff]
        %v2913 = vld [vmem:[#allocation2 + $0x4f0] sm:$0xff]
        %v2914 = vld [vmem:[#allocation2 + $0x4f8] sm:$0xff]
        %v2915 = vld [vmem:[#allocation2 + $0x500] sm:$0xff]
        %v2916 = vld [vmem:[#allocation2 + $0x508] sm:$0xff]
        %v2917 = vld [vmem:[#allocation2 + $0x510] sm:$0xff]
        %v2918 = vld [vmem:[#allocation2 + $0x518] sm:$0xff]
        %v2919 = vld [vmem:[#allocation2 + $0x520] sm:$0xff]
        %v2920 = vld [vmem:[#allocation2 + $0x528] sm:$0xff]
        %v2921 = vld [vmem:[#allocation2 + $0x530] sm:$0xff]
        %v2922 = vld [vmem:[#allocation2 + $0x538] sm:$0xff]
        %v2923 = vld [vmem:[#allocation2 + $0x540] sm:$0xff]
        %v2924 = vld [vmem:[#allocation2 + $0x548] sm:$0xff]
        %v2925 = vld [vmem:[#allocation2 + $0x550] sm:$0xff]
        %v2926 = vld [vmem:[#allocation2 + $0x558] sm:$0xff]
        %v2927 = vld [vmem:[#allocation2 + $0x560] sm:$0xff]
        %v2928 = vld [vmem:[#allocation2 + $0x568] sm:$0xff]
        %v2929 = vld [vmem:[#allocation2 + $0x570] sm:$0xff]
        %v2930 = vld [vmem:[#allocation2 + $0x578] sm:$0xff]
        %v2931 = vld [vmem:[#allocation2 + $0x580] sm:$0xff]
        %v2932 = vld [vmem:[#allocation2 + $0x588] sm:$0xff]
        %v2933 = vld [vmem:[#allocation2 + $0x590] sm:$0xff]
        %v2934 = vld [vmem:[#allocation2 + $0x598] sm:$0xff]
        %v2935 = vld [vmem:[#allocation2 + $0x5a0] sm:$0xff]
        %v2936 = vld [vmem:[#allocation2 + $0x5a8] sm:$0xff]
        %v2937 = vld [vmem:[#allocation2 + $0x5b0] sm:$0xff]
        %v2938 = vld [vmem:[#allocation2 + $0x5b8] sm:$0xff]
        %v2939 = vld [vmem:[#allocation2 + $0x5c0] sm:$0xff]
        %v2940 = vld [vmem:[#allocation2 + $0x5c8] sm:$0xff]
        %v2941 = vld [vmem:[#allocation2 + $0x5d0] sm:$0xff]
        %v2942 = vld [vmem:[#allocation2 + $0x5d8] sm:$0xff]
        %v2943 = vld [vmem:[#allocation2 + $0x5e0] sm:$0xff]
        %v2944 = vld [vmem:[#allocation2 + $0x5e8] sm:$0xff]
        %v2945 = vld [vmem:[#allocation2 + $0x5f0] sm:$0xff]
        %v2946 = vld [vmem:[#allocation2 + $0x5f8] sm:$0xff]
        %v2947 = vld [vmem:[#allocation2 + $0x600] sm:$0xff]
        %v2948 = vld [vmem:[#allocation2 + $0x608] sm:$0xff]
        %v2949 = vld [vmem:[#allocation2 + $0x610] sm:$0xff]
        %v2950 = vld [vmem:[#allocation2 + $0x618] sm:$0xff]
        %v2951 = vld [vmem:[#allocation2 + $0x620] sm:$0xff]
        %v2952 = vld [vmem:[#allocation2 + $0x628] sm:$0xff]
        %v2953 = vld [vmem:[#allocation2 + $0x630] sm:$0xff]
        %v2954 = vld [vmem:[#allocation2 + $0x638] sm:$0xff]
        %v2955 = vld [vmem:[#allocation2 + $0x640] sm:$0xff]
        %v2956 = vld [vmem:[#allocation2 + $0x648] sm:$0xff]
        %v2957 = vld [vmem:[#allocation2 + $0x650] sm:$0xff]
        %v2958 = vld [vmem:[#allocation2 + $0x658] sm:$0xff]
        %v2959 = vld [vmem:[#allocation2 + $0x660] sm:$0xff]
        %v2960 = vld [vmem:[#allocation2 + $0x668] sm:$0xff]
        %v2961 = vld [vmem:[#allocation2 + $0x670] sm:$0xff]
        %v2962 = vld [vmem:[#allocation2 + $0x678] sm:$0xff]
        %v2963 = vld [vmem:[#allocation2 + $0x680] sm:$0xff]
        %v2964 = vld [vmem:[#allocation2 + $0x688] sm:$0xff]
        %v2965 = vld [vmem:[#allocation2 + $0x690] sm:$0xff]
        %v2966 = vld [vmem:[#allocation2 + $0x698] sm:$0xff]
        %v2967 = vld [vmem:[#allocation2 + $0x6a0] sm:$0xff]
        %v2968 = vld [vmem:[#allocation2 + $0x6a8] sm:$0xff]
        %v2969 = vld [vmem:[#allocation2 + $0x6b0] sm:$0xff]
        %v2970 = vld [vmem:[#allocation2 + $0x6b8] sm:$0xff]
        %v2971 = vld [vmem:[#allocation2 + $0x6c0] sm:$0xff]
        %v2972 = vld [vmem:[#allocation2 + $0x6c8] sm:$0xff]
        %v2973 = vld [vmem:[#allocation2 + $0x6d0] sm:$0xff]
        %v2974 = vld [vmem:[#allocation2 + $0x6d8] sm:$0xff]
        %v2975 = vld [vmem:[#allocation2 + $0x6e0] sm:$0xff]
        %v2976 = vld [vmem:[#allocation2 + $0x6e8] sm:$0xff]
        %v2977 = vld [vmem:[#allocation2 + $0x6f0] sm:$0xff]
        %v2978 = vld [vmem:[#allocation2 + $0x6f8] sm:$0xff]
        %v2979 = vld [vmem:[#allocation2 + $0x700] sm:$0xff]
        %v2980 = vld [vmem:[#allocation2 + $0x708] sm:$0xff]
        %v2981 = vld [vmem:[#allocation2 + $0x710] sm:$0xff]
        %v2982 = vld [vmem:[#allocation2 + $0x718] sm:$0xff]
        %v2983 = vld [vmem:[#allocation2 + $0x720] sm:$0xff]
        %v2984 = vld [vmem:[#allocation2 + $0x728] sm:$0xff]
        %v2985 = vld [vmem:[#allocation2 + $0x730] sm:$0xff]
        %v2986 = vld [vmem:[#allocation2 + $0x738] sm:$0xff]
        %v2987 = vld [vmem:[#allocation2 + $0x740] sm:$0xff]
        %v2988 = vld [vmem:[#allocation2 + $0x748] sm:$0xff]
        %v2989 = vld [vmem:[#allocation2 + $0x750] sm:$0xff]
        %v2990 = vld [vmem:[#allocation2 + $0x758] sm:$0xff]
        %v2991 = vld [vmem:[#allocation2 + $0x760] sm:$0xff]
        %v2992 = vld [vmem:[#allocation2 + $0x768] sm:$0xff]
        %v2993 = vld [vmem:[#allocation2 + $0x770] sm:$0xff]
        %v2994 = vld [vmem:[#allocation2 + $0x778] sm:$0xff]
        %v2995 = vld [vmem:[#allocation2 + $0x780] sm:$0xff]
        %v2996 = vld [vmem:[#allocation2 + $0x788] sm:$0xff]
        %v2997 = vld [vmem:[#allocation2 + $0x790] sm:$0xff]
        %v2998 = vld [vmem:[#allocation2 + $0x798] sm:$0xff]
        %v2999 = vld [vmem:[#allocation2 + $0x7a0] sm:$0xff]
        %v3000 = vld [vmem:[#allocation2 + $0x7a8] sm:$0xff]
        %v3001 = vld [vmem:[#allocation2 + $0x7b0] sm:$0xff]
        %v3002 = vld [vmem:[#allocation2 + $0x7b8] sm:$0xff]
        %v3003 = vld [vmem:[#allocation2 + $0x7c0] sm:$0xff]
        %v3004 = vld [vmem:[#allocation2 + $0x7c8] sm:$0xff]
        %v3005 = vld [vmem:[#allocation2 + $0x7d0] sm:$0xff]
        %v3006 = vld [vmem:[#allocation2 + $0x7d8] sm:$0xff]
        %v3007 = vld [vmem:[#allocation2 + $0x7e0] sm:$0xff]
        %v3008 = vld [vmem:[#allocation2 + $0x7e8] sm:$0xff]
        %v3009 = vld [vmem:[#allocation2 + $0x7f0] sm:$0xff]
        %v3010 = vld [vmem:[#allocation2 + $0x7f8] sm:$0xff]
        %3011 = vmatprep.subr.mxu0 %v2876
        %3012 = vmatpush1.msra.mxu0 %v2875
        %3013 = vmatprep.subr.mxu0 %v2868
        %3014 = vmatpush1.msra.mxu0 %v2867
        %3015 = vmatprep.subr.mxu0 %v2860
        %3016 = vmatpush1.msra.mxu0 %v2859
        %3017 = vmatprep.subr.mxu0 %v2852
        %3018 = vmatpush1.msra.mxu0 %v2851
        %3019 = vmatprep.subr.mxu0 %v2844
        %3020 = vmatpush1.msra.mxu0 %v2843
        %3021 = vmatprep.subr.mxu0 %v2836
        %3022 = vmatpush1.msra.mxu0 %v2835
        %3023 = vmatprep.subr.mxu0 %v2828
        %3024 = vmatpush1.msra.mxu0 %v2827
        %3025 = vmatprep.subr.mxu0 %v2820
        %3026 = vmatpush1.msra.mxu0 %v2819
        %3027 = vmatprep.subr.mxu0 %v2812
        %3028 = vmatpush1.msra.mxu0 %v2811
        %3029 = vmatprep.subr.mxu0 %v2804
        %3030 = vmatpush1.msra.mxu0 %v2803
        %3031 = vmatprep.subr.mxu0 %v2796
        %3032 = vmatpush1.msra.mxu0 %v2795
        %3033 = vmatprep.subr.mxu0 %v2788
        %3034 = vmatpush1.msra.mxu0 %v2787
        %3035 = vmatprep.subr.mxu0 %v2780
        %3036 = vmatpush1.msra.mxu0 %v2779
        %3037 = vmatprep.subr.mxu0 %v2772
        %3038 = vmatpush1.msra.mxu0 %v2771
        %3039 = vmatprep.subr.mxu0 %v2764
        %3040 = vmatpush1.msra.mxu0 %v2763
        %3041 = vmatprep.subr.mxu0 %v2756
        %3042 = vmatpush1.msra.mxu0 %v2755
        %3043 = vmatprep.subr.mxu0 %v3004
        %3044 = vmatpush2.msra.mxu0 %v3003
        %3045 = vmatprep.subr.mxu0 %v2996
        %3046 = vmatpush2.msra.mxu0 %v2995
        %3047 = vmatprep.subr.mxu0 %v2988
        %3048 = vmatpush2.msra.mxu0 %v2987
        %3049 = vmatprep.subr.mxu0 %v2980
        %3050 = vmatpush2.msra.mxu0 %v2979
        %3051 = vmatprep.subr.mxu0 %v2972
        %3052 = vmatpush2.msra.mxu0 %v2971
        %3053 = vmatprep.subr.mxu0 %v2964
        %3054 = vmatpush2.msra.mxu0 %v2963
        %3055 = vmatprep.subr.mxu0 %v2956
        %3056 = vmatpush2.msra.mxu0 %v2955
        %3057 = vmatprep.subr.mxu0 %v2948
        %3058 = vmatpush2.msra.mxu0 %v2947
        %3059 = vmatprep.subr.mxu0 %v2940
        %3060 = vmatpush2.msra.mxu0 %v2939
        %3061 = vmatprep.subr.mxu0 %v2932
        %3062 = vmatpush2.msra.mxu0 %v2931
        %3063 = vmatprep.subr.mxu0 %v2924
        %3064 = vmatpush2.msra.mxu0 %v2923
        %3065 = vmatprep.subr.mxu0 %v2916
        %3066 = vmatpush2.msra.mxu0 %v2915
        %3067 = vmatprep.subr.mxu0 %v2908
        %3068 = vmatpush2.msra.mxu0 %v2907
        %3069 = vmatprep.subr.mxu0 %v2900
        %3070 = vmatpush2.msra.mxu0 %v2899
        %3071 = vmatprep.subr.mxu0 %v2892
        %3072 = vmatpush2.msra.mxu0 %v2891
        %3073 = vmatprep.subr.mxu0 %v2884
        %3074 = vmatpush2.msra.mxu0 %v2883
        %3075 = vmatprep.mubr.f32.mxu0 %v2751
        %3076 = vmatmul.mubr.f32.gmra.mxu0 %v2749
        %v3077 = vpop.f32.mrf.mxu0
        %v3078 = vadd.f32 0.0, %v3077
        %v3079 = vpop.f32.mrf.mxu0
        %v3080 = vadd.f32 0.0, %v3079
        %3081 = vdwg.mxu0
        %3082 = vmatprep.subr.mxu0 %v2878
        %3083 = vmatpush1.msra.mxu0 %v2877
        %3084 = vmatprep.subr.mxu0 %v2870
        %3085 = vmatpush1.msra.mxu0 %v2869
        %3086 = vmatprep.subr.mxu0 %v2862
        %3087 = vmatpush1.msra.mxu0 %v2861
        %3088 = vmatprep.subr.mxu0 %v2854
        %3089 = vmatpush1.msra.mxu0 %v2853
        %3090 = vmatprep.subr.mxu0 %v2846
        %3091 = vmatpush1.msra.mxu0 %v2845
        %3092 = vmatprep.subr.mxu0 %v2838
        %3093 = vmatpush1.msra.mxu0 %v2837
        %3094 = vmatprep.subr.mxu0 %v2830
        %3095 = vmatpush1.msra.mxu0 %v2829
        %3096 = vmatprep.subr.mxu0 %v2822
        %3097 = vmatpush1.msra.mxu0 %v2821
        %3098 = vmatprep.subr.mxu0 %v2814
        %3099 = vmatpush1.msra.mxu0 %v2813
        %3100 = vmatprep.subr.mxu0 %v2806
        %3101 = vmatpush1.msra.mxu0 %v2805
        %3102 = vmatprep.subr.mxu0 %v2798
        %3103 = vmatpush1.msra.mxu0 %v2797
        %3104 = vmatprep.subr.mxu0 %v2790
        %3105 = vmatpush1.msra.mxu0 %v2789
        %3106 = vmatprep.subr.mxu0 %v2782
        %3107 = vmatpush1.msra.mxu0 %v2781
        %3108 = vmatprep.subr.mxu0 %v2774
        %3109 = vmatpush1.msra.mxu0 %v2773
        %3110 = vmatprep.subr.mxu0 %v2766
        %3111 = vmatpush1.msra.mxu0 %v2765
        %3112 = vmatprep.subr.mxu0 %v2758
        %3113 = vmatpush1.msra.mxu0 %v2757
        %3114 = vmatprep.subr.mxu0 %v3006
        %3115 = vmatpush2.msra.mxu0 %v3005
        %3116 = vmatprep.subr.mxu0 %v2998
        %3117 = vmatpush2.msra.mxu0 %v2997
        %3118 = vmatprep.subr.mxu0 %v2990
        %3119 = vmatpush2.msra.mxu0 %v2989
        %3120 = vmatprep.subr.mxu0 %v2982
        %3121 = vmatpush2.msra.mxu0 %v2981
        %3122 = vmatprep.subr.mxu0 %v2974
        %3123 = vmatpush2.msra.mxu0 %v2973
        %3124 = vmatprep.subr.mxu0 %v2966
        %3125 = vmatpush2.msra.mxu0 %v2965
        %3126 = vmatprep.subr.mxu0 %v2958
        %3127 = vmatpush2.msra.mxu0 %v2957
        %3128 = vmatprep.subr.mxu0 %v2950
        %3129 = vmatpush2.msra.mxu0 %v2949
        %3130 = vmatprep.subr.mxu0 %v2942
        %3131 = vmatpush2.msra.mxu0 %v2941
        %3132 = vmatprep.subr.mxu0 %v2934
        %3133 = vmatpush2.msra.mxu0 %v2933
        %3134 = vmatprep.subr.mxu0 %v2926
        %3135 = vmatpush2.msra.mxu0 %v2925
        %3136 = vmatprep.subr.mxu0 %v2918
        %3137 = vmatpush2.msra.mxu0 %v2917
        %3138 = vmatprep.subr.mxu0 %v2910
        %3139 = vmatpush2.msra.mxu0 %v2909
        %3140 = vmatprep.subr.mxu0 %v2902
        %3141 = vmatpush2.msra.mxu0 %v2901
        %3142 = vmatprep.subr.mxu0 %v2894
        %3143 = vmatpush2.msra.mxu0 %v2893
        %3144 = vmatprep.subr.mxu0 %v2886
        %3145 = vmatpush2.msra.mxu0 %v2885
        %3146 = vmatprep.mubr.f32.mxu0 %v2751
        %3147 = vmatmul.mubr.f32.gmra.mxu0 %v2749
        %v3148 = vpop.f32.mrf.mxu0
        %v3149 = vadd.f32 0.0, %v3148
        %v3150 = vpop.f32.mrf.mxu0
        %v3151 = vadd.f32 0.0, %v3150
        %3152 = vdwg.mxu0
        %3153 = vmatprep.subr.mxu0 %v2880
        %3154 = vmatpush1.msra.mxu0 %v2879
        %3155 = vmatprep.subr.mxu0 %v2872
        %3156 = vmatpush1.msra.mxu0 %v2871
        %3157 = vmatprep.subr.mxu0 %v2864
        %3158 = vmatpush1.msra.mxu0 %v2863
        %3159 = vmatprep.subr.mxu0 %v2856
        %3160 = vmatpush1.msra.mxu0 %v2855
        %3161 = vmatprep.subr.mxu0 %v2848
        %3162 = vmatpush1.msra.mxu0 %v2847
        %3163 = vmatprep.subr.mxu0 %v2840
        %3164 = vmatpush1.msra.mxu0 %v2839
        %3165 = vmatprep.subr.mxu0 %v2832
        %3166 = vmatpush1.msra.mxu0 %v2831
        %3167 = vmatprep.subr.mxu0 %v2824
        %3168 = vmatpush1.msra.mxu0 %v2823
        %3169 = vmatprep.subr.mxu0 %v2816
        %3170 = vmatpush1.msra.mxu0 %v2815
        %3171 = vmatprep.subr.mxu0 %v2808
        %3172 = vmatpush1.msra.mxu0 %v2807
        %3173 = vmatprep.subr.mxu0 %v2800
        %3174 = vmatpush1.msra.mxu0 %v2799
        %3175 = vmatprep.subr.mxu0 %v2792
        %3176 = vmatpush1.msra.mxu0 %v2791
        %3177 = vmatprep.subr.mxu0 %v2784
        %3178 = vmatpush1.msra.mxu0 %v2783
        %3179 = vmatprep.subr.mxu0 %v2776
        %3180 = vmatpush1.msra.mxu0 %v2775
        %3181 = vmatprep.subr.mxu0 %v2768
        %3182 = vmatpush1.msra.mxu0 %v2767
        %3183 = vmatprep.subr.mxu0 %v2760
        %3184 = vmatpush1.msra.mxu0 %v2759
        %3185 = vmatprep.subr.mxu0 %v3008
        %3186 = vmatpush2.msra.mxu0 %v3007
        %3187 = vmatprep.subr.mxu0 %v3000
        %3188 = vmatpush2.msra.mxu0 %v2999
        %3189 = vmatprep.subr.mxu0 %v2992
        %3190 = vmatpush2.msra.mxu0 %v2991
        %3191 = vmatprep.subr.mxu0 %v2984
        %3192 = vmatpush2.msra.mxu0 %v2983
        %3193 = vmatprep.subr.mxu0 %v2976
        %3194 = vmatpush2.msra.mxu0 %v2975
        %3195 = vmatprep.subr.mxu0 %v2968
        %3196 = vmatpush2.msra.mxu0 %v2967
        %3197 = vmatprep.subr.mxu0 %v2960
        %3198 = vmatpush2.msra.mxu0 %v2959
        %3199 = vmatprep.subr.mxu0 %v2952
        %3200 = vmatpush2.msra.mxu0 %v2951
        %3201 = vmatprep.subr.mxu0 %v2944
        %3202 = vmatpush2.msra.mxu0 %v2943
        %3203 = vmatprep.subr.mxu0 %v2936
        %3204 = vmatpush2.msra.mxu0 %v2935
        %3205 = vmatprep.subr.mxu0 %v2928
        %3206 = vmatpush2.msra.mxu0 %v2927
        %3207 = vmatprep.subr.mxu0 %v2920
        %3208 = vmatpush2.msra.mxu0 %v2919
        %3209 = vmatprep.subr.mxu0 %v2912
        %3210 = vmatpush2.msra.mxu0 %v2911
        %3211 = vmatprep.subr.mxu0 %v2904
        %3212 = vmatpush2.msra.mxu0 %v2903
        %3213 = vmatprep.subr.mxu0 %v2896
        %3214 = vmatpush2.msra.mxu0 %v2895
        %3215 = vmatprep.subr.mxu0 %v2888
        %3216 = vmatpush2.msra.mxu0 %v2887
        %3217 = vmatprep.mubr.f32.mxu0 %v2751
        %3218 = vmatmul.mubr.f32.gmra.mxu0 %v2749
        %v3219 = vpop.f32.mrf.mxu0
        %v3220 = vadd.f32 0.0, %v3219
        %v3221 = vpop.f32.mrf.mxu0
        %v3222 = vadd.f32 0.0, %v3221
        %3223 = vdwg.mxu0
        %3224 = vmatprep.subr.mxu0 %v2882
        %3225 = vmatpush1.msra.mxu0 %v2881
        %3226 = vmatprep.subr.mxu0 %v2874
        %3227 = vmatpush1.msra.mxu0 %v2873
        %3228 = vmatprep.subr.mxu0 %v2866
        %3229 = vmatpush1.msra.mxu0 %v2865
        %3230 = vmatprep.subr.mxu0 %v2858
        %3231 = vmatpush1.msra.mxu0 %v2857
        %3232 = vmatprep.subr.mxu0 %v2850
        %3233 = vmatpush1.msra.mxu0 %v2849
        %3234 = vmatprep.subr.mxu0 %v2842
        %3235 = vmatpush1.msra.mxu0 %v2841
        %3236 = vmatprep.subr.mxu0 %v2834
        %3237 = vmatpush1.msra.mxu0 %v2833
        %3238 = vmatprep.subr.mxu0 %v2826
        %3239 = vmatpush1.msra.mxu0 %v2825
        %3240 = vmatprep.subr.mxu0 %v2818
        %3241 = vmatpush1.msra.mxu0 %v2817
        %3242 = vmatprep.subr.mxu0 %v2810
        %3243 = vmatpush1.msra.mxu0 %v2809
        %3244 = vmatprep.subr.mxu0 %v2802
        %3245 = vmatpush1.msra.mxu0 %v2801
        %3246 = vmatprep.subr.mxu0 %v2794
        %3247 = vmatpush1.msra.mxu0 %v2793
        %3248 = vmatprep.subr.mxu0 %v2786
        %3249 = vmatpush1.msra.mxu0 %v2785
        %3250 = vmatprep.subr.mxu0 %v2778
        %3251 = vmatpush1.msra.mxu0 %v2777
        %3252 = vmatprep.subr.mxu0 %v2770
        %3253 = vmatpush1.msra.mxu0 %v2769
        %3254 = vmatprep.subr.mxu0 %v2762
        %3255 = vmatpush1.msra.mxu0 %v2761
        %3256 = vmatprep.subr.mxu0 %v3010
        %3257 = vmatpush2.msra.mxu0 %v3009
        %3258 = vmatprep.subr.mxu0 %v3002
        %3259 = vmatpush2.msra.mxu0 %v3001
        %3260 = vmatprep.subr.mxu0 %v2994
        %3261 = vmatpush2.msra.mxu0 %v2993
        %3262 = vmatprep.subr.mxu0 %v2986
        %3263 = vmatpush2.msra.mxu0 %v2985
        %3264 = vmatprep.subr.mxu0 %v2978
        %3265 = vmatpush2.msra.mxu0 %v2977
        %3266 = vmatprep.subr.mxu0 %v2970
        %3267 = vmatpush2.msra.mxu0 %v2969
        %3268 = vmatprep.subr.mxu0 %v2962
        %3269 = vmatpush2.msra.mxu0 %v2961
        %3270 = vmatprep.subr.mxu0 %v2954
        %3271 = vmatpush2.msra.mxu0 %v2953
        %3272 = vmatprep.subr.mxu0 %v2946
        %3273 = vmatpush2.msra.mxu0 %v2945
        %3274 = vmatprep.subr.mxu0 %v2938
        %3275 = vmatpush2.msra.mxu0 %v2937
        %3276 = vmatprep.subr.mxu0 %v2930
        %3277 = vmatpush2.msra.mxu0 %v2929
        %3278 = vmatprep.subr.mxu0 %v2922
        %3279 = vmatpush2.msra.mxu0 %v2921
        %3280 = vmatprep.subr.mxu0 %v2914
        %3281 = vmatpush2.msra.mxu0 %v2913
        %3282 = vmatprep.subr.mxu0 %v2906
        %3283 = vmatpush2.msra.mxu0 %v2905
        %3284 = vmatprep.subr.mxu0 %v2898
        %3285 = vmatpush2.msra.mxu0 %v2897
        %3286 = vmatprep.subr.mxu0 %v2890
        %3287 = vmatpush2.msra.mxu0 %v2889
        %3288 = vmatprep.mubr.f32.mxu0 %v2751
        %3289 = vmatmul.mubr.f32.gmra.mxu0 %v2749
        %v3290 = vpop.f32.mrf.mxu0
        %v3291 = vadd.f32 0.0, %v3290
        %v3292 = vpop.f32.mrf.mxu0
        %v3293 = vadd.f32 0.0, %v3292
        %3294 = vdwg.mxu0
        %v3295 = vmul.f32 %v3078, 0.5
        %v3296 = vmul.f32 %v3080, 0.5
        %v3297 = vmul.f32 %v3149, 0.5
        %v3298 = vmul.f32 %v3151, 0.5
        %v3299 = vmul.f32 %v3220, 0.5
        %v3300 = vmul.f32 %v3222, 0.5
        %v3301 = vmul.f32 %v3291, 0.5
        %v3302 = vmul.f32 %v3293, 0.5
        %v3303 = vmul.f32 %v3078, %v1677
        %v3304 = vmul.f32 %v3080, %v1677
        %v3305 = vmul.f32 %v3149, %v1677
        %v3306 = vmul.f32 %v3151, %v1677
        %v3307 = vmul.f32 %v3220, %v1677
        %v3308 = vmul.f32 %v3222, %v1677
        %v3309 = vmul.f32 %v3291, %v1677
        %v3310 = vmul.f32 %v3293, %v1677
        %v3311 = verf.f32.pop %v3303
        %v3312 = verf.f32.pop %v3304
        %v3313 = verf.f32.pop %v3305
        %v3314 = verf.f32.pop %v3306
        %v3315 = verf.f32.pop %v3307
        %v3316 = verf.f32.pop %v3308
        %v3317 = verf.f32.pop %v3309
        %v3318 = verf.f32.pop %v3310
        %v3319 = vadd.f32 %v3311, 1.0
        %v3320 = vadd.f32 %v3312, 1.0
        %v3321 = vadd.f32 %v3313, 1.0
        %v3322 = vadd.f32 %v3314, 1.0
        %v3323 = vadd.f32 %v3315, 1.0
        %v3324 = vadd.f32 %v3316, 1.0
        %v3325 = vadd.f32 %v3317, 1.0
        %v3326 = vadd.f32 %v3318, 1.0
        %v3327 = vmul.f32 %v3295, %v3319
        %v3328 = vmul.f32 %v3296, %v3320
        %v3329 = vmul.f32 %v3297, %v3321
        %v3330 = vmul.f32 %v3298, %v3322
        %v3331 = vmul.f32 %v3299, %v3323
        %v3332 = vmul.f32 %v3300, %v3324
        %v3333 = vmul.f32 %v3301, %v3325
        %v3334 = vmul.f32 %v3302, %v3326
        %v3335 = vld [vmem:[%s67] sm:$0x3]
        %v3336 = vpack.c.bf16 %v3327, %v3327
        %v3337 = vpack.c.bf16 %v3328, %v3328
        %v3338 = vpack.c.bf16 %v3329, %v3329
        %v3339 = vpack.c.bf16 %v3330, %v3330
        %v3340 = vpack.c.bf16 %v3331, %v3331
        %v3341 = vpack.c.bf16 %v3332, %v3332
        %v3342 = vpack.c.bf16 %v3333, %v3333
        %v3343 = vpack.c.bf16 %v3334, %v3334
        %v3344 = vld [vmem:[%s69] sm:$0xf]
        %3346 = vset.pattern.permute.xlu0 0
        %3347 = vperm.xlu0 %3346, %v3344
        %v3348 = vpop.permute.xlu0 %3347
        %vm3350 = vcmask 31744
        %v3352 = vsel %vm3350, %v3335, 0
        %vm3354 = vcmask 1041408
        %v3356 = vsel %vm3354, %v3336, 0
        %v3359 = vsel %vm3354, %v3337, 0
        %v3362 = vsel %vm3354, %v3338, 0
        %v3365 = vsel %vm3354, %v3339, 0
        %v3368 = vsel %vm3354, %v3340, 0
        %v3371 = vsel %vm3354, %v3341, 0
        %v3374 = vsel %vm3354, %v3342, 0
        %v3377 = vsel %vm3354, %v3343, 0
        %3379 = vmatprep.subr.bf16.mxu0 0
        %3380 = vmatpush1.bf16.msra.mxu0 0
        %3381 = vmatprep.subr.bf16.mxu0 0
        %3382 = vmatpush1.bf16.msra.mxu0 0
        %3383 = vmatprep.subr.bf16.mxu0 0
        %3384 = vmatpush1.bf16.msra.mxu0 0
        %3385 = vmatprep.subr.bf16.mxu0 0
        %3386 = vmatpush1.bf16.msra.mxu0 0
        %3387 = vmatprep.subr.bf16.mxu0 0
        %3388 = vmatpush1.bf16.msra.mxu0 0
        %3389 = vmatprep.subr.bf16.mxu0 0
        %3390 = vmatpush1.bf16.msra.mxu0 0
        %3391 = vmatprep.subr.bf16.mxu0 0
        %3392 = vmatpush1.bf16.msra.mxu0 0
        %3393 = vmatprep.subr.bf16.mxu0 %v3359
        %3394 = vmatpush1.bf16.msra.mxu0 %v3356
        %3395 = vmatprep.subr.bf16.mxu0 0
        %3396 = vmatpush2.bf16.msra.mxu0 0
        %3397 = vmatprep.subr.bf16.mxu0 0
        %3398 = vmatpush2.bf16.msra.mxu0 0
        %3399 = vmatprep.subr.bf16.mxu0 0
        %3400 = vmatpush2.bf16.msra.mxu0 0
        %3401 = vmatprep.subr.bf16.mxu0 0
        %3402 = vmatpush2.bf16.msra.mxu0 0
        %3403 = vmatprep.subr.bf16.mxu0 0
        %3404 = vmatpush2.bf16.msra.mxu0 0
        %3405 = vmatprep.subr.bf16.mxu0 0
        %3406 = vmatpush2.bf16.msra.mxu0 0
        %3407 = vmatprep.subr.bf16.mxu0 0
        %3408 = vmatpush2.bf16.msra.mxu0 0
        %3409 = vmatprep.subr.bf16.mxu0 0
        %3410 = vmatpush2.bf16.msra.mxu0 0
        %3411 = vmatprep.mubr.bf16.mxu0 0
        %3412 = vmatmul.mubr.bf16.gmra.mxu0 %v3352
        %v3413 = vpop.f32.mrf.mxu0
        %v3414 = vadd.f32 %v3348, %v3413
        %v3415 = vpop.f32.mrf.mxu0
        %v3416 = vadd.f32 %v3348, %v3415
        %v3417 = vpop.f32.mrf.mxu0
        %v3418 = vpop.f32.mrf.mxu0
        %3419 = vdwg.mxu0
        %3420 = vmatprep.subr.bf16.mxu0 0
        %3421 = vmatpush1.bf16.msra.mxu0 0
        %3422 = vmatprep.subr.bf16.mxu0 0
        %3423 = vmatpush1.bf16.msra.mxu0 0
        %3424 = vmatprep.subr.bf16.mxu0 0
        %3425 = vmatpush1.bf16.msra.mxu0 0
        %3426 = vmatprep.subr.bf16.mxu0 0
        %3427 = vmatpush1.bf16.msra.mxu0 0
        %3428 = vmatprep.subr.bf16.mxu0 0
        %3429 = vmatpush1.bf16.msra.mxu0 0
        %3430 = vmatprep.subr.bf16.mxu0 0
        %3431 = vmatpush1.bf16.msra.mxu0 0
        %3432 = vmatprep.subr.bf16.mxu0 0
        %3433 = vmatpush1.bf16.msra.mxu0 0
        %3434 = vmatprep.subr.bf16.mxu0 %v3365
        %3435 = vmatpush1.bf16.msra.mxu0 %v3362
        %3436 = vmatprep.subr.bf16.mxu0 0
        %3437 = vmatpush2.bf16.msra.mxu0 0
        %3438 = vmatprep.subr.bf16.mxu0 0
        %3439 = vmatpush2.bf16.msra.mxu0 0
        %3440 = vmatprep.subr.bf16.mxu0 0
        %3441 = vmatpush2.bf16.msra.mxu0 0
        %3442 = vmatprep.subr.bf16.mxu0 0
        %3443 = vmatpush2.bf16.msra.mxu0 0
        %3444 = vmatprep.subr.bf16.mxu0 0
        %3445 = vmatpush2.bf16.msra.mxu0 0
        %3446 = vmatprep.subr.bf16.mxu0 0
        %3447 = vmatpush2.bf16.msra.mxu0 0
        %3448 = vmatprep.subr.bf16.mxu0 0
        %3449 = vmatpush2.bf16.msra.mxu0 0
        %3450 = vmatprep.subr.bf16.mxu0 0
        %3451 = vmatpush2.bf16.msra.mxu0 0
        %3452 = vmatprep.mubr.bf16.mxu0 0
        %3453 = vmatmul.mubr.bf16.gmra.mxu0 %v3352
        %v3454 = vpop.f32.mrf.mxu0
        %v3455 = vadd.f32 %v3348, %v3454
        %v3456 = vpop.f32.mrf.mxu0
        %v3457 = vadd.f32 %v3348, %v3456
        %v3458 = vpop.f32.mrf.mxu0
        %v3459 = vpop.f32.mrf.mxu0
        %3460 = vdwg.mxu0
        %3461 = vmatprep.subr.bf16.mxu0 0
        %3462 = vmatpush1.bf16.msra.mxu0 0
        %3463 = vmatprep.subr.bf16.mxu0 0
        %3464 = vmatpush1.bf16.msra.mxu0 0
        %3465 = vmatprep.subr.bf16.mxu0 0
        %3466 = vmatpush1.bf16.msra.mxu0 0
        %3467 = vmatprep.subr.bf16.mxu0 0
        %3468 = vmatpush1.bf16.msra.mxu0 0
        %3469 = vmatprep.subr.bf16.mxu0 0
        %3470 = vmatpush1.bf16.msra.mxu0 0
        %3471 = vmatprep.subr.bf16.mxu0 0
        %3472 = vmatpush1.bf16.msra.mxu0 0
        %3473 = vmatprep.subr.bf16.mxu0 0
        %3474 = vmatpush1.bf16.msra.mxu0 0
        %3475 = vmatprep.subr.bf16.mxu0 %v3371
        %3476 = vmatpush1.bf16.msra.mxu0 %v3368
        %3477 = vmatprep.subr.bf16.mxu0 0
        %3478 = vmatpush2.bf16.msra.mxu0 0
        %3479 = vmatprep.subr.bf16.mxu0 0
        %3480 = vmatpush2.bf16.msra.mxu0 0
        %3481 = vmatprep.subr.bf16.mxu0 0
        %3482 = vmatpush2.bf16.msra.mxu0 0
        %3483 = vmatprep.subr.bf16.mxu0 0
        %3484 = vmatpush2.bf16.msra.mxu0 0
        %3485 = vmatprep.subr.bf16.mxu0 0
        %3486 = vmatpush2.bf16.msra.mxu0 0
        %3487 = vmatprep.subr.bf16.mxu0 0
        %3488 = vmatpush2.bf16.msra.mxu0 0
        %3489 = vmatprep.subr.bf16.mxu0 0
        %3490 = vmatpush2.bf16.msra.mxu0 0
        %3491 = vmatprep.subr.bf16.mxu0 0
        %3492 = vmatpush2.bf16.msra.mxu0 0
        %3493 = vmatprep.mubr.bf16.mxu0 0
        %3494 = vmatmul.mubr.bf16.gmra.mxu0 %v3352
        %v3495 = vpop.f32.mrf.mxu0
        %v3496 = vadd.f32 %v3348, %v3495
        %v3497 = vpop.f32.mrf.mxu0
        %v3498 = vadd.f32 %v3348, %v3497
        %v3499 = vpop.f32.mrf.mxu0
        %v3500 = vpop.f32.mrf.mxu0
        %3501 = vdwg.mxu0
        %3502 = vmatprep.subr.bf16.mxu0 0
        %3503 = vmatpush1.bf16.msra.mxu0 0
        %3504 = vmatprep.subr.bf16.mxu0 0
        %3505 = vmatpush1.bf16.msra.mxu0 0
        %3506 = vmatprep.subr.bf16.mxu0 0
        %3507 = vmatpush1.bf16.msra.mxu0 0
        %3508 = vmatprep.subr.bf16.mxu0 0
        %3509 = vmatpush1.bf16.msra.mxu0 0
        %3510 = vmatprep.subr.bf16.mxu0 0
        %3511 = vmatpush1.bf16.msra.mxu0 0
        %3512 = vmatprep.subr.bf16.mxu0 0
        %3513 = vmatpush1.bf16.msra.mxu0 0
        %3514 = vmatprep.subr.bf16.mxu0 0
        %3515 = vmatpush1.bf16.msra.mxu0 0
        %3516 = vmatprep.subr.bf16.mxu0 %v3377
        %3517 = vmatpush1.bf16.msra.mxu0 %v3374
        %3518 = vmatprep.subr.bf16.mxu0 0
        %3519 = vmatpush2.bf16.msra.mxu0 0
        %3520 = vmatprep.subr.bf16.mxu0 0
        %3521 = vmatpush2.bf16.msra.mxu0 0
        %3522 = vmatprep.subr.bf16.mxu0 0
        %3523 = vmatpush2.bf16.msra.mxu0 0
        %3524 = vmatprep.subr.bf16.mxu0 0
        %3525 = vmatpush2.bf16.msra.mxu0 0
        %3526 = vmatprep.subr.bf16.mxu0 0
        %3527 = vmatpush2.bf16.msra.mxu0 0
        %3528 = vmatprep.subr.bf16.mxu0 0
        %3529 = vmatpush2.bf16.msra.mxu0 0
        %3530 = vmatprep.subr.bf16.mxu0 0
        %3531 = vmatpush2.bf16.msra.mxu0 0
        %3532 = vmatprep.subr.bf16.mxu0 0
        %3533 = vmatpush2.bf16.msra.mxu0 0
        %3534 = vmatprep.mubr.bf16.mxu0 0
        %3535 = vmatmul.mubr.bf16.gmra.mxu0 %v3352
        %v3536 = vpop.f32.mrf.mxu0
        %v3537 = vadd.f32 %v3348, %v3536
        %v3538 = vpop.f32.mrf.mxu0
        %v3539 = vadd.f32 %v3348, %v3538
        %v3540 = vpop.f32.mrf.mxu0
        %v3541 = vpop.f32.mrf.mxu0
        %3542 = vdwg.mxu0
        %v3543 = vld [vmem:[%s71] sm:$0xf]
        %v3544 = vld [vmem:[%s73] sm:$0xf]
        %v3545 = vsel %vm2371, %v3414, 0.0
        %v3546 = vsel %vm2371, %v3416, 0.0
        %v3547 = vadd.f32 %v3545, %v3546
        %v3548 = vsel %vm2371, %v3455, 0.0
        %v3549 = vadd.f32 %v3547, %v3548
        %v3550 = vsel %vm2371, %v3457, 0.0
        %v3551 = vadd.f32 %v3549, %v3550
        %v3552 = vsel %vm2371, %v3496, 0.0
        %v3553 = vadd.f32 %v3551, %v3552
        %v3554 = vsel %vm2371, %v3498, 0.0
        %v3555 = vadd.f32 %v3553, %v3554
        %v3556 = vsel %vm2371, %v3537, 0.0
        %v3557 = vadd.f32 %v3555, %v3556
        %v3558 = vsel %vm2371, %v3539, 0.0
        %v3559 = vadd.f32 %v3557, %v3558
        %3560 = vadd.xlane.f32.xlu0 %v3559
        %v3561 = vpop.xlane.xlu0 %3560
        %v3562 = vrot.slane %v3561, 4
        %v3563 = vadd.f32 %v3561, %v3562
        %v3564 = vrot.slane %v3563, 2
        %v3565 = vadd.f32 %v3563, %v3564
        %v3566 = vrot.slane %v3565, 1
        %v3567 = vadd.f32 %v3565, %v3566
        %s3568 = vtos %v3567
        %v3569 = vrcp.pop 4096.0
        %s3570 = vtos %v3569
        %s3571 = smul.f32 %s3568, %s3570
        %v3572 = vstv %s3571
        %v3573 = vsub.f32 %v3414, %v3572
        %v3574 = vsub.f32 %v3416, %v3572
        %v3575 = vsub.f32 %v3455, %v3572
        %v3576 = vsub.f32 %v3457, %v3572
        %v3577 = vsub.f32 %v3496, %v3572
        %v3578 = vsub.f32 %v3498, %v3572
        %v3579 = vsub.f32 %v3537, %v3572
        %v3580 = vsub.f32 %v3539, %v3572
        %v3581 = vmul.f32 %v3573, %v3573
        %v3582 = vmul.f32 %v3574, %v3574
        %v3583 = vmul.f32 %v3575, %v3575
        %v3584 = vmul.f32 %v3576, %v3576
        %v3585 = vmul.f32 %v3577, %v3577
        %v3586 = vmul.f32 %v3578, %v3578
        %v3587 = vmul.f32 %v3579, %v3579
        %v3588 = vmul.f32 %v3580, %v3580
        %v3589 = vsel %vm2371, %v3581, 0.0
        %v3590 = vsel %vm2371, %v3582, 0.0
        %v3591 = vadd.f32 %v3589, %v3590
        %v3592 = vsel %vm2371, %v3583, 0.0
        %v3593 = vadd.f32 %v3591, %v3592
        %v3594 = vsel %vm2371, %v3584, 0.0
        %v3595 = vadd.f32 %v3593, %v3594
        %v3596 = vsel %vm2371, %v3585, 0.0
        %v3597 = vadd.f32 %v3595, %v3596
        %v3598 = vsel %vm2371, %v3586, 0.0
        %v3599 = vadd.f32 %v3597, %v3598
        %v3600 = vsel %vm2371, %v3587, 0.0
        %v3601 = vadd.f32 %v3599, %v3600
        %v3602 = vsel %vm2371, %v3588, 0.0
        %v3603 = vadd.f32 %v3601, %v3602
        %3604 = vadd.xlane.f32.xlu0 %v3603
        %v3605 = vpop.xlane.xlu0 %3604
        %v3606 = vrot.slane %v3605, 4
        %v3607 = vadd.f32 %v3605, %v3606
        %v3608 = vrot.slane %v3607, 2
        %v3609 = vadd.f32 %v3607, %v3608
        %v3610 = vrot.slane %v3609, 1
        %v3611 = vadd.f32 %v3609, %v3610
        %s3612 = vtos %v3611
        %v3613 = vrcp.pop 4096.0
        %s3614 = vtos %v3613
        %s3615 = smul.f32 %s3612, %s3614
        %s3616 = sadd.f32 %s3615, 1e-05
        %v3617 = vstv %s3616
        %v3618 = vrsqrt.pop %v3617
        %s3619 = vtos %v3618
        %v3620 = vstv %s3619
        %v3621 = vmul.f32 %v3573, %v3620
        %v3622 = vmul.f32 %v3574, %v3620
        %v3623 = vmul.f32 %v3575, %v3620
        %v3624 = vmul.f32 %v3576, %v3620
        %v3625 = vmul.f32 %v3577, %v3620
        %v3626 = vmul.f32 %v3578, %v3620
        %v3627 = vmul.f32 %v3579, %v3620
        %v3628 = vmul.f32 %v3580, %v3620
        %3630 = vset.pattern.permute.xlu0 0
        %3631 = vperm.xlu0 %3630, %v3543
        %v3632 = vpop.permute.xlu0 %3631
        %v3634 = vmul.f32 %v3621, %v3632
        %v3635 = vmul.f32 %v3622, %v3632
        %v3636 = vmul.f32 %v3623, %v3632
        %v3637 = vmul.f32 %v3624, %v3632
        %v3638 = vmul.f32 %v3625, %v3632
        %v3639 = vmul.f32 %v3626, %v3632
        %v3640 = vmul.f32 %v3627, %v3632
        %v3641 = vmul.f32 %v3628, %v3632
        %3643 = vset.pattern.permute.xlu0 0
        %3644 = vperm.xlu0 %3643, %v3544
        %v3645 = vpop.permute.xlu0 %3644
        %v3647 = vadd.f32 %v3634, %v3645
        %v3648 = vadd.f32 %v3635, %v3645
        %v3649 = vadd.f32 %v3636, %v3645
        %v3650 = vadd.f32 %v3637, %v3645
        %v3651 = vadd.f32 %v3638, %v3645
        %v3652 = vadd.f32 %v3639, %v3645
        %v3653 = vadd.f32 %v3640, %v3645
        %v3654 = vadd.f32 %v3641, %v3645
        %v3655 = vmul.f32 %v3647, 0.5
        %v3656 = vmul.f32 %v3648, 0.5
        %v3657 = vmul.f32 %v3649, 0.5
        %v3658 = vmul.f32 %v3650, 0.5
        %v3659 = vmul.f32 %v3651, 0.5
        %v3660 = vmul.f32 %v3652, 0.5
        %v3661 = vmul.f32 %v3653, 0.5
        %v3662 = vmul.f32 %v3654, 0.5
        %v3663 = vmul.f32 %v3647, %v1677
        %v3664 = vmul.f32 %v3648, %v1677
        %v3665 = vmul.f32 %v3649, %v1677
        %v3666 = vmul.f32 %v3650, %v1677
        %v3667 = vmul.f32 %v3651, %v1677
        %v3668 = vmul.f32 %v3652, %v1677
        %v3669 = vmul.f32 %v3653, %v1677
        %v3670 = vmul.f32 %v3654, %v1677
        %v3671 = verf.f32.pop %v3663
        %v3672 = verf.f32.pop %v3664
        %v3673 = verf.f32.pop %v3665
        %v3674 = verf.f32.pop %v3666
        %v3675 = verf.f32.pop %v3667
        %v3676 = verf.f32.pop %v3668
        %v3677 = verf.f32.pop %v3669
        %v3678 = verf.f32.pop %v3670
        %v3679 = vadd.f32 %v3671, 1.0
        %v3680 = vadd.f32 %v3672, 1.0
        %v3681 = vadd.f32 %v3673, 1.0
        %v3682 = vadd.f32 %v3674, 1.0
        %v3683 = vadd.f32 %v3675, 1.0
        %v3684 = vadd.f32 %v3676, 1.0
        %v3685 = vadd.f32 %v3677, 1.0
        %v3686 = vadd.f32 %v3678, 1.0
        %v3687 = vmul.f32 %v3655, %v3679
        %v3688 = vmul.f32 %v3656, %v3680
        %v3689 = vmul.f32 %v3657, %v3681
        %v3690 = vmul.f32 %v3658, %v3682
        %v3691 = vmul.f32 %v3659, %v3683
        %v3692 = vmul.f32 %v3660, %v3684
        %v3693 = vmul.f32 %v3661, %v3685
        %v3694 = vmul.f32 %v3662, %v3686
        %v3695 = vld [vmem:[%s75] sm:$0x3]
        %v3696 = vpack.c.bf16 %v3687, %v3687
        %v3697 = vpack.c.bf16 %v3688, %v3688
        %v3698 = vpack.c.bf16 %v3689, %v3689
        %v3699 = vpack.c.bf16 %v3690, %v3690
        %v3700 = vpack.c.bf16 %v3691, %v3691
        %v3701 = vpack.c.bf16 %v3692, %v3692
        %v3702 = vpack.c.bf16 %v3693, %v3693
        %v3703 = vpack.c.bf16 %v3694, %v3694
        %v3704 = vld [vmem:[%s77] sm:$0xf]
        %3706 = vset.pattern.permute.xlu0 0
        %3707 = vperm.xlu0 %3706, %v3704
        %v3708 = vpop.permute.xlu0 %3707
        %v3711 = vsel %vm3350, %v3695, 0
        %v3714 = vsel %vm3354, %v3696, 0
        %v3717 = vsel %vm3354, %v3697, 0
        %v3720 = vsel %vm3354, %v3698, 0
        %v3723 = vsel %vm3354, %v3699, 0
        %v3726 = vsel %vm3354, %v3700, 0
        %v3729 = vsel %vm3354, %v3701, 0
        %v3732 = vsel %vm3354, %v3702, 0
        %v3735 = vsel %vm3354, %v3703, 0
        %3737 = vmatprep.subr.bf16.mxu0 0
        %3738 = vmatpush1.bf16.msra.mxu0 0
        %3739 = vmatprep.subr.bf16.mxu0 0
        %3740 = vmatpush1.bf16.msra.mxu0 0
        %3741 = vmatprep.subr.bf16.mxu0 0
        %3742 = vmatpush1.bf16.msra.mxu0 0
        %3743 = vmatprep.subr.bf16.mxu0 0
        %3744 = vmatpush1.bf16.msra.mxu0 0
        %3745 = vmatprep.subr.bf16.mxu0 0
        %3746 = vmatpush1.bf16.msra.mxu0 0
        %3747 = vmatprep.subr.bf16.mxu0 0
        %3748 = vmatpush1.bf16.msra.mxu0 0
        %3749 = vmatprep.subr.bf16.mxu0 0
        %3750 = vmatpush1.bf16.msra.mxu0 0
        %3751 = vmatprep.subr.bf16.mxu0 %v3717
        %3752 = vmatpush1.bf16.msra.mxu0 %v3714
        %3753 = vmatprep.subr.bf16.mxu0 0
        %3754 = vmatpush2.bf16.msra.mxu0 0
        %3755 = vmatprep.subr.bf16.mxu0 0
        %3756 = vmatpush2.bf16.msra.mxu0 0
        %3757 = vmatprep.subr.bf16.mxu0 0
        %3758 = vmatpush2.bf16.msra.mxu0 0
        %3759 = vmatprep.subr.bf16.mxu0 0
        %3760 = vmatpush2.bf16.msra.mxu0 0
        %3761 = vmatprep.subr.bf16.mxu0 0
        %3762 = vmatpush2.bf16.msra.mxu0 0
        %3763 = vmatprep.subr.bf16.mxu0 0
        %3764 = vmatpush2.bf16.msra.mxu0 0
        %3765 = vmatprep.subr.bf16.mxu0 0
        %3766 = vmatpush2.bf16.msra.mxu0 0
        %3767 = vmatprep.subr.bf16.mxu0 0
        %3768 = vmatpush2.bf16.msra.mxu0 0
        %3769 = vmatprep.mubr.bf16.mxu0 0
        %3770 = vmatmul.mubr.bf16.gmra.mxu0 %v3711
        %v3771 = vpop.f32.mrf.mxu0
        %v3772 = vadd.f32 %v3708, %v3771
        %v3773 = vpop.f32.mrf.mxu0
        %v3774 = vadd.f32 %v3708, %v3773
        %v3775 = vpop.f32.mrf.mxu0
        %v3776 = vpop.f32.mrf.mxu0
        %3777 = vdwg.mxu0
        %3778 = vmatprep.subr.bf16.mxu0 0
        %3779 = vmatpush1.bf16.msra.mxu0 0
        %3780 = vmatprep.subr.bf16.mxu0 0
        %3781 = vmatpush1.bf16.msra.mxu0 0
        %3782 = vmatprep.subr.bf16.mxu0 0
        %3783 = vmatpush1.bf16.msra.mxu0 0
        %3784 = vmatprep.subr.bf16.mxu0 0
        %3785 = vmatpush1.bf16.msra.mxu0 0
        %3786 = vmatprep.subr.bf16.mxu0 0
        %3787 = vmatpush1.bf16.msra.mxu0 0
        %3788 = vmatprep.subr.bf16.mxu0 0
        %3789 = vmatpush1.bf16.msra.mxu0 0
        %3790 = vmatprep.subr.bf16.mxu0 0
        %3791 = vmatpush1.bf16.msra.mxu0 0
        %3792 = vmatprep.subr.bf16.mxu0 %v3723
        %3793 = vmatpush1.bf16.msra.mxu0 %v3720
        %3794 = vmatprep.subr.bf16.mxu0 0
        %3795 = vmatpush2.bf16.msra.mxu0 0
        %3796 = vmatprep.subr.bf16.mxu0 0
        %3797 = vmatpush2.bf16.msra.mxu0 0
        %3798 = vmatprep.subr.bf16.mxu0 0
        %3799 = vmatpush2.bf16.msra.mxu0 0
        %3800 = vmatprep.subr.bf16.mxu0 0
        %3801 = vmatpush2.bf16.msra.mxu0 0
        %3802 = vmatprep.subr.bf16.mxu0 0
        %3803 = vmatpush2.bf16.msra.mxu0 0
        %3804 = vmatprep.subr.bf16.mxu0 0
        %3805 = vmatpush2.bf16.msra.mxu0 0
        %3806 = vmatprep.subr.bf16.mxu0 0
        %3807 = vmatpush2.bf16.msra.mxu0 0
        %3808 = vmatprep.subr.bf16.mxu0 0
        %3809 = vmatpush2.bf16.msra.mxu0 0
        %3810 = vmatprep.mubr.bf16.mxu0 0
        %3811 = vmatmul.mubr.bf16.gmra.mxu0 %v3711
        %v3812 = vpop.f32.mrf.mxu0
        %v3813 = vadd.f32 %v3708, %v3812
        %v3814 = vpop.f32.mrf.mxu0
        %v3815 = vadd.f32 %v3708, %v3814
        %v3816 = vpop.f32.mrf.mxu0
        %v3817 = vpop.f32.mrf.mxu0
        %3818 = vdwg.mxu0
        %3819 = vmatprep.subr.bf16.mxu0 0
        %3820 = vmatpush1.bf16.msra.mxu0 0
        %3821 = vmatprep.subr.bf16.mxu0 0
        %3822 = vmatpush1.bf16.msra.mxu0 0
        %3823 = vmatprep.subr.bf16.mxu0 0
        %3824 = vmatpush1.bf16.msra.mxu0 0
        %3825 = vmatprep.subr.bf16.mxu0 0
        %3826 = vmatpush1.bf16.msra.mxu0 0
        %3827 = vmatprep.subr.bf16.mxu0 0
        %3828 = vmatpush1.bf16.msra.mxu0 0
        %3829 = vmatprep.subr.bf16.mxu0 0
        %3830 = vmatpush1.bf16.msra.mxu0 0
        %3831 = vmatprep.subr.bf16.mxu0 0
        %3832 = vmatpush1.bf16.msra.mxu0 0
        %3833 = vmatprep.subr.bf16.mxu0 %v3729
        %3834 = vmatpush1.bf16.msra.mxu0 %v3726
        %3835 = vmatprep.subr.bf16.mxu0 0
        %3836 = vmatpush2.bf16.msra.mxu0 0
        %3837 = vmatprep.subr.bf16.mxu0 0
        %3838 = vmatpush2.bf16.msra.mxu0 0
        %3839 = vmatprep.subr.bf16.mxu0 0
        %3840 = vmatpush2.bf16.msra.mxu0 0
        %3841 = vmatprep.subr.bf16.mxu0 0
        %3842 = vmatpush2.bf16.msra.mxu0 0
        %3843 = vmatprep.subr.bf16.mxu0 0
        %3844 = vmatpush2.bf16.msra.mxu0 0
        %3845 = vmatprep.subr.bf16.mxu0 0
        %3846 = vmatpush2.bf16.msra.mxu0 0
        %3847 = vmatprep.subr.bf16.mxu0 0
        %3848 = vmatpush2.bf16.msra.mxu0 0
        %3849 = vmatprep.subr.bf16.mxu0 0
        %3850 = vmatpush2.bf16.msra.mxu0 0
        %3851 = vmatprep.mubr.bf16.mxu0 0
        %3852 = vmatmul.mubr.bf16.gmra.mxu0 %v3711
        %v3853 = vpop.f32.mrf.mxu0
        %v3854 = vadd.f32 %v3708, %v3853
        %v3855 = vpop.f32.mrf.mxu0
        %v3856 = vadd.f32 %v3708, %v3855
        %v3857 = vpop.f32.mrf.mxu0
        %v3858 = vpop.f32.mrf.mxu0
        %3859 = vdwg.mxu0
        %3860 = vmatprep.subr.bf16.mxu0 0
        %3861 = vmatpush1.bf16.msra.mxu0 0
        %3862 = vmatprep.subr.bf16.mxu0 0
        %3863 = vmatpush1.bf16.msra.mxu0 0
        %3864 = vmatprep.subr.bf16.mxu0 0
        %3865 = vmatpush1.bf16.msra.mxu0 0
        %3866 = vmatprep.subr.bf16.mxu0 0
        %3867 = vmatpush1.bf16.msra.mxu0 0
        %3868 = vmatprep.subr.bf16.mxu0 0
        %3869 = vmatpush1.bf16.msra.mxu0 0
        %3870 = vmatprep.subr.bf16.mxu0 0
        %3871 = vmatpush1.bf16.msra.mxu0 0
        %3872 = vmatprep.subr.bf16.mxu0 0
        %3873 = vmatpush1.bf16.msra.mxu0 0
        %3874 = vmatprep.subr.bf16.mxu0 %v3735
        %3875 = vmatpush1.bf16.msra.mxu0 %v3732
        %3876 = vmatprep.subr.bf16.mxu0 0
        %3877 = vmatpush2.bf16.msra.mxu0 0
        %3878 = vmatprep.subr.bf16.mxu0 0
        %3879 = vmatpush2.bf16.msra.mxu0 0
        %3880 = vmatprep.subr.bf16.mxu0 0
        %3881 = vmatpush2.bf16.msra.mxu0 0
        %3882 = vmatprep.subr.bf16.mxu0 0
        %3883 = vmatpush2.bf16.msra.mxu0 0
        %3884 = vmatprep.subr.bf16.mxu0 0
        %3885 = vmatpush2.bf16.msra.mxu0 0
        %3886 = vmatprep.subr.bf16.mxu0 0
        %3887 = vmatpush2.bf16.msra.mxu0 0
        %3888 = vmatprep.subr.bf16.mxu0 0
        %3889 = vmatpush2.bf16.msra.mxu0 0
        %3890 = vmatprep.subr.bf16.mxu0 0
        %3891 = vmatpush2.bf16.msra.mxu0 0
        %3892 = vmatprep.mubr.bf16.mxu0 0
        %3893 = vmatmul.mubr.bf16.gmra.mxu0 %v3711
        %v3894 = vpop.f32.mrf.mxu0
        %v3895 = vadd.f32 %v3708, %v3894
        %v3896 = vpop.f32.mrf.mxu0
        %v3897 = vadd.f32 %v3708, %v3896
        %v3898 = vpop.f32.mrf.mxu0
        %v3899 = vpop.f32.mrf.mxu0
        %3900 = vdwg.mxu0
        %v3909 = vcombine.low %v3772, %v3774
        %v3910 = vcombine.low %v3813, %v3815
        %v3911 = vcombine.low %v3854, %v3856
        %v3912 = vcombine.low %v3895, %v3897
        %3917 = vst [vmem:[%s1251] sm:$0xff] %v3909
        %3918 = vst [vmem:[%s1251 + $0x8] sm:$0xff] %v3910
        %3919 = vst [vmem:[%s1251 + $0x10] sm:$0xff] %v3911
        %3920 = vst [vmem:[%s1251 + $0x18] sm:$0xff] %v3912
        %p3921 = scmp.lt.s32.totalorder %s91, 1
        %s3922 = scalar_select %p3921, %s91, 1
        %s3923 = smul.addr %s3922, 8
        %s3924 = smul.addr %s3923, 4
        %s3925 = scalar_lea.vmem %s79, %s3924
        // Predicated region
        $region181: #{decoder_forward.1} parent=175 // pred_check
          %p3926 = pneg %p948
        $region182: #{decoder_forward.1} parent=175 // pred_check_branch
          %3928 = sbr.rel (%p3926) target = $region184
        $region183: #{decoder_forward.1} parent=175 // pred_region
          _
        $region184: #{decoder_forward.1} parent=175 // pred_fallthru
          _
      $region176: #{decoder_forward.1} parent=5 // pred_fallthru
        _
      %p3929 = scmp.le.s32.totalorder 2, %s86
      // Predicated region
      $region185: #{decoder_forward.1} parent=5 // pred_check
        %p3930 = pneg %p3929
      $region186: #{decoder_forward.1} parent=5 // pred_check_branch
        %3932 = sbr.rel (%p3930) target = $region188
      $region187: #{decoder_forward.1} parent=5 // pred_region
        %s3933 = ssub.s32 %s86, 2
        // Predicated region
        $region189: #{decoder_forward.1} parent=187 // pred_check
          %p3934 = pneg %p954
        $region190: #{decoder_forward.1} parent=187 // pred_check_branch
          %3936 = sbr.rel (%p3934) target = $region192
        $region191: #{decoder_forward.1} parent=187 // pred_region
          %p3937 = scmp.lt.s32.totalorder %s92, 1
          %s3938 = scalar_select %p3937, %s92, 1
          %s3939 = smul.addr %s3938, 8
          %s3940 = smul.addr %s3939, 4
          %s3941 = scalar_lea.vmem %s79, %s3940
        $region192: #{decoder_forward.1} parent=187 // pred_fallthru
          _
      $region188: #{decoder_forward.1} parent=5 // pred_fallthru
        _
    $region6: #{decoder_forward.1} parent=1 // loop_footer
      %s90 = sadd.s32 1, %s86
    $region7: #{decoder_forward.1} parent=1 // loop_footer_branch
      %85 = sbr.rel target = $region3
    $region8: #{decoder_forward.1} parent=1 // loop_exit
      _
    %3942 = vsyncpa [#allocation3], 1
    %s3943 = scalar_lea.sflag [#allocation3], 1
    %3944 = vsyncpa %s3943, 1

</llo_original>
